<compile_context>
chip_gen: v6e
topology: v6e:2x2x1
jax: 0.10.0
libtpu: 0.0.40
codegen_flags: <defaults>
</compile_context>

<pallas_src>
import math
import jax
import jax.numpy as jnp
from jax.experimental import pallas as pl
from jax.experimental.pallas import tpu as pltpu

# ---- fixed DeepChrome architecture constants (from the PyTorch __init__) ----
SEQ, MARKS = 100, 5
KERNEL_H, KERNEL_W = 10, 5
NUM_FILTERS = 50
POOL = 5
STRIDE = 2
CONV_OUT = (SEQ - KERNEL_H) // STRIDE + 1            # 46
POOL_OUT = math.floor((CONV_OUT - POOL) / POOL + 1)  # 9
FLAT = NUM_FILTERS * POOL_OUT                        # 450
MLP_H1, MLP_H2, NOUT = 625, 125, 2
PATCH = KERNEL_H * KERNEL_W                          # 50

# lane-padded MLP dims (zero-padded weights; padding contributes exactly 0)
H1P, H2P, NOUTP = 640, 128, 128


def _round_up(n, m):
    return ((n + m - 1) // m) * m


def deepchrome_kernel(patches_ref, wc_ref, bc_ref, w1_ref, b1_ref,
                      w2_ref, b2_ref, w3_ref, b3_ref, out_ref):
    # patches_ref: [9, 5, TB, 50] bf16   (pool window p, in-window offset q, batch, patch)
    # wc_ref:      [50, 50] bf16         (patch, channel)
    # w1_ref:      [9, 50, 640] bf16     (pool window, channel, hidden1)  -- torch
    #                                     flatten order c*9+p is baked in here.
    wcT = wc_ref[...]                                   # bf16 [50, 50]
    bc = bc_ref[...]                                    # f32  [1, 50]

    # stage1+stage2+first Linear fused:
    #   conv-as-matmul + bias + ReLU, MaxPool1d(5) as a 5-way VPU max tree,
    #   then accumulate pooled_p @ W1r[p]   (so no [TB,450] reshape is needed).
    # TODO(synk): Dropout(0.5) is treated as identity (eval-mode semantics).
    h1 = None
    for p in range(POOL_OUT):                           # 9 pool windows
        pooled = None
        for q in range(POOL):                           # 5 conv positions per window
            c = jnp.dot(patches_ref[p, q], wcT,
                        preferred_element_type=jnp.float32)       # [TB, 50] f32
            c = jnp.maximum(c + bc, 0.0)
            pooled = c if pooled is None else jnp.maximum(pooled, c)
        contrib = jnp.dot(pooled.astype(jnp.bfloat16), w1_ref[p],
                          preferred_element_type=jnp.float32)     # [TB, 640] f32
        h1 = contrib if h1 is None else h1 + contrib
    h1 = jnp.maximum(h1 + b1_ref[...], 0.0)                       # [TB, 640]

    # stage3 rest of MLP (all lane dims padded to multiples of 128)
    h2 = jnp.dot(h1.astype(jnp.bfloat16), w2_ref[...],
                 preferred_element_type=jnp.float32) + b2_ref[...]
    h2 = jnp.maximum(h2, 0.0)                                     # [TB, 128]
    out = jnp.dot(h2.astype(jnp.bfloat16), w3_ref[...],
                  preferred_element_type=jnp.float32) + b3_ref[...]
    out_ref[...] = out.astype(out_ref.dtype)                      # [TB, 128]


def deepchrome_forward(x, params, *, tb=128):
    """x: [B, 100, 5] float32. Returns [B, 2] float32.

    tb: samples per grid step (multiple of 8). For large B pick 128-512; on v7x
    keep tb <= B/2 so the grid length is >= 2 and both TensorCores get work.
    """
    assert tb % 8 == 0
    B = x.shape[0]
    wc, bc, w1, b1, w2, b2, w3, b3 = params

    TB = min(tb, _round_up(B, 8))
    B_pad = _round_up(B, TB)
    n_blocks = B_pad // TB

    # ---- glue: im2col restricted to the 45 conv rows kept by floor pooling ----
    # layout [9(pool p), 5(offset q), B, 50(patch kh*5+kw)] so the kernel only
    # ever indexes leading dims (no lane/sublane reshapes inside the kernel).
    pos = POOL * jnp.arange(POOL_OUT)[:, None] + jnp.arange(POOL)[None, :]      # [9,5]
    h_idx = STRIDE * pos[..., None] + jnp.arange(KERNEL_H)[None, None, :]       # [9,5,10]
    patches = x[:, h_idx, :]                                     # [B, 9, 5, 10, 5]
    patches = patches.reshape(B, POOL_OUT, POOL, PATCH)          # [B, 9, 5, 50]
    patches = patches.transpose(1, 2, 0, 3)                      # [9, 5, B, 50]
    if B_pad != B:
        patches = jnp.pad(patches, ((0, 0), (0, 0), (0, B_pad - B), (0, 0)))
    patches = patches.astype(jnp.bfloat16)

    # ---- glue: parameter re-layout (bf16 weights, f32 biases, lane padding) ----
    wcT = wc.reshape(NUM_FILTERS, PATCH).T.astype(jnp.bfloat16)          # [50, 50]
    bc2 = bc.reshape(1, NUM_FILTERS).astype(jnp.float32)                 # [1, 50]
    # W1r[p, c, o] = W1[o, c*9 + p]  (torch flatten order c*POOL_OUT + p)
    w1r = w1.reshape(MLP_H1, NUM_FILTERS, POOL_OUT).transpose(2, 1, 0)   # [9,50,625]
    w1r = jnp.pad(w1r, ((0, 0), (0, 0), (0, H1P - MLP_H1))).astype(jnp.bfloat16)
    b1p = jnp.pad(b1.reshape(1, MLP_H1), ((0, 0), (0, H1P - MLP_H1))).astype(jnp.float32)
    w2t = jnp.pad(w2.T, ((0, H1P - MLP_H1), (0, H2P - MLP_H2))).astype(jnp.bfloat16)
    b2p = jnp.pad(b2.reshape(1, MLP_H2), ((0, 0), (0, H2P - MLP_H2))).astype(jnp.float32)
    w3t = jnp.pad(w3.T, ((0, H2P - MLP_H2), (0, NOUTP - NOUT))).astype(jnp.bfloat16)
    b3p = jnp.pad(b3.reshape(1, NOUT), ((0, 0), (0, NOUTP - NOUT))).astype(jnp.float32)

    const2 = lambda i: (0, 0)
    const3 = lambda i: (0, 0, 0)

    out = pl.pallas_call(
        deepchrome_kernel,
        out_shape=jax.ShapeDtypeStruct((B_pad, NOUTP), jnp.float32),
        grid=(n_blocks,),
        in_specs=[
            pl.BlockSpec((POOL_OUT, POOL, TB, PATCH), lambda i: (0, 0, i, 0)),
            pl.BlockSpec((PATCH, NUM_FILTERS), const2),
            pl.BlockSpec((1, NUM_FILTERS), const2),
            pl.BlockSpec((POOL_OUT, NUM_FILTERS, H1P), const3),
            pl.BlockSpec((1, H1P), const2),
            pl.BlockSpec((H1P, H2P), const2),
            pl.BlockSpec((1, H2P), const2),
            pl.BlockSpec((H2P, NOUTP), const2),
            pl.BlockSpec((1, NOUTP), const2),
        ],
        out_specs=pl.BlockSpec((TB, NOUTP), lambda i: (i, 0)),
        compiler_params=pltpu.CompilerParams(
            dimension_semantics=("parallel",)),
    )(patches, wcT, bc2, w1r, b1p, w2t, b2p, w3t, b3p)

    return out[:B, :NOUT]


def deepchrome_reference(x, params):
    """Pure-JAX f32 reference mirroring the PyTorch forward (eval mode)."""
    wc, bc, w1, b1, w2, b2, w3, b3 = params
    B = x.shape[0]
    x4 = x[:, None, :, :]                                               # [B,1,100,5]
    conv = jax.lax.conv_general_dilated(
        x4, wc, window_strides=(STRIDE, STRIDE), padding="VALID",
        dimension_numbers=("NCHW", "OIHW", "NCHW"))                     # [B,50,46,1]
    conv = jax.nn.relu(conv + bc[None, :, None, None])
    conv = conv[:, :, :, 0]                                             # [B,50,46]
    pooled = conv[:, :, :POOL_OUT * POOL].reshape(
        B, NUM_FILTERS, POOL_OUT, POOL).max(axis=-1)                    # [B,50,9]
    flat = pooled.reshape(B, FLAT)                                      # [B,450]
    h1 = jax.nn.relu(flat @ w1.T + b1)
    h2 = jax.nn.relu(h1 @ w2.T + b2)
    return h2 @ w3.T + b3


def init_params(key):
    ks = jax.random.split(key, 8)
    s = 0.05
    wc = s * jax.random.normal(ks[0], (NUM_FILTERS, 1, KERNEL_H, KERNEL_W), jnp.float32)
    bc = s * jax.random.normal(ks[1], (NUM_FILTERS,), jnp.float32)
    w1 = s * jax.random.normal(ks[2], (MLP_H1, FLAT), jnp.float32)
    b1 = s * jax.random.normal(ks[3], (MLP_H1,), jnp.float32)
    w2 = s * jax.random.normal(ks[4], (MLP_H2, MLP_H1), jnp.float32)
    b2 = s * jax.random.normal(ks[5], (MLP_H2,), jnp.float32)
    w3 = s * jax.random.normal(ks[6], (NOUT, MLP_H2), jnp.float32)
    b3 = s * jax.random.normal(ks[7], (NOUT,), jnp.float32)
    return (wc, bc, w1, b1, w2, b2, w3, b3)


if __name__ == "__main__":
    key = jax.random.PRNGKey(0)
    k_x, k_p = jax.random.split(key)
    B = 13                                     # exercises batch padding + grid > 1
    x = jax.random.normal(k_x, (B, SEQ, MARKS), jnp.float32)   # [B, 100, 5]
    params = init_params(k_p)

    out = jax.block_until_ready(deepchrome_forward(x, params, tb=8))
    assert out.shape == (B, NOUT)

    ref = jax.block_until_ready(deepchrome_reference(x, params))
    max_err = jnp.max(jnp.abs(out - ref))
    # kernel runs bf16 inputs / f32 accumulation -> small rounding vs f32 ref
    assert jnp.allclose(out, ref, atol=3e-2, rtol=3e-2), (max_err, out, ref)

    print("KERNEL_OK")
</pallas_src>

<mosaic_0001>
module attributes {stable_mosaic.version = 11 : i64} {
  func.func @deepchrome_kernel(%arg0: i32, %arg1: memref<9x5x8x50xbf16, #tpu.memory_space<vmem>>, %arg2: memref<50x50xbf16, #tpu.memory_space<vmem>>, %arg3: memref<1x50xf32, #tpu.memory_space<vmem>>, %arg4: memref<9x50x640xbf16, #tpu.memory_space<vmem>>, %arg5: memref<1x640xf32, #tpu.memory_space<vmem>>, %arg6: memref<640x128xbf16, #tpu.memory_space<vmem>>, %arg7: memref<1x128xf32, #tpu.memory_space<vmem>>, %arg8: memref<128x128xbf16, #tpu.memory_space<vmem>>, %arg9: memref<1x128xf32, #tpu.memory_space<vmem>>, %arg10: memref<8x128xf32, #tpu.memory_space<vmem>>) attributes {dimension_semantics = [#tpu.dimension_semantics<parallel>], iteration_bounds = array<i64: 2>, scalar_prefetch = 0 : i64, scratch_operands = 0 : i64, tpu.core_type = #tpu.core_type<tc>, window_params = [{transform_indices = @transform_0, window_bounds = array<i64: 9, 5, 8, 50>}, {pipeline_mode = #tpu.pipeline_mode<synchronous>, transform_indices = @transform_1, window_bounds = array<i64: 50, 50>}, {pipeline_mode = #tpu.pipeline_mode<synchronous>, transform_indices = @transform_2, window_bounds = array<i64: 1, 50>}, {pipeline_mode = #tpu.pipeline_mode<synchronous>, transform_indices = @transform_3, window_bounds = array<i64: 9, 50, 640>}, {pipeline_mode = #tpu.pipeline_mode<synchronous>, transform_indices = @transform_4, window_bounds = array<i64: 1, 640>}, {pipeline_mode = #tpu.pipeline_mode<synchronous>, transform_indices = @transform_5, window_bounds = array<i64: 640, 128>}, {pipeline_mode = #tpu.pipeline_mode<synchronous>, transform_indices = @transform_6, window_bounds = array<i64: 1, 128>}, {pipeline_mode = #tpu.pipeline_mode<synchronous>, transform_indices = @transform_7, window_bounds = array<i64: 128, 128>}, {pipeline_mode = #tpu.pipeline_mode<synchronous>, transform_indices = @transform_8, window_bounds = array<i64: 1, 128>}, {transform_indices = @transform_9, window_bounds = array<i64: 8, 128>}]} {
    %c0 = arith.constant 0 : index
    %c0_0 = arith.constant 0 : index
    %0 = vector.load %arg2[%c0, %c0_0] : memref<50x50xbf16, #tpu.memory_space<vmem>>, vector<50x50xbf16>
    %c0_1 = arith.constant 0 : index
    %c0_2 = arith.constant 0 : index
    %1 = vector.load %arg3[%c0_1, %c0_2] : memref<1x50xf32, #tpu.memory_space<vmem>>, vector<1x50xf32>
    %c0_3 = arith.constant 0 : index
    %c0_4 = arith.constant 0 : index
    %c0_5 = arith.constant 0 : index
    %c0_6 = arith.constant 0 : index
    %2 = vector.load %arg1[%c0_3, %c0_4, %c0_5, %c0_6] : memref<9x5x8x50xbf16, #tpu.memory_space<vmem>>, vector<1x1x8x50xbf16>
    %3 = vector.shape_cast %2 : vector<1x1x8x50xbf16> to vector<8x50xbf16>
    %cst = arith.constant dense<0.000000e+00> : vector<8x50xf32>
    %4 = tpu.matmul %3, %0, %cst {dimension_numbers = #tpu.dot_dimension_numbers<[1], [0], [0], [1], [0, 0, 1, 1], [], []>} : vector<8x50xbf16>, vector<50x50xbf16>, vector<8x50xf32> -> vector<8x50xf32>
    %5 = vector.broadcast %1 : vector<1x50xf32> to vector<8x50xf32>
    %6 = arith.addf %4, %5 : vector<8x50xf32>
    %cst_7 = arith.constant 0.000000e+00 : f32
    %7 = vector.broadcast %cst_7 : f32 to vector<8x50xf32>
    %8 = arith.maximumf %6, %7 : vector<8x50xf32>
    %c0_8 = arith.constant 0 : index
    %c1 = arith.constant 1 : index
    %c0_9 = arith.constant 0 : index
    %c0_10 = arith.constant 0 : index
    %9 = vector.load %arg1[%c0_8, %c1, %c0_9, %c0_10] : memref<9x5x8x50xbf16, #tpu.memory_space<vmem>>, vector<1x1x8x50xbf16>
    %10 = vector.shape_cast %9 : vector<1x1x8x50xbf16> to vector<8x50xbf16>
    %cst_11 = arith.constant dense<0.000000e+00> : vector<8x50xf32>
    %11 = tpu.matmul %10, %0, %cst_11 {dimension_numbers = #tpu.dot_dimension_numbers<[1], [0], [0], [1], [0, 0, 1, 1], [], []>} : vector<8x50xbf16>, vector<50x50xbf16>, vector<8x50xf32> -> vector<8x50xf32>
    %12 = vector.broadcast %1 : vector<1x50xf32> to vector<8x50xf32>
    %13 = arith.addf %11, %12 : vector<8x50xf32>
    %cst_12 = arith.constant 0.000000e+00 : f32
    %14 = vector.broadcast %cst_12 : f32 to vector<8x50xf32>
    %15 = arith.maximumf %13, %14 : vector<8x50xf32>
    %16 = arith.maximumf %8, %15 : vector<8x50xf32>
    %c0_13 = arith.constant 0 : index
    %c2 = arith.constant 2 : index
    %c0_14 = arith.constant 0 : index
    %c0_15 = arith.constant 0 : index
    %17 = vector.load %arg1[%c0_13, %c2, %c0_14, %c0_15] : memref<9x5x8x50xbf16, #tpu.memory_space<vmem>>, vector<1x1x8x50xbf16>
    %18 = vector.shape_cast %17 : vector<1x1x8x50xbf16> to vector<8x50xbf16>
    %cst_16 = arith.constant dense<0.000000e+00> : vector<8x50xf32>
    %19 = tpu.matmul %18, %0, %cst_16 {dimension_numbers = #tpu.dot_dimension_numbers<[1], [0], [0], [1], [0, 0, 1, 1], [], []>} : vector<8x50xbf16>, vector<50x50xbf16>, vector<8x50xf32> -> vector<8x50xf32>
    %20 = vector.broadcast %1 : vector<1x50xf32> to vector<8x50xf32>
    %21 = arith.addf %19, %20 : vector<8x50xf32>
    %cst_17 = arith.constant 0.000000e+00 : f32
    %22 = vector.broadcast %cst_17 : f32 to vector<8x50xf32>
    %23 = arith.maximumf %21, %22 : vector<8x50xf32>
    %24 = arith.maximumf %16, %23 : vector<8x50xf32>
    %c0_18 = arith.constant 0 : index
    %c3 = arith.constant 3 : index
    %c0_19 = arith.constant 0 : index
    %c0_20 = arith.constant 0 : index
    %25 = vector.load %arg1[%c0_18, %c3, %c0_19, %c0_20] : memref<9x5x8x50xbf16, #tpu.memory_space<vmem>>, vector<1x1x8x50xbf16>
    %26 = vector.shape_cast %25 : vector<1x1x8x50xbf16> to vector<8x50xbf16>
    %cst_21 = arith.constant dense<0.000000e+00> : vector<8x50xf32>
    %27 = tpu.matmul %26, %0, %cst_21 {dimension_numbers = #tpu.dot_dimension_numbers<[1], [0], [0], [1], [0, 0, 1, 1], [], []>} : vector<8x50xbf16>, vector<50x50xbf16>, vector<8x50xf32> -> vector<8x50xf32>
    %28 = vector.broadcast %1 : vector<1x50xf32> to vector<8x50xf32>
    %29 = arith.addf %27, %28 : vector<8x50xf32>
    %cst_22 = arith.constant 0.000000e+00 : f32
    %30 = vector.broadcast %cst_22 : f32 to vector<8x50xf32>
    %31 = arith.maximumf %29, %30 : vector<8x50xf32>
    %32 = arith.maximumf %24, %31 : vector<8x50xf32>
    %c0_23 = arith.constant 0 : index
    %c4 = arith.constant 4 : index
    %c0_24 = arith.constant 0 : index
    %c0_25 = arith.constant 0 : index
    %33 = vector.load %arg1[%c0_23, %c4, %c0_24, %c0_25] : memref<9x5x8x50xbf16, #tpu.memory_space<vmem>>, vector<1x1x8x50xbf16>
    %34 = vector.shape_cast %33 : vector<1x1x8x50xbf16> to vector<8x50xbf16>
    %cst_26 = arith.constant dense<0.000000e+00> : vector<8x50xf32>
    %35 = tpu.matmul %34, %0, %cst_26 {dimension_numbers = #tpu.dot_dimension_numbers<[1], [0], [0], [1], [0, 0, 1, 1], [], []>} : vector<8x50xbf16>, vector<50x50xbf16>, vector<8x50xf32> -> vector<8x50xf32>
    %36 = vector.broadcast %1 : vector<1x50xf32> to vector<8x50xf32>
    %37 = arith.addf %35, %36 : vector<8x50xf32>
    %cst_27 = arith.constant 0.000000e+00 : f32
    %38 = vector.broadcast %cst_27 : f32 to vector<8x50xf32>
    %39 = arith.maximumf %37, %38 : vector<8x50xf32>
    %40 = arith.maximumf %32, %39 : vector<8x50xf32>
    %41 = arith.truncf %40 : vector<8x50xf32> to vector<8x50xbf16>
    %c0_28 = arith.constant 0 : index
    %c0_29 = arith.constant 0 : index
    %c0_30 = arith.constant 0 : index
    %42 = vector.load %arg4[%c0_28, %c0_29, %c0_30] : memref<9x50x640xbf16, #tpu.memory_space<vmem>>, vector<1x50x640xbf16>
    %43 = vector.shape_cast %42 : vector<1x50x640xbf16> to vector<50x640xbf16>
    %cst_31 = arith.constant dense<0.000000e+00> : vector<8x640xf32>
    %44 = tpu.matmul %41, %43, %cst_31 {dimension_numbers = #tpu.dot_dimension_numbers<[1], [0], [0], [1], [0, 0, 1, 1], [], []>} : vector<8x50xbf16>, vector<50x640xbf16>, vector<8x640xf32> -> vector<8x640xf32>
    %c1_32 = arith.constant 1 : index
    %c0_33 = arith.constant 0 : index
    %c0_34 = arith.constant 0 : index
    %c0_35 = arith.constant 0 : index
    %45 = vector.load %arg1[%c1_32, %c0_33, %c0_34, %c0_35] : memref<9x5x8x50xbf16, #tpu.memory_space<vmem>>, vector<1x1x8x50xbf16>
    %46 = vector.shape_cast %45 : vector<1x1x8x50xbf16> to vector<8x50xbf16>
    %cst_36 = arith.constant dense<0.000000e+00> : vector<8x50xf32>
    %47 = tpu.matmul %46, %0, %cst_36 {dimension_numbers = #tpu.dot_dimension_numbers<[1], [0], [0], [1], [0, 0, 1, 1], [], []>} : vector<8x50xbf16>, vector<50x50xbf16>, vector<8x50xf32> -> vector<8x50xf32>
    %48 = vector.broadcast %1 : vector<1x50xf32> to vector<8x50xf32>
    %49 = arith.addf %47, %48 : vector<8x50xf32>
    %cst_37 = arith.constant 0.000000e+00 : f32
    %50 = vector.broadcast %cst_37 : f32 to vector<8x50xf32>
    %51 = arith.maximumf %49, %50 : vector<8x50xf32>
    %c1_38 = arith.constant 1 : index
    %c1_39 = arith.constant 1 : index
    %c0_40 = arith.constant 0 : index
    %c0_41 = arith.constant 0 : index
    %52 = vector.load %arg1[%c1_38, %c1_39, %c0_40, %c0_41] : memref<9x5x8x50xbf16, #tpu.memory_space<vmem>>, vector<1x1x8x50xbf16>
    %53 = vector.shape_cast %52 : vector<1x1x8x50xbf16> to vector<8x50xbf16>
    %cst_42 = arith.constant dense<0.000000e+00> : vector<8x50xf32>
    %54 = tpu.matmul %53, %0, %cst_42 {dimension_numbers = #tpu.dot_dimension_numbers<[1], [0], [0], [1], [0, 0, 1, 1], [], []>} : vector<8x50xbf16>, vector<50x50xbf16>, vector<8x50xf32> -> vector<8x50xf32>
    %55 = vector.broadcast %1 : vector<1x50xf32> to vector<8x50xf32>
    %56 = arith.addf %54, %55 : vector<8x50xf32>
    %cst_43 = arith.constant 0.000000e+00 : f32
    %57 = vector.broadcast %cst_43 : f32 to vector<8x50xf32>
    %58 = arith.maximumf %56, %57 : vector<8x50xf32>
    %59 = arith.maximumf %51, %58 : vector<8x50xf32>
    %c1_44 = arith.constant 1 : index
    %c2_45 = arith.constant 2 : index
    %c0_46 = arith.constant 0 : index
    %c0_47 = arith.constant 0 : index
    %60 = vector.load %arg1[%c1_44, %c2_45, %c0_46, %c0_47] : memref<9x5x8x50xbf16, #tpu.memory_space<vmem>>, vector<1x1x8x50xbf16>
    %61 = vector.shape_cast %60 : vector<1x1x8x50xbf16> to vector<8x50xbf16>
    %cst_48 = arith.constant dense<0.000000e+00> : vector<8x50xf32>
    %62 = tpu.matmul %61, %0, %cst_48 {dimension_numbers = #tpu.dot_dimension_numbers<[1], [0], [0], [1], [0, 0, 1, 1], [], []>} : vector<8x50xbf16>, vector<50x50xbf16>, vector<8x50xf32> -> vector<8x50xf32>
    %63 = vector.broadcast %1 : vector<1x50xf32> to vector<8x50xf32>
    %64 = arith.addf %62, %63 : vector<8x50xf32>
    %cst_49 = arith.constant 0.000000e+00 : f32
    %65 = vector.broadcast %cst_49 : f32 to vector<8x50xf32>
    %66 = arith.maximumf %64, %65 : vector<8x50xf32>
    %67 = arith.maximumf %59, %66 : vector<8x50xf32>
    %c1_50 = arith.constant 1 : index
    %c3_51 = arith.constant 3 : index
    %c0_52 = arith.constant 0 : index
    %c0_53 = arith.constant 0 : index
    %68 = vector.load %arg1[%c1_50, %c3_51, %c0_52, %c0_53] : memref<9x5x8x50xbf16, #tpu.memory_space<vmem>>, vector<1x1x8x50xbf16>
    %69 = vector.shape_cast %68 : vector<1x1x8x50xbf16> to vector<8x50xbf16>
    %cst_54 = arith.constant dense<0.000000e+00> : vector<8x50xf32>
    %70 = tpu.matmul %69, %0, %cst_54 {dimension_numbers = #tpu.dot_dimension_numbers<[1], [0], [0], [1], [0, 0, 1, 1], [], []>} : vector<8x50xbf16>, vector<50x50xbf16>, vector<8x50xf32> -> vector<8x50xf32>
    %71 = vector.broadcast %1 : vector<1x50xf32> to vector<8x50xf32>
    %72 = arith.addf %70, %71 : vector<8x50xf32>
    %cst_55 = arith.constant 0.000000e+00 : f32
    %73 = vector.broadcast %cst_55 : f32 to vector<8x50xf32>
    %74 = arith.maximumf %72, %73 : vector<8x50xf32>
    %75 = arith.maximumf %67, %74 : vector<8x50xf32>
    %c1_56 = arith.constant 1 : index
    %c4_57 = arith.constant 4 : index
    %c0_58 = arith.constant 0 : index
    %c0_59 = arith.constant 0 : index
    %76 = vector.load %arg1[%c1_56, %c4_57, %c0_58, %c0_59] : memref<9x5x8x50xbf16, #tpu.memory_space<vmem>>, vector<1x1x8x50xbf16>
    %77 = vector.shape_cast %76 : vector<1x1x8x50xbf16> to vector<8x50xbf16>
    %cst_60 = arith.constant dense<0.000000e+00> : vector<8x50xf32>
    %78 = tpu.matmul %77, %0, %cst_60 {dimension_numbers = #tpu.dot_dimension_numbers<[1], [0], [0], [1], [0, 0, 1, 1], [], []>} : vector<8x50xbf16>, vector<50x50xbf16>, vector<8x50xf32> -> vector<8x50xf32>
    %79 = vector.broadcast %1 : vector<1x50xf32> to vector<8x50xf32>
    %80 = arith.addf %78, %79 : vector<8x50xf32>
    %cst_61 = arith.constant 0.000000e+00 : f32
    %81 = vector.broadcast %cst_61 : f32 to vector<8x50xf32>
    %82 = arith.maximumf %80, %81 : vector<8x50xf32>
    %83 = arith.maximumf %75, %82 : vector<8x50xf32>
    %84 = arith.truncf %83 : vector<8x50xf32> to vector<8x50xbf16>
    %c1_62 = arith.constant 1 : index
    %c0_63 = arith.constant 0 : index
    %c0_64 = arith.constant 0 : index
    %85 = vector.load %arg4[%c1_62, %c0_63, %c0_64] : memref<9x50x640xbf16, #tpu.memory_space<vmem>>, vector<1x50x640xbf16>
    %86 = vector.shape_cast %85 : vector<1x50x640xbf16> to vector<50x640xbf16>
    %cst_65 = arith.constant dense<0.000000e+00> : vector<8x640xf32>
    %87 = tpu.matmul %84, %86, %cst_65 {dimension_numbers = #tpu.dot_dimension_numbers<[1], [0], [0], [1], [0, 0, 1, 1], [], []>} : vector<8x50xbf16>, vector<50x640xbf16>, vector<8x640xf32> -> vector<8x640xf32>
    %88 = arith.addf %44, %87 : vector<8x640xf32>
    %c2_66 = arith.constant 2 : index
    %c0_67 = arith.constant 0 : index
    %c0_68 = arith.constant 0 : index
    %c0_69 = arith.constant 0 : index
    %89 = vector.load %arg1[%c2_66, %c0_67, %c0_68, %c0_69] : memref<9x5x8x50xbf16, #tpu.memory_space<vmem>>, vector<1x1x8x50xbf16>
    %90 = vector.shape_cast %89 : vector<1x1x8x50xbf16> to vector<8x50xbf16>
    %cst_70 = arith.constant dense<0.000000e+00> : vector<8x50xf32>
    %91 = tpu.matmul %90, %0, %cst_70 {dimension_numbers = #tpu.dot_dimension_numbers<[1], [0], [0], [1], [0, 0, 1, 1], [], []>} : vector<8x50xbf16>, vector<50x50xbf16>, vector<8x50xf32> -> vector<8x50xf32>
    %92 = vector.broadcast %1 : vector<1x50xf32> to vector<8x50xf32>
    %93 = arith.addf %91, %92 : vector<8x50xf32>
    %cst_71 = arith.constant 0.000000e+00 : f32
    %94 = vector.broadcast %cst_71 : f32 to vector<8x50xf32>
    %95 = arith.maximumf %93, %94 : vector<8x50xf32>
    %c2_72 = arith.constant 2 : index
    %c1_73 = arith.constant 1 : index
    %c0_74 = arith.constant 0 : index
    %c0_75 = arith.constant 0 : index
    %96 = vector.load %arg1[%c2_72, %c1_73, %c0_74, %c0_75] : memref<9x5x8x50xbf16, #tpu.memory_space<vmem>>, vector<1x1x8x50xbf16>
    %97 = vector.shape_cast %96 : vector<1x1x8x50xbf16> to vector<8x50xbf16>
    %cst_76 = arith.constant dense<0.000000e+00> : vector<8x50xf32>
    %98 = tpu.matmul %97, %0, %cst_76 {dimension_numbers = #tpu.dot_dimension_numbers<[1], [0], [0], [1], [0, 0, 1, 1], [], []>} : vector<8x50xbf16>, vector<50x50xbf16>, vector<8x50xf32> -> vector<8x50xf32>
    %99 = vector.broadcast %1 : vector<1x50xf32> to vector<8x50xf32>
    %100 = arith.addf %98, %99 : vector<8x50xf32>
    %cst_77 = arith.constant 0.000000e+00 : f32
    %101 = vector.broadcast %cst_77 : f32 to vector<8x50xf32>
    %102 = arith.maximumf %100, %101 : vector<8x50xf32>
    %103 = arith.maximumf %95, %102 : vector<8x50xf32>
    %c2_78 = arith.constant 2 : index
    %c2_79 = arith.constant 2 : index
    %c0_80 = arith.constant 0 : index
    %c0_81 = arith.constant 0 : index
    %104 = vector.load %arg1[%c2_78, %c2_79, %c0_80, %c0_81] : memref<9x5x8x50xbf16, #tpu.memory_space<vmem>>, vector<1x1x8x50xbf16>
    %105 = vector.shape_cast %104 : vector<1x1x8x50xbf16> to vector<8x50xbf16>
    %cst_82 = arith.constant dense<0.000000e+00> : vector<8x50xf32>
    %106 = tpu.matmul %105, %0, %cst_82 {dimension_numbers = #tpu.dot_dimension_numbers<[1], [0], [0], [1], [0, 0, 1, 1], [], []>} : vector<8x50xbf16>, vector<50x50xbf16>, vector<8x50xf32> -> vector<8x50xf32>
    %107 = vector.broadcast %1 : vector<1x50xf32> to vector<8x50xf32>
    %108 = arith.addf %106, %107 : vector<8x50xf32>
    %cst_83 = arith.constant 0.000000e+00 : f32
    %109 = vector.broadcast %cst_83 : f32 to vector<8x50xf32>
    %110 = arith.maximumf %108, %109 : vector<8x50xf32>
    %111 = arith.maximumf %103, %110 : vector<8x50xf32>
    %c2_84 = arith.constant 2 : index
    %c3_85 = arith.constant 3 : index
    %c0_86 = arith.constant 0 : index
    %c0_87 = arith.constant 0 : index
    %112 = vector.load %arg1[%c2_84, %c3_85, %c0_86, %c0_87] : memref<9x5x8x50xbf16, #tpu.memory_space<vmem>>, vector<1x1x8x50xbf16>
    %113 = vector.shape_cast %112 : vector<1x1x8x50xbf16> to vector<8x50xbf16>
    %cst_88 = arith.constant dense<0.000000e+00> : vector<8x50xf32>
    %114 = tpu.matmul %113, %0, %cst_88 {dimension_numbers = #tpu.dot_dimension_numbers<[1], [0], [0], [1], [0, 0, 1, 1], [], []>} : vector<8x50xbf16>, vector<50x50xbf16>, vector<8x50xf32> -> vector<8x50xf32>
    %115 = vector.broadcast %1 : vector<1x50xf32> to vector<8x50xf32>
    %116 = arith.addf %114, %115 : vector<8x50xf32>
    %cst_89 = arith.constant 0.000000e+00 : f32
    %117 = vector.broadcast %cst_89 : f32 to vector<8x50xf32>
    %118 = arith.maximumf %116, %117 : vector<8x50xf32>
    %119 = arith.maximumf %111, %118 : vector<8x50xf32>
    %c2_90 = arith.constant 2 : index
    %c4_91 = arith.constant 4 : index
    %c0_92 = arith.constant 0 : index
    %c0_93 = arith.constant 0 : index
    %120 = vector.load %arg1[%c2_90, %c4_91, %c0_92, %c0_93] : memref<9x5x8x50xbf16, #tpu.memory_space<vmem>>, vector<1x1x8x50xbf16>
    %121 = vector.shape_cast %120 : vector<1x1x8x50xbf16> to vector<8x50xbf16>
    %cst_94 = arith.constant dense<0.000000e+00> : vector<8x50xf32>
    %122 = tpu.matmul %121, %0, %cst_94 {dimension_numbers = #tpu.dot_dimension_numbers<[1], [0], [0], [1], [0, 0, 1, 1], [], []>} : vector<8x50xbf16>, vector<50x50xbf16>, vector<8x50xf32> -> vector<8x50xf32>
    %123 = vector.broadcast %1 : vector<1x50xf32> to vector<8x50xf32>
    %124 = arith.addf %122, %123 : vector<8x50xf32>
    %cst_95 = arith.constant 0.000000e+00 : f32
    %125 = vector.broadcast %cst_95 : f32 to vector<8x50xf32>
    %126 = arith.maximumf %124, %125 : vector<8x50xf32>
    %127 = arith.maximumf %119, %126 : vector<8x50xf32>
    %128 = arith.truncf %127 : vector<8x50xf32> to vector<8x50xbf16>
    %c2_96 = arith.constant 2 : index
    %c0_97 = arith.constant 0 : index
    %c0_98 = arith.constant 0 : index
    %129 = vector.load %arg4[%c2_96, %c0_97, %c0_98] : memref<9x50x640xbf16, #tpu.memory_space<vmem>>, vector<1x50x640xbf16>
    %130 = vector.shape_cast %129 : vector<1x50x640xbf16> to vector<50x640xbf16>
    %cst_99 = arith.constant dense<0.000000e+00> : vector<8x640xf32>
    %131 = tpu.matmul %128, %130, %cst_99 {dimension_numbers = #tpu.dot_dimension_numbers<[1], [0], [0], [1], [0, 0, 1, 1], [], []>} : vector<8x50xbf16>, vector<50x640xbf16>, vector<8x640xf32> -> vector<8x640xf32>
    %132 = arith.addf %88, %131 : vector<8x640xf32>
    %c3_100 = arith.constant 3 : index
    %c0_101 = arith.constant 0 : index
    %c0_102 = arith.constant 0 : index
    %c0_103 = arith.constant 0 : index
    %133 = vector.load %arg1[%c3_100, %c0_101, %c0_102, %c0_103] : memref<9x5x8x50xbf16, #tpu.memory_space<vmem>>, vector<1x1x8x50xbf16>
    %134 = vector.shape_cast %133 : vector<1x1x8x50xbf16> to vector<8x50xbf16>
    %cst_104 = arith.constant dense<0.000000e+00> : vector<8x50xf32>
    %135 = tpu.matmul %134, %0, %cst_104 {dimension_numbers = #tpu.dot_dimension_numbers<[1], [0], [0], [1], [0, 0, 1, 1], [], []>} : vector<8x50xbf16>, vector<50x50xbf16>, vector<8x50xf32> -> vector<8x50xf32>
    %136 = vector.broadcast %1 : vector<1x50xf32> to vector<8x50xf32>
    %137 = arith.addf %135, %136 : vector<8x50xf32>
    %cst_105 = arith.constant 0.000000e+00 : f32
    %138 = vector.broadcast %cst_105 : f32 to vector<8x50xf32>
    %139 = arith.maximumf %137, %138 : vector<8x50xf32>
    %c3_106 = arith.constant 3 : index
    %c1_107 = arith.constant 1 : index
    %c0_108 = arith.constant 0 : index
    %c0_109 = arith.constant 0 : index
    %140 = vector.load %arg1[%c3_106, %c1_107, %c0_108, %c0_109] : memref<9x5x8x50xbf16, #tpu.memory_space<vmem>>, vector<1x1x8x50xbf16>
    %141 = vector.shape_cast %140 : vector<1x1x8x50xbf16> to vector<8x50xbf16>
    %cst_110 = arith.constant dense<0.000000e+00> : vector<8x50xf32>
    %142 = tpu.matmul %141, %0, %cst_110 {dimension_numbers = #tpu.dot_dimension_numbers<[1], [0], [0], [1], [0, 0, 1, 1], [], []>} : vector<8x50xbf16>, vector<50x50xbf16>, vector<8x50xf32> -> vector<8x50xf32>
    %143 = vector.broadcast %1 : vector<1x50xf32> to vector<8x50xf32>
    %144 = arith.addf %142, %143 : vector<8x50xf32>
    %cst_111 = arith.constant 0.000000e+00 : f32
    %145 = vector.broadcast %cst_111 : f32 to vector<8x50xf32>
    %146 = arith.maximumf %144, %145 : vector<8x50xf32>
    %147 = arith.maximumf %139, %146 : vector<8x50xf32>
    %c3_112 = arith.constant 3 : index
    %c2_113 = arith.constant 2 : index
    %c0_114 = arith.constant 0 : index
    %c0_115 = arith.constant 0 : index
    %148 = vector.load %arg1[%c3_112, %c2_113, %c0_114, %c0_115] : memref<9x5x8x50xbf16, #tpu.memory_space<vmem>>, vector<1x1x8x50xbf16>
    %149 = vector.shape_cast %148 : vector<1x1x8x50xbf16> to vector<8x50xbf16>
    %cst_116 = arith.constant dense<0.000000e+00> : vector<8x50xf32>
    %150 = tpu.matmul %149, %0, %cst_116 {dimension_numbers = #tpu.dot_dimension_numbers<[1], [0], [0], [1], [0, 0, 1, 1], [], []>} : vector<8x50xbf16>, vector<50x50xbf16>, vector<8x50xf32> -> vector<8x50xf32>
    %151 = vector.broadcast %1 : vector<1x50xf32> to vector<8x50xf32>
    %152 = arith.addf %150, %151 : vector<8x50xf32>
    %cst_117 = arith.constant 0.000000e+00 : f32
    %153 = vector.broadcast %cst_117 : f32 to vector<8x50xf32>
    %154 = arith.maximumf %152, %153 : vector<8x50xf32>
    %155 = arith.maximumf %147, %154 : vector<8x50xf32>
    %c3_118 = arith.constant 3 : index
    %c3_119 = arith.constant 3 : index
    %c0_120 = arith.constant 0 : index
    %c0_121 = arith.constant 0 : index
    %156 = vector.load %arg1[%c3_118, %c3_119, %c0_120, %c0_121] : memref<9x5x8x50xbf16, #tpu.memory_space<vmem>>, vector<1x1x8x50xbf16>
    %157 = vector.shape_cast %156 : vector<1x1x8x50xbf16> to vector<8x50xbf16>
    %cst_122 = arith.constant dense<0.000000e+00> : vector<8x50xf32>
    %158 = tpu.matmul %157, %0, %cst_122 {dimension_numbers = #tpu.dot_dimension_numbers<[1], [0], [0], [1], [0, 0, 1, 1], [], []>} : vector<8x50xbf16>, vector<50x50xbf16>, vector<8x50xf32> -> vector<8x50xf32>
    %159 = vector.broadcast %1 : vector<1x50xf32> to vector<8x50xf32>
    %160 = arith.addf %158, %159 : vector<8x50xf32>
    %cst_123 = arith.constant 0.000000e+00 : f32
    %161 = vector.broadcast %cst_123 : f32 to vector<8x50xf32>
    %162 = arith.maximumf %160, %161 : vector<8x50xf32>
    %163 = arith.maximumf %155, %162 : vector<8x50xf32>
    %c3_124 = arith.constant 3 : index
    %c4_125 = arith.constant 4 : index
    %c0_126 = arith.constant 0 : index
    %c0_127 = arith.constant 0 : index
    %164 = vector.load %arg1[%c3_124, %c4_125, %c0_126, %c0_127] : memref<9x5x8x50xbf16, #tpu.memory_space<vmem>>, vector<1x1x8x50xbf16>
    %165 = vector.shape_cast %164 : vector<1x1x8x50xbf16> to vector<8x50xbf16>
    %cst_128 = arith.constant dense<0.000000e+00> : vector<8x50xf32>
    %166 = tpu.matmul %165, %0, %cst_128 {dimension_numbers = #tpu.dot_dimension_numbers<[1], [0], [0], [1], [0, 0, 1, 1], [], []>} : vector<8x50xbf16>, vector<50x50xbf16>, vector<8x50xf32> -> vector<8x50xf32>
    %167 = vector.broadcast %1 : vector<1x50xf32> to vector<8x50xf32>
    %168 = arith.addf %166, %167 : vector<8x50xf32>
    %cst_129 = arith.constant 0.000000e+00 : f32
    %169 = vector.broadcast %cst_129 : f32 to vector<8x50xf32>
    %170 = arith.maximumf %168, %169 : vector<8x50xf32>
    %171 = arith.maximumf %163, %170 : vector<8x50xf32>
    %172 = arith.truncf %171 : vector<8x50xf32> to vector<8x50xbf16>
    %c3_130 = arith.constant 3 : index
    %c0_131 = arith.constant 0 : index
    %c0_132 = arith.constant 0 : index
    %173 = vector.load %arg4[%c3_130, %c0_131, %c0_132] : memref<9x50x640xbf16, #tpu.memory_space<vmem>>, vector<1x50x640xbf16>
    %174 = vector.shape_cast %173 : vector<1x50x640xbf16> to vector<50x640xbf16>
    %cst_133 = arith.constant dense<0.000000e+00> : vector<8x640xf32>
    %175 = tpu.matmul %172, %174, %cst_133 {dimension_numbers = #tpu.dot_dimension_numbers<[1], [0], [0], [1], [0, 0, 1, 1], [], []>} : vector<8x50xbf16>, vector<50x640xbf16>, vector<8x640xf32> -> vector<8x640xf32>
    %176 = arith.addf %132, %175 : vector<8x640xf32>
    %c4_134 = arith.constant 4 : index
    %c0_135 = arith.constant 0 : index
    %c0_136 = arith.constant 0 : index
    %c0_137 = arith.constant 0 : index
    %177 = vector.load %arg1[%c4_134, %c0_135, %c0_136, %c0_137] : memref<9x5x8x50xbf16, #tpu.memory_space<vmem>>, vector<1x1x8x50xbf16>
    %178 = vector.shape_cast %177 : vector<1x1x8x50xbf16> to vector<8x50xbf16>
    %cst_138 = arith.constant dense<0.000000e+00> : vector<8x50xf32>
    %179 = tpu.matmul %178, %0, %cst_138 {dimension_numbers = #tpu.dot_dimension_numbers<[1], [0], [0], [1], [0, 0, 1, 1], [], []>} : vector<8x50xbf16>, vector<50x50xbf16>, vector<8x50xf32> -> vector<8x50xf32>
    %180 = vector.broadcast %1 : vector<1x50xf32> to vector<8x50xf32>
    %181 = arith.addf %179, %180 : vector<8x50xf32>
    %cst_139 = arith.constant 0.000000e+00 : f32
    %182 = vector.broadcast %cst_139 : f32 to vector<8x50xf32>
    %183 = arith.maximumf %181, %182 : vector<8x50xf32>
    %c4_140 = arith.constant 4 : index
    %c1_141 = arith.constant 1 : index
    %c0_142 = arith.constant 0 : index
    %c0_143 = arith.constant 0 : index
    %184 = vector.load %arg1[%c4_140, %c1_141, %c0_142, %c0_143] : memref<9x5x8x50xbf16, #tpu.memory_space<vmem>>, vector<1x1x8x50xbf16>
    %185 = vector.shape_cast %184 : vector<1x1x8x50xbf16> to vector<8x50xbf16>
    %cst_144 = arith.constant dense<0.000000e+00> : vector<8x50xf32>
    %186 = tpu.matmul %185, %0, %cst_144 {dimension_numbers = #tpu.dot_dimension_numbers<[1], [0], [0], [1], [0, 0, 1, 1], [], []>} : vector<8x50xbf16>, vector<50x50xbf16>, vector<8x50xf32> -> vector<8x50xf32>
    %187 = vector.broadcast %1 : vector<1x50xf32> to vector<8x50xf32>
    %188 = arith.addf %186, %187 : vector<8x50xf32>
    %cst_145 = arith.constant 0.000000e+00 : f32
    %189 = vector.broadcast %cst_145 : f32 to vector<8x50xf32>
    %190 = arith.maximumf %188, %189 : vector<8x50xf32>
    %191 = arith.maximumf %183, %190 : vector<8x50xf32>
    %c4_146 = arith.constant 4 : index
    %c2_147 = arith.constant 2 : index
    %c0_148 = arith.constant 0 : index
    %c0_149 = arith.constant 0 : index
    %192 = vector.load %arg1[%c4_146, %c2_147, %c0_148, %c0_149] : memref<9x5x8x50xbf16, #tpu.memory_space<vmem>>, vector<1x1x8x50xbf16>
    %193 = vector.shape_cast %192 : vector<1x1x8x50xbf16> to vector<8x50xbf16>
    %cst_150 = arith.constant dense<0.000000e+00> : vector<8x50xf32>
    %194 = tpu.matmul %193, %0, %cst_150 {dimension_numbers = #tpu.dot_dimension_numbers<[1], [0], [0], [1], [0, 0, 1, 1], [], []>} : vector<8x50xbf16>, vector<50x50xbf16>, vector<8x50xf32> -> vector<8x50xf32>
    %195 = vector.broadcast %1 : vector<1x50xf32> to vector<8x50xf32>
    %196 = arith.addf %194, %195 : vector<8x50xf32>
    %cst_151 = arith.constant 0.000000e+00 : f32
    %197 = vector.broadcast %cst_151 : f32 to vector<8x50xf32>
    %198 = arith.maximumf %196, %197 : vector<8x50xf32>
    %199 = arith.maximumf %191, %198 : vector<8x50xf32>
    %c4_152 = arith.constant 4 : index
    %c3_153 = arith.constant 3 : index
    %c0_154 = arith.constant 0 : index
    %c0_155 = arith.constant 0 : index
    %200 = vector.load %arg1[%c4_152, %c3_153, %c0_154, %c0_155] : memref<9x5x8x50xbf16, #tpu.memory_space<vmem>>, vector<1x1x8x50xbf16>
    %201 = vector.shape_cast %200 : vector<1x1x8x50xbf16> to vector<8x50xbf16>
    %cst_156 = arith.constant dense<0.000000e+00> : vector<8x50xf32>
    %202 = tpu.matmul %201, %0, %cst_156 {dimension_numbers = #tpu.dot_dimension_numbers<[1], [0], [0], [1], [0, 0, 1, 1], [], []>} : vector<8x50xbf16>, vector<50x50xbf16>, vector<8x50xf32> -> vector<8x50xf32>
    %203 = vector.broadcast %1 : vector<1x50xf32> to vector<8x50xf32>
    %204 = arith.addf %202, %203 : vector<8x50xf32>
    %cst_157 = arith.constant 0.000000e+00 : f32
    %205 = vector.broadcast %cst_157 : f32 to vector<8x50xf32>
    %206 = arith.maximumf %204, %205 : vector<8x50xf32>
    %207 = arith.maximumf %199, %206 : vector<8x50xf32>
    %c4_158 = arith.constant 4 : index
    %c4_159 = arith.constant 4 : index
    %c0_160 = arith.constant 0 : index
    %c0_161 = arith.constant 0 : index
    %208 = vector.load %arg1[%c4_158, %c4_159, %c0_160, %c0_161] : memref<9x5x8x50xbf16, #tpu.memory_space<vmem>>, vector<1x1x8x50xbf16>
    %209 = vector.shape_cast %208 : vector<1x1x8x50xbf16> to vector<8x50xbf16>
    %cst_162 = arith.constant dense<0.000000e+00> : vector<8x50xf32>
    %210 = tpu.matmul %209, %0, %cst_162 {dimension_numbers = #tpu.dot_dimension_numbers<[1], [0], [0], [1], [0, 0, 1, 1], [], []>} : vector<8x50xbf16>, vector<50x50xbf16>, vector<8x50xf32> -> vector<8x50xf32>
    %211 = vector.broadcast %1 : vector<1x50xf32> to vector<8x50xf32>
    %212 = arith.addf %210, %211 : vector<8x50xf32>
    %cst_163 = arith.constant 0.000000e+00 : f32
    %213 = vector.broadcast %cst_163 : f32 to vector<8x50xf32>
    %214 = arith.maximumf %212, %213 : vector<8x50xf32>
    %215 = arith.maximumf %207, %214 : vector<8x50xf32>
    %216 = arith.truncf %215 : vector<8x50xf32> to vector<8x50xbf16>
    %c4_164 = arith.constant 4 : index
    %c0_165 = arith.constant 0 : index
    %c0_166 = arith.constant 0 : index
    %217 = vector.load %arg4[%c4_164, %c0_165, %c0_166] : memref<9x50x640xbf16, #tpu.memory_space<vmem>>, vector<1x50x640xbf16>
    %218 = vector.shape_cast %217 : vector<1x50x640xbf16> to vector<50x640xbf16>
    %cst_167 = arith.constant dense<0.000000e+00> : vector<8x640xf32>
    %219 = tpu.matmul %216, %218, %cst_167 {dimension_numbers = #tpu.dot_dimension_numbers<[1], [0], [0], [1], [0, 0, 1, 1], [], []>} : vector<8x50xbf16>, vector<50x640xbf16>, vector<8x640xf32> -> vector<8x640xf32>
    %220 = arith.addf %176, %219 : vector<8x640xf32>
    %c5 = arith.constant 5 : index
    %c0_168 = arith.constant 0 : index
    %c0_169 = arith.constant 0 : index
    %c0_170 = arith.constant 0 : index
    %221 = vector.load %arg1[%c5, %c0_168, %c0_169, %c0_170] : memref<9x5x8x50xbf16, #tpu.memory_space<vmem>>, vector<1x1x8x50xbf16>
    %222 = vector.shape_cast %221 : vector<1x1x8x50xbf16> to vector<8x50xbf16>
    %cst_171 = arith.constant dense<0.000000e+00> : vector<8x50xf32>
    %223 = tpu.matmul %222, %0, %cst_171 {dimension_numbers = #tpu.dot_dimension_numbers<[1], [0], [0], [1], [0, 0, 1, 1], [], []>} : vector<8x50xbf16>, vector<50x50xbf16>, vector<8x50xf32> -> vector<8x50xf32>
    %224 = vector.broadcast %1 : vector<1x50xf32> to vector<8x50xf32>
    %225 = arith.addf %223, %224 : vector<8x50xf32>
    %cst_172 = arith.constant 0.000000e+00 : f32
    %226 = vector.broadcast %cst_172 : f32 to vector<8x50xf32>
    %227 = arith.maximumf %225, %226 : vector<8x50xf32>
    %c5_173 = arith.constant 5 : index
    %c1_174 = arith.constant 1 : index
    %c0_175 = arith.constant 0 : index
    %c0_176 = arith.constant 0 : index
    %228 = vector.load %arg1[%c5_173, %c1_174, %c0_175, %c0_176] : memref<9x5x8x50xbf16, #tpu.memory_space<vmem>>, vector<1x1x8x50xbf16>
    %229 = vector.shape_cast %228 : vector<1x1x8x50xbf16> to vector<8x50xbf16>
    %cst_177 = arith.constant dense<0.000000e+00> : vector<8x50xf32>
    %230 = tpu.matmul %229, %0, %cst_177 {dimension_numbers = #tpu.dot_dimension_numbers<[1], [0], [0], [1], [0, 0, 1, 1], [], []>} : vector<8x50xbf16>, vector<50x50xbf16>, vector<8x50xf32> -> vector<8x50xf32>
    %231 = vector.broadcast %1 : vector<1x50xf32> to vector<8x50xf32>
    %232 = arith.addf %230, %231 : vector<8x50xf32>
    %cst_178 = arith.constant 0.000000e+00 : f32
    %233 = vector.broadcast %cst_178 : f32 to vector<8x50xf32>
    %234 = arith.maximumf %232, %233 : vector<8x50xf32>
    %235 = arith.maximumf %227, %234 : vector<8x50xf32>
    %c5_179 = arith.constant 5 : index
    %c2_180 = arith.constant 2 : index
    %c0_181 = arith.constant 0 : index
    %c0_182 = arith.constant 0 : index
    %236 = vector.load %arg1[%c5_179, %c2_180, %c0_181, %c0_182] : memref<9x5x8x50xbf16, #tpu.memory_space<vmem>>, vector<1x1x8x50xbf16>
    %237 = vector.shape_cast %236 : vector<1x1x8x50xbf16> to vector<8x50xbf16>
    %cst_183 = arith.constant dense<0.000000e+00> : vector<8x50xf32>
    %238 = tpu.matmul %237, %0, %cst_183 {dimension_numbers = #tpu.dot_dimension_numbers<[1], [0], [0], [1], [0, 0, 1, 1], [], []>} : vector<8x50xbf16>, vector<50x50xbf16>, vector<8x50xf32> -> vector<8x50xf32>
    %239 = vector.broadcast %1 : vector<1x50xf32> to vector<8x50xf32>
    %240 = arith.addf %238, %239 : vector<8x50xf32>
    %cst_184 = arith.constant 0.000000e+00 : f32
    %241 = vector.broadcast %cst_184 : f32 to vector<8x50xf32>
    %242 = arith.maximumf %240, %241 : vector<8x50xf32>
    %243 = arith.maximumf %235, %242 : vector<8x50xf32>
    %c5_185 = arith.constant 5 : index
    %c3_186 = arith.constant 3 : index
    %c0_187 = arith.constant 0 : index
    %c0_188 = arith.constant 0 : index
    %244 = vector.load %arg1[%c5_185, %c3_186, %c0_187, %c0_188] : memref<9x5x8x50xbf16, #tpu.memory_space<vmem>>, vector<1x1x8x50xbf16>
    %245 = vector.shape_cast %244 : vector<1x1x8x50xbf16> to vector<8x50xbf16>
    %cst_189 = arith.constant dense<0.000000e+00> : vector<8x50xf32>
    %246 = tpu.matmul %245, %0, %cst_189 {dimension_numbers = #tpu.dot_dimension_numbers<[1], [0], [0], [1], [0, 0, 1, 1], [], []>} : vector<8x50xbf16>, vector<50x50xbf16>, vector<8x50xf32> -> vector<8x50xf32>
    %247 = vector.broadcast %1 : vector<1x50xf32> to vector<8x50xf32>
    %248 = arith.addf %246, %247 : vector<8x50xf32>
    %cst_190 = arith.constant 0.000000e+00 : f32
    %249 = vector.broadcast %cst_190 : f32 to vector<8x50xf32>
    %250 = arith.maximumf %248, %249 : vector<8x50xf32>
    %251 = arith.maximumf %243, %250 : vector<8x50xf32>
    %c5_191 = arith.constant 5 : index
    %c4_192 = arith.constant 4 : index
    %c0_193 = arith.constant 0 : index
    %c0_194 = arith.constant 0 : index
    %252 = vector.load %arg1[%c5_191, %c4_192, %c0_193, %c0_194] : memref<9x5x8x50xbf16, #tpu.memory_space<vmem>>, vector<1x1x8x50xbf16>
    %253 = vector.shape_cast %252 : vector<1x1x8x50xbf16> to vector<8x50xbf16>
    %cst_195 = arith.constant dense<0.000000e+00> : vector<8x50xf32>
    %254 = tpu.matmul %253, %0, %cst_195 {dimension_numbers = #tpu.dot_dimension_numbers<[1], [0], [0], [1], [0, 0, 1, 1], [], []>} : vector<8x50xbf16>, vector<50x50xbf16>, vector<8x50xf32> -> vector<8x50xf32>
    %255 = vector.broadcast %1 : vector<1x50xf32> to vector<8x50xf32>
    %256 = arith.addf %254, %255 : vector<8x50xf32>
    %cst_196 = arith.constant 0.000000e+00 : f32
    %257 = vector.broadcast %cst_196 : f32 to vector<8x50xf32>
    %258 = arith.maximumf %256, %257 : vector<8x50xf32>
    %259 = arith.maximumf %251, %258 : vector<8x50xf32>
    %260 = arith.truncf %259 : vector<8x50xf32> to vector<8x50xbf16>
    %c5_197 = arith.constant 5 : index
    %c0_198 = arith.constant 0 : index
    %c0_199 = arith.constant 0 : index
    %261 = vector.load %arg4[%c5_197, %c0_198, %c0_199] : memref<9x50x640xbf16, #tpu.memory_space<vmem>>, vector<1x50x640xbf16>
    %262 = vector.shape_cast %261 : vector<1x50x640xbf16> to vector<50x640xbf16>
    %cst_200 = arith.constant dense<0.000000e+00> : vector<8x640xf32>
    %263 = tpu.matmul %260, %262, %cst_200 {dimension_numbers = #tpu.dot_dimension_numbers<[1], [0], [0], [1], [0, 0, 1, 1], [], []>} : vector<8x50xbf16>, vector<50x640xbf16>, vector<8x640xf32> -> vector<8x640xf32>
    %264 = arith.addf %220, %263 : vector<8x640xf32>
    %c6 = arith.constant 6 : index
    %c0_201 = arith.constant 0 : index
    %c0_202 = arith.constant 0 : index
    %c0_203 = arith.constant 0 : index
    %265 = vector.load %arg1[%c6, %c0_201, %c0_202, %c0_203] : memref<9x5x8x50xbf16, #tpu.memory_space<vmem>>, vector<1x1x8x50xbf16>
    %266 = vector.shape_cast %265 : vector<1x1x8x50xbf16> to vector<8x50xbf16>
    %cst_204 = arith.constant dense<0.000000e+00> : vector<8x50xf32>
    %267 = tpu.matmul %266, %0, %cst_204 {dimension_numbers = #tpu.dot_dimension_numbers<[1], [0], [0], [1], [0, 0, 1, 1], [], []>} : vector<8x50xbf16>, vector<50x50xbf16>, vector<8x50xf32> -> vector<8x50xf32>
    %268 = vector.broadcast %1 : vector<1x50xf32> to vector<8x50xf32>
    %269 = arith.addf %267, %268 : vector<8x50xf32>
    %cst_205 = arith.constant 0.000000e+00 : f32
    %270 = vector.broadcast %cst_205 : f32 to vector<8x50xf32>
    %271 = arith.maximumf %269, %270 : vector<8x50xf32>
    %c6_206 = arith.constant 6 : index
    %c1_207 = arith.constant 1 : index
    %c0_208 = arith.constant 0 : index
    %c0_209 = arith.constant 0 : index
    %272 = vector.load %arg1[%c6_206, %c1_207, %c0_208, %c0_209] : memref<9x5x8x50xbf16, #tpu.memory_space<vmem>>, vector<1x1x8x50xbf16>
    %273 = vector.shape_cast %272 : vector<1x1x8x50xbf16> to vector<8x50xbf16>
    %cst_210 = arith.constant dense<0.000000e+00> : vector<8x50xf32>
    %274 = tpu.matmul %273, %0, %cst_210 {dimension_numbers = #tpu.dot_dimension_numbers<[1], [0], [0], [1], [0, 0, 1, 1], [], []>} : vector<8x50xbf16>, vector<50x50xbf16>, vector<8x50xf32> -> vector<8x50xf32>
    %275 = vector.broadcast %1 : vector<1x50xf32> to vector<8x50xf32>
    %276 = arith.addf %274, %275 : vector<8x50xf32>
    %cst_211 = arith.constant 0.000000e+00 : f32
    %277 = vector.broadcast %cst_211 : f32 to vector<8x50xf32>
    %278 = arith.maximumf %276, %277 : vector<8x50xf32>
    %279 = arith.maximumf %271, %278 : vector<8x50xf32>
    %c6_212 = arith.constant 6 : index
    %c2_213 = arith.constant 2 : index
    %c0_214 = arith.constant 0 : index
    %c0_215 = arith.constant 0 : index
    %280 = vector.load %arg1[%c6_212, %c2_213, %c0_214, %c0_215] : memref<9x5x8x50xbf16, #tpu.memory_space<vmem>>, vector<1x1x8x50xbf16>
    %281 = vector.shape_cast %280 : vector<1x1x8x50xbf16> to vector<8x50xbf16>
    %cst_216 = arith.constant dense<0.000000e+00> : vector<8x50xf32>
    %282 = tpu.matmul %281, %0, %cst_216 {dimension_numbers = #tpu.dot_dimension_numbers<[1], [0], [0], [1], [0, 0, 1, 1], [], []>} : vector<8x50xbf16>, vector<50x50xbf16>, vector<8x50xf32> -> vector<8x50xf32>
    %283 = vector.broadcast %1 : vector<1x50xf32> to vector<8x50xf32>
    %284 = arith.addf %282, %283 : vector<8x50xf32>
    %cst_217 = arith.constant 0.000000e+00 : f32
    %285 = vector.broadcast %cst_217 : f32 to vector<8x50xf32>
    %286 = arith.maximumf %284, %285 : vector<8x50xf32>
    %287 = arith.maximumf %279, %286 : vector<8x50xf32>
    %c6_218 = arith.constant 6 : index
    %c3_219 = arith.constant 3 : index
    %c0_220 = arith.constant 0 : index
    %c0_221 = arith.constant 0 : index
    %288 = vector.load %arg1[%c6_218, %c3_219, %c0_220, %c0_221] : memref<9x5x8x50xbf16, #tpu.memory_space<vmem>>, vector<1x1x8x50xbf16>
    %289 = vector.shape_cast %288 : vector<1x1x8x50xbf16> to vector<8x50xbf16>
    %cst_222 = arith.constant dense<0.000000e+00> : vector<8x50xf32>
    %290 = tpu.matmul %289, %0, %cst_222 {dimension_numbers = #tpu.dot_dimension_numbers<[1], [0], [0], [1], [0, 0, 1, 1], [], []>} : vector<8x50xbf16>, vector<50x50xbf16>, vector<8x50xf32> -> vector<8x50xf32>
    %291 = vector.broadcast %1 : vector<1x50xf32> to vector<8x50xf32>
    %292 = arith.addf %290, %291 : vector<8x50xf32>
    %cst_223 = arith.constant 0.000000e+00 : f32
    %293 = vector.broadcast %cst_223 : f32 to vector<8x50xf32>
    %294 = arith.maximumf %292, %293 : vector<8x50xf32>
    %295 = arith.maximumf %287, %294 : vector<8x50xf32>
    %c6_224 = arith.constant 6 : index
    %c4_225 = arith.constant 4 : index
    %c0_226 = arith.constant 0 : index
    %c0_227 = arith.constant 0 : index
    %296 = vector.load %arg1[%c6_224, %c4_225, %c0_226, %c0_227] : memref<9x5x8x50xbf16, #tpu.memory_space<vmem>>, vector<1x1x8x50xbf16>
    %297 = vector.shape_cast %296 : vector<1x1x8x50xbf16> to vector<8x50xbf16>
    %cst_228 = arith.constant dense<0.000000e+00> : vector<8x50xf32>
    %298 = tpu.matmul %297, %0, %cst_228 {dimension_numbers = #tpu.dot_dimension_numbers<[1], [0], [0], [1], [0, 0, 1, 1], [], []>} : vector<8x50xbf16>, vector<50x50xbf16>, vector<8x50xf32> -> vector<8x50xf32>
    %299 = vector.broadcast %1 : vector<1x50xf32> to vector<8x50xf32>
    %300 = arith.addf %298, %299 : vector<8x50xf32>
    %cst_229 = arith.constant 0.000000e+00 : f32
    %301 = vector.broadcast %cst_229 : f32 to vector<8x50xf32>
    %302 = arith.maximumf %300, %301 : vector<8x50xf32>
    %303 = arith.maximumf %295, %302 : vector<8x50xf32>
    %304 = arith.truncf %303 : vector<8x50xf32> to vector<8x50xbf16>
    %c6_230 = arith.constant 6 : index
    %c0_231 = arith.constant 0 : index
    %c0_232 = arith.constant 0 : index
    %305 = vector.load %arg4[%c6_230, %c0_231, %c0_232] : memref<9x50x640xbf16, #tpu.memory_space<vmem>>, vector<1x50x640xbf16>
    %306 = vector.shape_cast %305 : vector<1x50x640xbf16> to vector<50x640xbf16>
    %cst_233 = arith.constant dense<0.000000e+00> : vector<8x640xf32>
    %307 = tpu.matmul %304, %306, %cst_233 {dimension_numbers = #tpu.dot_dimension_numbers<[1], [0], [0], [1], [0, 0, 1, 1], [], []>} : vector<8x50xbf16>, vector<50x640xbf16>, vector<8x640xf32> -> vector<8x640xf32>
    %308 = arith.addf %264, %307 : vector<8x640xf32>
    %c7 = arith.constant 7 : index
    %c0_234 = arith.constant 0 : index
    %c0_235 = arith.constant 0 : index
    %c0_236 = arith.constant 0 : index
    %309 = vector.load %arg1[%c7, %c0_234, %c0_235, %c0_236] : memref<9x5x8x50xbf16, #tpu.memory_space<vmem>>, vector<1x1x8x50xbf16>
    %310 = vector.shape_cast %309 : vector<1x1x8x50xbf16> to vector<8x50xbf16>
    %cst_237 = arith.constant dense<0.000000e+00> : vector<8x50xf32>
    %311 = tpu.matmul %310, %0, %cst_237 {dimension_numbers = #tpu.dot_dimension_numbers<[1], [0], [0], [1], [0, 0, 1, 1], [], []>} : vector<8x50xbf16>, vector<50x50xbf16>, vector<8x50xf32> -> vector<8x50xf32>
    %312 = vector.broadcast %1 : vector<1x50xf32> to vector<8x50xf32>
    %313 = arith.addf %311, %312 : vector<8x50xf32>
    %cst_238 = arith.constant 0.000000e+00 : f32
    %314 = vector.broadcast %cst_238 : f32 to vector<8x50xf32>
    %315 = arith.maximumf %313, %314 : vector<8x50xf32>
    %c7_239 = arith.constant 7 : index
    %c1_240 = arith.constant 1 : index
    %c0_241 = arith.constant 0 : index
    %c0_242 = arith.constant 0 : index
    %316 = vector.load %arg1[%c7_239, %c1_240, %c0_241, %c0_242] : memref<9x5x8x50xbf16, #tpu.memory_space<vmem>>, vector<1x1x8x50xbf16>
    %317 = vector.shape_cast %316 : vector<1x1x8x50xbf16> to vector<8x50xbf16>
    %cst_243 = arith.constant dense<0.000000e+00> : vector<8x50xf32>
    %318 = tpu.matmul %317, %0, %cst_243 {dimension_numbers = #tpu.dot_dimension_numbers<[1], [0], [0], [1], [0, 0, 1, 1], [], []>} : vector<8x50xbf16>, vector<50x50xbf16>, vector<8x50xf32> -> vector<8x50xf32>
    %319 = vector.broadcast %1 : vector<1x50xf32> to vector<8x50xf32>
    %320 = arith.addf %318, %319 : vector<8x50xf32>
    %cst_244 = arith.constant 0.000000e+00 : f32
    %321 = vector.broadcast %cst_244 : f32 to vector<8x50xf32>
    %322 = arith.maximumf %320, %321 : vector<8x50xf32>
    %323 = arith.maximumf %315, %322 : vector<8x50xf32>
    %c7_245 = arith.constant 7 : index
    %c2_246 = arith.constant 2 : index
    %c0_247 = arith.constant 0 : index
    %c0_248 = arith.constant 0 : index
    %324 = vector.load %arg1[%c7_245, %c2_246, %c0_247, %c0_248] : memref<9x5x8x50xbf16, #tpu.memory_space<vmem>>, vector<1x1x8x50xbf16>
    %325 = vector.shape_cast %324 : vector<1x1x8x50xbf16> to vector<8x50xbf16>
    %cst_249 = arith.constant dense<0.000000e+00> : vector<8x50xf32>
    %326 = tpu.matmul %325, %0, %cst_249 {dimension_numbers = #tpu.dot_dimension_numbers<[1], [0], [0], [1], [0, 0, 1, 1], [], []>} : vector<8x50xbf16>, vector<50x50xbf16>, vector<8x50xf32> -> vector<8x50xf32>
    %327 = vector.broadcast %1 : vector<1x50xf32> to vector<8x50xf32>
    %328 = arith.addf %326, %327 : vector<8x50xf32>
    %cst_250 = arith.constant 0.000000e+00 : f32
    %329 = vector.broadcast %cst_250 : f32 to vector<8x50xf32>
    %330 = arith.maximumf %328, %329 : vector<8x50xf32>
    %331 = arith.maximumf %323, %330 : vector<8x50xf32>
    %c7_251 = arith.constant 7 : index
    %c3_252 = arith.constant 3 : index
    %c0_253 = arith.constant 0 : index
    %c0_254 = arith.constant 0 : index
    %332 = vector.load %arg1[%c7_251, %c3_252, %c0_253, %c0_254] : memref<9x5x8x50xbf16, #tpu.memory_space<vmem>>, vector<1x1x8x50xbf16>
    %333 = vector.shape_cast %332 : vector<1x1x8x50xbf16> to vector<8x50xbf16>
    %cst_255 = arith.constant dense<0.000000e+00> : vector<8x50xf32>
    %334 = tpu.matmul %333, %0, %cst_255 {dimension_numbers = #tpu.dot_dimension_numbers<[1], [0], [0], [1], [0, 0, 1, 1], [], []>} : vector<8x50xbf16>, vector<50x50xbf16>, vector<8x50xf32> -> vector<8x50xf32>
    %335 = vector.broadcast %1 : vector<1x50xf32> to vector<8x50xf32>
    %336 = arith.addf %334, %335 : vector<8x50xf32>
    %cst_256 = arith.constant 0.000000e+00 : f32
    %337 = vector.broadcast %cst_256 : f32 to vector<8x50xf32>
    %338 = arith.maximumf %336, %337 : vector<8x50xf32>
    %339 = arith.maximumf %331, %338 : vector<8x50xf32>
    %c7_257 = arith.constant 7 : index
    %c4_258 = arith.constant 4 : index
    %c0_259 = arith.constant 0 : index
    %c0_260 = arith.constant 0 : index
    %340 = vector.load %arg1[%c7_257, %c4_258, %c0_259, %c0_260] : memref<9x5x8x50xbf16, #tpu.memory_space<vmem>>, vector<1x1x8x50xbf16>
    %341 = vector.shape_cast %340 : vector<1x1x8x50xbf16> to vector<8x50xbf16>
    %cst_261 = arith.constant dense<0.000000e+00> : vector<8x50xf32>
    %342 = tpu.matmul %341, %0, %cst_261 {dimension_numbers = #tpu.dot_dimension_numbers<[1], [0], [0], [1], [0, 0, 1, 1], [], []>} : vector<8x50xbf16>, vector<50x50xbf16>, vector<8x50xf32> -> vector<8x50xf32>
    %343 = vector.broadcast %1 : vector<1x50xf32> to vector<8x50xf32>
    %344 = arith.addf %342, %343 : vector<8x50xf32>
    %cst_262 = arith.constant 0.000000e+00 : f32
    %345 = vector.broadcast %cst_262 : f32 to vector<8x50xf32>
    %346 = arith.maximumf %344, %345 : vector<8x50xf32>
    %347 = arith.maximumf %339, %346 : vector<8x50xf32>
    %348 = arith.truncf %347 : vector<8x50xf32> to vector<8x50xbf16>
    %c7_263 = arith.constant 7 : index
    %c0_264 = arith.constant 0 : index
    %c0_265 = arith.constant 0 : index
    %349 = vector.load %arg4[%c7_263, %c0_264, %c0_265] : memref<9x50x640xbf16, #tpu.memory_space<vmem>>, vector<1x50x640xbf16>
    %350 = vector.shape_cast %349 : vector<1x50x640xbf16> to vector<50x640xbf16>
    %cst_266 = arith.constant dense<0.000000e+00> : vector<8x640xf32>
    %351 = tpu.matmul %348, %350, %cst_266 {dimension_numbers = #tpu.dot_dimension_numbers<[1], [0], [0], [1], [0, 0, 1, 1], [], []>} : vector<8x50xbf16>, vector<50x640xbf16>, vector<8x640xf32> -> vector<8x640xf32>
    %352 = arith.addf %308, %351 : vector<8x640xf32>
    %c8 = arith.constant 8 : index
    %c0_267 = arith.constant 0 : index
    %c0_268 = arith.constant 0 : index
    %c0_269 = arith.constant 0 : index
    %353 = vector.load %arg1[%c8, %c0_267, %c0_268, %c0_269] : memref<9x5x8x50xbf16, #tpu.memory_space<vmem>>, vector<1x1x8x50xbf16>
    %354 = vector.shape_cast %353 : vector<1x1x8x50xbf16> to vector<8x50xbf16>
    %cst_270 = arith.constant dense<0.000000e+00> : vector<8x50xf32>
    %355 = tpu.matmul %354, %0, %cst_270 {dimension_numbers = #tpu.dot_dimension_numbers<[1], [0], [0], [1], [0, 0, 1, 1], [], []>} : vector<8x50xbf16>, vector<50x50xbf16>, vector<8x50xf32> -> vector<8x50xf32>
    %356 = vector.broadcast %1 : vector<1x50xf32> to vector<8x50xf32>
    %357 = arith.addf %355, %356 : vector<8x50xf32>
    %cst_271 = arith.constant 0.000000e+00 : f32
    %358 = vector.broadcast %cst_271 : f32 to vector<8x50xf32>
    %359 = arith.maximumf %357, %358 : vector<8x50xf32>
    %c8_272 = arith.constant 8 : index
    %c1_273 = arith.constant 1 : index
    %c0_274 = arith.constant 0 : index
    %c0_275 = arith.constant 0 : index
    %360 = vector.load %arg1[%c8_272, %c1_273, %c0_274, %c0_275] : memref<9x5x8x50xbf16, #tpu.memory_space<vmem>>, vector<1x1x8x50xbf16>
    %361 = vector.shape_cast %360 : vector<1x1x8x50xbf16> to vector<8x50xbf16>
    %cst_276 = arith.constant dense<0.000000e+00> : vector<8x50xf32>
    %362 = tpu.matmul %361, %0, %cst_276 {dimension_numbers = #tpu.dot_dimension_numbers<[1], [0], [0], [1], [0, 0, 1, 1], [], []>} : vector<8x50xbf16>, vector<50x50xbf16>, vector<8x50xf32> -> vector<8x50xf32>
    %363 = vector.broadcast %1 : vector<1x50xf32> to vector<8x50xf32>
    %364 = arith.addf %362, %363 : vector<8x50xf32>
    %cst_277 = arith.constant 0.000000e+00 : f32
    %365 = vector.broadcast %cst_277 : f32 to vector<8x50xf32>
    %366 = arith.maximumf %364, %365 : vector<8x50xf32>
    %367 = arith.maximumf %359, %366 : vector<8x50xf32>
    %c8_278 = arith.constant 8 : index
    %c2_279 = arith.constant 2 : index
    %c0_280 = arith.constant 0 : index
    %c0_281 = arith.constant 0 : index
    %368 = vector.load %arg1[%c8_278, %c2_279, %c0_280, %c0_281] : memref<9x5x8x50xbf16, #tpu.memory_space<vmem>>, vector<1x1x8x50xbf16>
    %369 = vector.shape_cast %368 : vector<1x1x8x50xbf16> to vector<8x50xbf16>
    %cst_282 = arith.constant dense<0.000000e+00> : vector<8x50xf32>
    %370 = tpu.matmul %369, %0, %cst_282 {dimension_numbers = #tpu.dot_dimension_numbers<[1], [0], [0], [1], [0, 0, 1, 1], [], []>} : vector<8x50xbf16>, vector<50x50xbf16>, vector<8x50xf32> -> vector<8x50xf32>
    %371 = vector.broadcast %1 : vector<1x50xf32> to vector<8x50xf32>
    %372 = arith.addf %370, %371 : vector<8x50xf32>
    %cst_283 = arith.constant 0.000000e+00 : f32
    %373 = vector.broadcast %cst_283 : f32 to vector<8x50xf32>
    %374 = arith.maximumf %372, %373 : vector<8x50xf32>
    %375 = arith.maximumf %367, %374 : vector<8x50xf32>
    %c8_284 = arith.constant 8 : index
    %c3_285 = arith.constant 3 : index
    %c0_286 = arith.constant 0 : index
    %c0_287 = arith.constant 0 : index
    %376 = vector.load %arg1[%c8_284, %c3_285, %c0_286, %c0_287] : memref<9x5x8x50xbf16, #tpu.memory_space<vmem>>, vector<1x1x8x50xbf16>
    %377 = vector.shape_cast %376 : vector<1x1x8x50xbf16> to vector<8x50xbf16>
    %cst_288 = arith.constant dense<0.000000e+00> : vector<8x50xf32>
    %378 = tpu.matmul %377, %0, %cst_288 {dimension_numbers = #tpu.dot_dimension_numbers<[1], [0], [0], [1], [0, 0, 1, 1], [], []>} : vector<8x50xbf16>, vector<50x50xbf16>, vector<8x50xf32> -> vector<8x50xf32>
    %379 = vector.broadcast %1 : vector<1x50xf32> to vector<8x50xf32>
    %380 = arith.addf %378, %379 : vector<8x50xf32>
    %cst_289 = arith.constant 0.000000e+00 : f32
    %381 = vector.broadcast %cst_289 : f32 to vector<8x50xf32>
    %382 = arith.maximumf %380, %381 : vector<8x50xf32>
    %383 = arith.maximumf %375, %382 : vector<8x50xf32>
    %c8_290 = arith.constant 8 : index
    %c4_291 = arith.constant 4 : index
    %c0_292 = arith.constant 0 : index
    %c0_293 = arith.constant 0 : index
    %384 = vector.load %arg1[%c8_290, %c4_291, %c0_292, %c0_293] : memref<9x5x8x50xbf16, #tpu.memory_space<vmem>>, vector<1x1x8x50xbf16>
    %385 = vector.shape_cast %384 : vector<1x1x8x50xbf16> to vector<8x50xbf16>
    %cst_294 = arith.constant dense<0.000000e+00> : vector<8x50xf32>
    %386 = tpu.matmul %385, %0, %cst_294 {dimension_numbers = #tpu.dot_dimension_numbers<[1], [0], [0], [1], [0, 0, 1, 1], [], []>} : vector<8x50xbf16>, vector<50x50xbf16>, vector<8x50xf32> -> vector<8x50xf32>
    %387 = vector.broadcast %1 : vector<1x50xf32> to vector<8x50xf32>
    %388 = arith.addf %386, %387 : vector<8x50xf32>
    %cst_295 = arith.constant 0.000000e+00 : f32
    %389 = vector.broadcast %cst_295 : f32 to vector<8x50xf32>
    %390 = arith.maximumf %388, %389 : vector<8x50xf32>
    %391 = arith.maximumf %383, %390 : vector<8x50xf32>
    %392 = arith.truncf %391 : vector<8x50xf32> to vector<8x50xbf16>
    %c8_296 = arith.constant 8 : index
    %c0_297 = arith.constant 0 : index
    %c0_298 = arith.constant 0 : index
    %393 = vector.load %arg4[%c8_296, %c0_297, %c0_298] : memref<9x50x640xbf16, #tpu.memory_space<vmem>>, vector<1x50x640xbf16>
    %394 = vector.shape_cast %393 : vector<1x50x640xbf16> to vector<50x640xbf16>
    %cst_299 = arith.constant dense<0.000000e+00> : vector<8x640xf32>
    %395 = tpu.matmul %392, %394, %cst_299 {dimension_numbers = #tpu.dot_dimension_numbers<[1], [0], [0], [1], [0, 0, 1, 1], [], []>} : vector<8x50xbf16>, vector<50x640xbf16>, vector<8x640xf32> -> vector<8x640xf32>
    %396 = arith.addf %352, %395 : vector<8x640xf32>
    %c0_300 = arith.constant 0 : index
    %c0_301 = arith.constant 0 : index
    %397 = vector.load %arg5[%c0_300, %c0_301] : memref<1x640xf32, #tpu.memory_space<vmem>>, vector<1x640xf32>
    %398 = vector.broadcast %397 : vector<1x640xf32> to vector<8x640xf32>
    %399 = arith.addf %396, %398 : vector<8x640xf32>
    %cst_302 = arith.constant 0.000000e+00 : f32
    %400 = vector.broadcast %cst_302 : f32 to vector<8x640xf32>
    %401 = arith.maximumf %399, %400 : vector<8x640xf32>
    %402 = arith.truncf %401 : vector<8x640xf32> to vector<8x640xbf16>
    %c0_303 = arith.constant 0 : index
    %c0_304 = arith.constant 0 : index
    %403 = vector.load %arg6[%c0_303, %c0_304] : memref<640x128xbf16, #tpu.memory_space<vmem>>, vector<640x128xbf16>
    %cst_305 = arith.constant dense<0.000000e+00> : vector<8x128xf32>
    %404 = tpu.matmul %402, %403, %cst_305 {dimension_numbers = #tpu.dot_dimension_numbers<[1], [0], [0], [1], [0, 0, 1, 1], [], []>} : vector<8x640xbf16>, vector<640x128xbf16>, vector<8x128xf32> -> vector<8x128xf32>
    %c0_306 = arith.constant 0 : index
    %c0_307 = arith.constant 0 : index
    %405 = vector.load %arg7[%c0_306, %c0_307] : memref<1x128xf32, #tpu.memory_space<vmem>>, vector<1x128xf32>
    %406 = vector.broadcast %405 : vector<1x128xf32> to vector<8x128xf32>
    %407 = arith.addf %404, %406 : vector<8x128xf32>
    %cst_308 = arith.constant 0.000000e+00 : f32
    %408 = vector.broadcast %cst_308 : f32 to vector<8x128xf32>
    %409 = arith.maximumf %407, %408 : vector<8x128xf32>
    %410 = arith.truncf %409 : vector<8x128xf32> to vector<8x128xbf16>
    %c0_309 = arith.constant 0 : index
    %c0_310 = arith.constant 0 : index
    %411 = vector.load %arg8[%c0_309, %c0_310] : memref<128x128xbf16, #tpu.memory_space<vmem>>, vector<128x128xbf16>
    %cst_311 = arith.constant dense<0.000000e+00> : vector<8x128xf32>
    %412 = tpu.matmul %410, %411, %cst_311 {dimension_numbers = #tpu.dot_dimension_numbers<[1], [0], [0], [1], [0, 0, 1, 1], [], []>} : vector<8x128xbf16>, vector<128x128xbf16>, vector<8x128xf32> -> vector<8x128xf32>
    %c0_312 = arith.constant 0 : index
    %c0_313 = arith.constant 0 : index
    %413 = vector.load %arg9[%c0_312, %c0_313] : memref<1x128xf32, #tpu.memory_space<vmem>>, vector<1x128xf32>
    %414 = vector.broadcast %413 : vector<1x128xf32> to vector<8x128xf32>
    %415 = arith.addf %412, %414 : vector<8x128xf32>
    %c0_314 = arith.constant 0 : index
    %c0_315 = arith.constant 0 : index
    %416 = vector.load %arg10[%c0_314, %c0_315] : memref<8x128xf32, #tpu.memory_space<vmem>>, vector<8x128xf32>
    tpu.vector_store %arg10[%c0_314, %c0_315], %415 {strides = array<i32>} : memref<8x128xf32, #tpu.memory_space<vmem>>, vector<8x128xf32>,
    return
  }
  func.func @transform_0(%arg0: i32) -> (i32, i32, i32, i32) {
    %c0_i32 = arith.constant 0 : i32
    %c0_i32_0 = arith.constant 0 : i32
    %c0_i32_1 = arith.constant 0 : i32
    %c0_i32_2 = arith.constant 0 : i32
    return %c0_i32, %c0_i32_0, %arg0, %c0_i32_1 : i32, i32, i32, i32
  }
  func.func @transform_1(%arg0: i32) -> (i32, i32) {
    %c0_i32 = arith.constant 0 : i32
    %c0_i32_0 = arith.constant 0 : i32
    %c0_i32_1 = arith.constant 0 : i32
    return %c0_i32, %c0_i32_0 : i32, i32
  }
  func.func @transform_2(%arg0: i32) -> (i32, i32) {
    %c0_i32 = arith.constant 0 : i32
    %c0_i32_0 = arith.constant 0 : i32
    %c0_i32_1 = arith.constant 0 : i32
    return %c0_i32, %c0_i32_0 : i32, i32
  }
  func.func @transform_3(%arg0: i32) -> (i32, i32, i32) {
    %c0_i32 = arith.constant 0 : i32
    %c0_i32_0 = arith.constant 0 : i32
    %c0_i32_1 = arith.constant 0 : i32
    %c0_i32_2 = arith.constant 0 : i32
    return %c0_i32, %c0_i32_0, %c0_i32_1 : i32, i32, i32
  }
  func.func @transform_4(%arg0: i32) -> (i32, i32) {
    %c0_i32 = arith.constant 0 : i32
    %c0_i32_0 = arith.constant 0 : i32
    %c0_i32_1 = arith.constant 0 : i32
    return %c0_i32, %c0_i32_0 : i32, i32
  }
  func.func @transform_5(%arg0: i32) -> (i32, i32) {
    %c0_i32 = arith.constant 0 : i32
    %c0_i32_0 = arith.constant 0 : i32
    %c0_i32_1 = arith.constant 0 : i32
    return %c0_i32, %c0_i32_0 : i32, i32
  }
  func.func @transform_6(%arg0: i32) -> (i32, i32) {
    %c0_i32 = arith.constant 0 : i32
    %c0_i32_0 = arith.constant 0 : i32
    %c0_i32_1 = arith.constant 0 : i32
    return %c0_i32, %c0_i32_0 : i32, i32
  }
  func.func @transform_7(%arg0: i32) -> (i32, i32) {
    %c0_i32 = arith.constant 0 : i32
    %c0_i32_0 = arith.constant 0 : i32
    %c0_i32_1 = arith.constant 0 : i32
    return %c0_i32, %c0_i32_0 : i32, i32
  }
  func.func @transform_8(%arg0: i32) -> (i32, i32) {
    %c0_i32 = arith.constant 0 : i32
    %c0_i32_0 = arith.constant 0 : i32
    %c0_i32_1 = arith.constant 0 : i32
    return %c0_i32, %c0_i32_0 : i32, i32
  }
  func.func @transform_9(%arg0: i32) -> (i32, i32) {
    %c0_i32 = arith.constant 0 : i32
    %c0_i32_0 = arith.constant 0 : i32
    return %arg0, %c0_i32 : i32, i32
  }
}

</mosaic_0001>

<llo_original>
// kernel: tpu_custom_call.1
$region0: #{tpu_custom_call.1}
  #allocation0 [shape = 'u32[]', space=smem, size = 0x4, offset = 0x4, fixed_abs, tag = 'smem constant byte address 0x4 - core index']
  #allocation1 [shape = 'u32[144,128]{1,0:T(1,128)}', space=vmem, size = 0x12000, scoped, tag = 'internal scratch']
  %s0 = inlined_call_operand.hbm [shape: bf16[9,5,16,50], index: 0, kind: input, shape index: {}]
  %s1 = inlined_call_operand.hbm [shape: bf16[50,50], index: 1, kind: input, shape index: {}]
  %s2 = inlined_call_operand.vmem [shape: f32[1,50], index: 2, kind: input, shape index: {}]
  %s3 = inlined_call_operand.hbm [shape: bf16[9,50,640], index: 3, kind: input, shape index: {}]
  %s4 = inlined_call_operand.vmem [shape: f32[1,640], index: 4, kind: input, shape index: {}]
  %s5 = inlined_call_operand.hbm [shape: bf16[640,128], index: 5, kind: input, shape index: {}]
  %s6 = inlined_call_operand.vmem [shape: f32[1,128], index: 6, kind: input, shape index: {}]
  %s7 = inlined_call_operand.hbm [shape: bf16[128,128], index: 7, kind: input, shape index: {}]
  %s8 = inlined_call_operand.vmem [shape: f32[1,128], index: 8, kind: input, shape index: {}]
  %s9 = inlined_call_operand.hbm [shape: f32[16,128], index: 9, kind: output, shape index: {}]
  %s10 = sld [smem:[#allocation0]]
  $region89: #{tpu_custom_call.1} parent=0
    _
  %s12 = ssub.s32 1, %s10
  %s13 = scalar_select 0, %s12, %s10
  $region1: #{tpu_custom_call.1} parent=0
    #allocation2 [shape = 'u8[184320]{0}', space=vmem, size = 0x2d000, scoped, tag = 'input window, operand 0']
    #allocation3 [shape = 's32[2]{0}', space=sflag, size = 0x8, scoped, tag = 'scoped memory for tpu_custom_call.1']
    #allocation4 [shape = 's32[2]{0}', space=sflag, size = 0x8, scoped, tag = 'scoped memory for tpu_custom_call.1']
    #allocation5 [shape = 'u8[14336]{0}', space=vmem, size = 0x3800, scoped, tag = 'input window, operand 1, single buffered']
    #allocation6 [shape = 's32[1]{0}', space=sflag, size = 0x4, scoped, tag = 'scoped memory for tpu_custom_call.1']
    #allocation7 [shape = 'u8[645120]{0}', space=vmem, size = 0x9d800, scoped, tag = 'input window, operand 3, single buffered']
    #allocation8 [shape = 'u8[163840]{0}', space=vmem, size = 0x28000, scoped, tag = 'input window, operand 5, single buffered']
    #allocation9 [shape = 's32[1]{0}', space=sflag, size = 0x4, scoped, tag = 'scoped memory for tpu_custom_call.1']
    #allocation10 [shape = 'u8[32768]{0}', space=vmem, size = 0x8000, scoped, tag = 'input window, operand 7, single buffered']
    #allocation11 [shape = 'u8[8192]{0}', space=vmem, size = 0x2000, scoped, tag = 'output window, operand 0']
    %14 = vsyncpa [#allocation3], 0
    %s15 = scalar_lea.sflag [#allocation3], 1
    %16 = vsyncpa %s15, 0
    %17 = vsyncpa [#allocation6], 0
    %18 = vsyncpa [#allocation9], 0
    %19 = vsyncpa [#allocation4], 0
    %s20 = scalar_lea.sflag [#allocation4], 1
    %21 = vsyncpa %s20, 0
    loop: start=0, step=1, limit=4
    $region2: #{tpu_custom_call.1} parent=1 // loop_pre_header
      _
    $region3: #{tpu_custom_call.1} parent=1 // loop_header
      %s23 = sphi 0, %s27
      %p24 = scmp.ge.s32.totalorder %s23, 4
      %s33 = sphi 0, %s35
      %s36 = sphi 0, %s33
      %s37 = sphi 0, %s36
      %s53 = sphi 0, %s37
      %s57 = sphi 0, %s57
      %s59 = sphi 0, %s57
      %s60 = sphi 0, %s59
      %s74 = sphi 0, %s60
      %s78 = sphi 0, %s78
      %s80 = sphi 0, %s78
      %s81 = sphi 0, %s80
      %s95 = sphi 0, %s81
      %s99 = sphi 0, %s99
      %s101 = sphi 0, %s99
      %s102 = sphi 0, %s101
      %s116 = sphi 0, %s102
      %s120 = sphi 0, %s120
      %s122 = sphi 0, %s120
      %s123 = sphi 0, %s122
      %s137 = sphi 0, %s123
      %s141 = sphi 0, %s141
      %s143 = sphi 0, %s141
      %s144 = sphi 0, %s143
      %s158 = sphi 0, %s144
      %s162 = sphi 0, %s162
      %s164 = sphi 0, %s162
      %s165 = sphi 0, %s164
      %s179 = sphi 0, %s165
      %s183 = sphi 0, %s183
      %s185 = sphi 0, %s183
      %s186 = sphi 0, %s185
      %s200 = sphi 0, %s186
      %s204 = sphi 0, %s204
      %s206 = sphi 0, %s204
      %s207 = sphi 0, %s206
      %s221 = sphi 0, %s207
      %s227 = sphi 0, %s229
      %s230 = sphi 0, %s227
      %s231 = sphi 0, %s230
      %s247 = sphi 0, %s231
    $region4: #{tpu_custom_call.1} parent=1 // loop_header_branch
      %26 = sbr.rel (%p24) target = $region8
    $region5: #{tpu_custom_call.1} parent=1 // loop_body
      %s28 = ssub.s32 %s23, 1
      %s29 = ssub.s32 %s23, 2
      %s30 = sadd.s32 %s23, 1
      %s31 = ssub.s32 %s23, %s30
      %p32 = scmp.eq.s32.totalorder %s31, 0
      %s34 = sadd.s32 %s33, 1
      %s35 = scalar_select %p32, %s33, %s34
      %p38 = pneg %p32
      %p39 = scmp.eq.s32.totalorder %s23, 1
      %p40 = por %p38, %p39
      %p41 = scmp.ne.s32.totalorder %s33, %s36
      %p42 = scmp.eq.s32.totalorder %s23, 0
      %p43 = por %p41, %p42
      %p44 = scmp.ne.s32.totalorder %s33, %s36
      %p45 = scmp.eq.s32.totalorder %s28, 1
      %p46 = por %p44, %p45
      %p47 = scmp.ne.s32.totalorder %s36, %s37
      %p48 = scmp.eq.s32.totalorder %s28, 0
      %p49 = por %p47, %p48
      %p50 = scmp.ne.s32.totalorder %s36, %s37
      %p51 = scmp.eq.s32.totalorder %s29, 1
      %p52 = por %p50, %p51
      %p54 = scmp.ne.s32.totalorder %s37, %s53
      %p55 = scmp.eq.s32.totalorder %s29, 0
      %p56 = por %p54, %p55
      %s58 = sadd.s32 %s57, 1
      %p61 = scmp.eq.s32.totalorder %s23, 1
      %p62 = scmp.ne.s32.totalorder %s57, %s59
      %p63 = scmp.eq.s32.totalorder %s23, 0
      %p64 = por %p62, %p63
      %p65 = scmp.ne.s32.totalorder %s57, %s59
      %p66 = scmp.eq.s32.totalorder %s28, 1
      %p67 = por %p65, %p66
      %p68 = scmp.ne.s32.totalorder %s59, %s60
      %p69 = scmp.eq.s32.totalorder %s28, 0
      %p70 = por %p68, %p69
      %p71 = scmp.ne.s32.totalorder %s59, %s60
      %p72 = scmp.eq.s32.totalorder %s29, 1
      %p73 = por %p71, %p72
      %p75 = scmp.ne.s32.totalorder %s60, %s74
      %p76 = scmp.eq.s32.totalorder %s29, 0
      %p77 = por %p75, %p76
      %s79 = sadd.s32 %s78, 1
      %p82 = scmp.eq.s32.totalorder %s23, 1
      %p83 = scmp.ne.s32.totalorder %s78, %s80
      %p84 = scmp.eq.s32.totalorder %s23, 0
      %p85 = por %p83, %p84
      %p86 = scmp.ne.s32.totalorder %s78, %s80
      %p87 = scmp.eq.s32.totalorder %s28, 1
      %p88 = por %p86, %p87
      %p89 = scmp.ne.s32.totalorder %s80, %s81
      %p90 = scmp.eq.s32.totalorder %s28, 0
      %p91 = por %p89, %p90
      %p92 = scmp.ne.s32.totalorder %s80, %s81
      %p93 = scmp.eq.s32.totalorder %s29, 1
      %p94 = por %p92, %p93
      %p96 = scmp.ne.s32.totalorder %s81, %s95
      %p97 = scmp.eq.s32.totalorder %s29, 0
      %p98 = por %p96, %p97
      %s100 = sadd.s32 %s99, 1
      %p103 = scmp.eq.s32.totalorder %s23, 1
      %p104 = scmp.ne.s32.totalorder %s99, %s101
      %p105 = scmp.eq.s32.totalorder %s23, 0
      %p106 = por %p104, %p105
      %p107 = scmp.ne.s32.totalorder %s99, %s101
      %p108 = scmp.eq.s32.totalorder %s28, 1
      %p109 = por %p107, %p108
      %p110 = scmp.ne.s32.totalorder %s101, %s102
      %p111 = scmp.eq.s32.totalorder %s28, 0
      %p112 = por %p110, %p111
      %p113 = scmp.ne.s32.totalorder %s101, %s102
      %p114 = scmp.eq.s32.totalorder %s29, 1
      %p115 = por %p113, %p114
      %p117 = scmp.ne.s32.totalorder %s102, %s116
      %p118 = scmp.eq.s32.totalorder %s29, 0
      %p119 = por %p117, %p118
      %s121 = sadd.s32 %s120, 1
      %p124 = scmp.eq.s32.totalorder %s23, 1
      %p125 = scmp.ne.s32.totalorder %s120, %s122
      %p126 = scmp.eq.s32.totalorder %s23, 0
      %p127 = por %p125, %p126
      %p128 = scmp.ne.s32.totalorder %s120, %s122
      %p129 = scmp.eq.s32.totalorder %s28, 1
      %p130 = por %p128, %p129
      %p131 = scmp.ne.s32.totalorder %s122, %s123
      %p132 = scmp.eq.s32.totalorder %s28, 0
      %p133 = por %p131, %p132
      %p134 = scmp.ne.s32.totalorder %s122, %s123
      %p135 = scmp.eq.s32.totalorder %s29, 1
      %p136 = por %p134, %p135
      %p138 = scmp.ne.s32.totalorder %s123, %s137
      %p139 = scmp.eq.s32.totalorder %s29, 0
      %p140 = por %p138, %p139
      %s142 = sadd.s32 %s141, 1
      %p145 = scmp.eq.s32.totalorder %s23, 1
      %p146 = scmp.ne.s32.totalorder %s141, %s143
      %p147 = scmp.eq.s32.totalorder %s23, 0
      %p148 = por %p146, %p147
      %p149 = scmp.ne.s32.totalorder %s141, %s143
      %p150 = scmp.eq.s32.totalorder %s28, 1
      %p151 = por %p149, %p150
      %p152 = scmp.ne.s32.totalorder %s143, %s144
      %p153 = scmp.eq.s32.totalorder %s28, 0
      %p154 = por %p152, %p153
      %p155 = scmp.ne.s32.totalorder %s143, %s144
      %p156 = scmp.eq.s32.totalorder %s29, 1
      %p157 = por %p155, %p156
      %p159 = scmp.ne.s32.totalorder %s144, %s158
      %p160 = scmp.eq.s32.totalorder %s29, 0
      %p161 = por %p159, %p160
      %s163 = sadd.s32 %s162, 1
      %p166 = scmp.eq.s32.totalorder %s23, 1
      %p167 = scmp.ne.s32.totalorder %s162, %s164
      %p168 = scmp.eq.s32.totalorder %s23, 0
      %p169 = por %p167, %p168
      %p170 = scmp.ne.s32.totalorder %s162, %s164
      %p171 = scmp.eq.s32.totalorder %s28, 1
      %p172 = por %p170, %p171
      %p173 = scmp.ne.s32.totalorder %s164, %s165
      %p174 = scmp.eq.s32.totalorder %s28, 0
      %p175 = por %p173, %p174
      %p176 = scmp.ne.s32.totalorder %s164, %s165
      %p177 = scmp.eq.s32.totalorder %s29, 1
      %p178 = por %p176, %p177
      %p180 = scmp.ne.s32.totalorder %s165, %s179
      %p181 = scmp.eq.s32.totalorder %s29, 0
      %p182 = por %p180, %p181
      %s184 = sadd.s32 %s183, 1
      %p187 = scmp.eq.s32.totalorder %s23, 1
      %p188 = scmp.ne.s32.totalorder %s183, %s185
      %p189 = scmp.eq.s32.totalorder %s23, 0
      %p190 = por %p188, %p189
      %p191 = scmp.ne.s32.totalorder %s183, %s185
      %p192 = scmp.eq.s32.totalorder %s28, 1
      %p193 = por %p191, %p192
      %p194 = scmp.ne.s32.totalorder %s185, %s186
      %p195 = scmp.eq.s32.totalorder %s28, 0
      %p196 = por %p194, %p195
      %p197 = scmp.ne.s32.totalorder %s185, %s186
      %p198 = scmp.eq.s32.totalorder %s29, 1
      %p199 = por %p197, %p198
      %p201 = scmp.ne.s32.totalorder %s186, %s200
      %p202 = scmp.eq.s32.totalorder %s29, 0
      %p203 = por %p201, %p202
      %s205 = sadd.s32 %s204, 1
      %p208 = scmp.eq.s32.totalorder %s23, 1
      %p209 = scmp.ne.s32.totalorder %s204, %s206
      %p210 = scmp.eq.s32.totalorder %s23, 0
      %p211 = por %p209, %p210
      %p212 = scmp.ne.s32.totalorder %s204, %s206
      %p213 = scmp.eq.s32.totalorder %s28, 1
      %p214 = por %p212, %p213
      %p215 = scmp.ne.s32.totalorder %s206, %s207
      %p216 = scmp.eq.s32.totalorder %s28, 0
      %p217 = por %p215, %p216
      %p218 = scmp.ne.s32.totalorder %s206, %s207
      %p219 = scmp.eq.s32.totalorder %s29, 1
      %p220 = por %p218, %p219
      %p222 = scmp.ne.s32.totalorder %s207, %s221
      %p223 = scmp.eq.s32.totalorder %s29, 0
      %p224 = por %p222, %p223
      %s225 = ssub.s32 %s23, %s30
      %p226 = scmp.eq.s32.totalorder %s225, 0
      %s228 = sadd.s32 %s227, 1
      %s229 = scalar_select %p226, %s227, %s228
      %p232 = pneg %p226
      %p233 = scmp.eq.s32.totalorder %s23, 1
      %p234 = por %p232, %p233
      %p235 = scmp.ne.s32.totalorder %s227, %s230
      %p236 = scmp.eq.s32.totalorder %s23, 0
      %p237 = por %p235, %p236
      %p238 = scmp.ne.s32.totalorder %s227, %s230
      %p239 = scmp.eq.s32.totalorder %s28, 1
      %p240 = por %p238, %p239
      %p241 = scmp.ne.s32.totalorder %s230, %s231
      %p242 = scmp.eq.s32.totalorder %s28, 0
      %p243 = por %p241, %p242
      %p244 = scmp.ne.s32.totalorder %s230, %s231
      %p245 = scmp.eq.s32.totalorder %s29, 1
      %p246 = por %p244, %p245
      %p248 = scmp.ne.s32.totalorder %s231, %s247
      %p249 = scmp.eq.s32.totalorder %s29, 0
      %p250 = por %p248, %p249
      %p251 = scmp.le.s32.totalorder 1, %s23
      %p252 = scmp.lt.s32.totalorder %s23, 3
      %p253 = pnand %p251, %p252
      %p254 = pneg %p253
      // Predicated region
      $region9: #{tpu_custom_call.1} parent=5 // pred_check
        _
      $region10: #{tpu_custom_call.1} parent=5 // pred_check_branch
        %256 = sbr.rel (%p253) target = $region12
      $region11: #{tpu_custom_call.1} parent=5 // pred_region
        %s257 = ssub.s32 %s23, 1
        // Predicated region
        $region13: #{tpu_custom_call.1} parent=11 // pred_check
          %p258 = pneg %p70
        $region14: #{tpu_custom_call.1} parent=11 // pred_check_branch
          %260 = sbr.rel (%p258) target = $region16
        $region15: #{tpu_custom_call.1} parent=11 // pred_region
          %s262 = ssub.s32 448, 448
          %263 = vsyncadd [#allocation6], %s262
          %s264 = sshll.u32 [#allocation5], 4
          %s265 = int_to_ptr.vmem [resolvable:$true] %s264
          %270 = dma.hbm_to_vmem [thread:$0]  %s1, 448, %s265, [#allocation6], 64, 64, 4
        $region16: #{tpu_custom_call.1} parent=11 // pred_fallthru
          _
        // Predicated region
        $region17: #{tpu_custom_call.1} parent=11 // pred_check
          %p271 = pneg %p91
        $region18: #{tpu_custom_call.1} parent=11 // pred_check_branch
          %273 = sbr.rel (%p271) target = $region20
        $region19: #{tpu_custom_call.1} parent=11 // pred_region
          _
        $region20: #{tpu_custom_call.1} parent=11 // pred_fallthru
          _
        // Predicated region
        $region21: #{tpu_custom_call.1} parent=11 // pred_check
          %p274 = pneg %p112
        $region22: #{tpu_custom_call.1} parent=11 // pred_check_branch
          %276 = sbr.rel (%p274) target = $region24
        $region23: #{tpu_custom_call.1} parent=11 // pred_region
          %s278 = ssub.s32 20160, 20160
          %279 = vsyncadd [#allocation6], %s278
          %s280 = sshll.u32 [#allocation7], 4
          %s281 = int_to_ptr.vmem [resolvable:$true] %s280
          %286 = dma.hbm_to_vmem [thread:$0]  %s3, 20160, %s281, [#allocation6], 320, 320, 20
        $region24: #{tpu_custom_call.1} parent=11 // pred_fallthru
          _
        // Predicated region
        $region25: #{tpu_custom_call.1} parent=11 // pred_check
          %p287 = pneg %p133
        $region26: #{tpu_custom_call.1} parent=11 // pred_check_branch
          %289 = sbr.rel (%p287) target = $region28
        $region27: #{tpu_custom_call.1} parent=11 // pred_region
          _
        $region28: #{tpu_custom_call.1} parent=11 // pred_fallthru
          _
        // Predicated region
        $region29: #{tpu_custom_call.1} parent=11 // pred_check
          %p290 = pneg %p154
        $region30: #{tpu_custom_call.1} parent=11 // pred_check_branch
          %292 = sbr.rel (%p290) target = $region32
        $region31: #{tpu_custom_call.1} parent=11 // pred_region
          %s294 = ssub.s32 5120, 5120
          %295 = vsyncadd [#allocation9], %s294
          %s296 = sshll.u32 [#allocation8], 4
          %s297 = int_to_ptr.vmem [resolvable:$true] %s296
          %302 = dma.hbm_to_vmem [thread:$0]  %s5, 5120, %s297, [#allocation9], 64, 64, 4
        $region32: #{tpu_custom_call.1} parent=11 // pred_fallthru
          _
        // Predicated region
        $region33: #{tpu_custom_call.1} parent=11 // pred_check
          %p303 = pneg %p175
        $region34: #{tpu_custom_call.1} parent=11 // pred_check_branch
          %305 = sbr.rel (%p303) target = $region36
        $region35: #{tpu_custom_call.1} parent=11 // pred_region
          _
        $region36: #{tpu_custom_call.1} parent=11 // pred_fallthru
          _
        // Predicated region
        $region37: #{tpu_custom_call.1} parent=11 // pred_check
          %p306 = pneg %p196
        $region38: #{tpu_custom_call.1} parent=11 // pred_check_branch
          %308 = sbr.rel (%p306) target = $region40
        $region39: #{tpu_custom_call.1} parent=11 // pred_region
          %s310 = ssub.s32 1024, 1024
          %311 = vsyncadd [#allocation9], %s310
          %s312 = sshll.u32 [#allocation10], 4
          %s313 = int_to_ptr.vmem [resolvable:$true] %s312
          %318 = dma.hbm_to_vmem [thread:$0]  %s7, 1024, %s313, [#allocation9], 64, 64, 4
        $region40: #{tpu_custom_call.1} parent=11 // pred_fallthru
          _
        // Predicated region
        $region41: #{tpu_custom_call.1} parent=11 // pred_check
          %p319 = pneg %p217
        $region42: #{tpu_custom_call.1} parent=11 // pred_check_branch
          %321 = sbr.rel (%p319) target = $region44
        $region43: #{tpu_custom_call.1} parent=11 // pred_region
          _
        $region44: #{tpu_custom_call.1} parent=11 // pred_fallthru
          _
      $region12: #{tpu_custom_call.1} parent=5 // pred_fallthru
        _
      %p322 = scmp.lt.s32.totalorder %s23, 2
      // Predicated region
      $region45: #{tpu_custom_call.1} parent=5 // pred_check
        %p323 = pneg %p322
      $region46: #{tpu_custom_call.1} parent=5 // pred_check_branch
        %325 = sbr.rel (%p323) target = $region48
      $region47: #{tpu_custom_call.1} parent=5 // pred_region
        // Predicated region
        $region49: #{tpu_custom_call.1} parent=47 // pred_check
          %p326 = pneg %p43
        $region50: #{tpu_custom_call.1} parent=47 // pred_check_branch
          %328 = sbr.rel (%p326) target = $region52
        $region51: #{tpu_custom_call.1} parent=47 // pred_region
          %s329 = sand.u32 %s33, 1
          %s330 = scalar_lea.sflag [#allocation3], %s329
          %s331 = sand.u32 %s33, 1
          %s332 = smul.addr %s331, 180
          %s333 = scalar_lea.vmem [#allocation2], %s332
          %s335 = ssub.s32 2880, 2880
          %336 = vsyncadd %s330, %s335
          %s337 = smul.addr %s23, 64
          %s338 = scalar_lea.hbm %s0, %s337
          %s339 = sshll.u32 %s333, 4
          %s340 = int_to_ptr.vmem [resolvable:$true] %s339
          %345 = dma.hbm_to_vmem [thread:$0]  %s338, 2880, %s340, %s330, 128, 64, 4
        $region52: #{tpu_custom_call.1} parent=47 // pred_fallthru
          _
      $region48: #{tpu_custom_call.1} parent=5 // pred_fallthru
        _
      %p346 = scmp.le.s32.totalorder 1, %s23
      %p347 = scmp.lt.s32.totalorder %s23, 3
      %p348 = pnand %p346, %p347
      %p349 = pneg %p348
      // Predicated region
      $region53: #{tpu_custom_call.1} parent=5 // pred_check
        _
      $region54: #{tpu_custom_call.1} parent=5 // pred_check_branch
        %351 = sbr.rel (%p348) target = $region56
      $region55: #{tpu_custom_call.1} parent=5 // pred_region
        %s352 = ssub.s32 %s23, 1
        %s353 = sand.u32 %s36, 1
        %s354 = scalar_lea.sflag [#allocation3], %s353
        %s355 = sand.u32 %s36, 1
        %s356 = smul.addr %s355, 180
        %s357 = scalar_lea.vmem [#allocation2], %s356
        // Predicated region
        $region57: #{tpu_custom_call.1} parent=55 // pred_check
          %p358 = pneg %p49
        $region58: #{tpu_custom_call.1} parent=55 // pred_check_branch
          %360 = sbr.rel (%p358) target = $region60
        $region59: #{tpu_custom_call.1} parent=55 // pred_region
          %361 = dma.done %s354, 2880
        $region60: #{tpu_custom_call.1} parent=55 // pred_fallthru
          _
        // Predicated region
        $region61: #{tpu_custom_call.1} parent=55 // pred_check
          %p362 = pneg %p70
        $region62: #{tpu_custom_call.1} parent=55 // pred_check_branch
          %364 = sbr.rel (%p362) target = $region64
        $region63: #{tpu_custom_call.1} parent=55 // pred_region
          %365 = dma.done [#allocation6], 448
        $region64: #{tpu_custom_call.1} parent=55 // pred_fallthru
          _
        // Predicated region
        $region65: #{tpu_custom_call.1} parent=55 // pred_check
          %p366 = pneg %p112
        $region66: #{tpu_custom_call.1} parent=55 // pred_check_branch
          %368 = sbr.rel (%p366) target = $region68
        $region67: #{tpu_custom_call.1} parent=55 // pred_region
          %369 = dma.done [#allocation6], 20160
        $region68: #{tpu_custom_call.1} parent=55 // pred_fallthru
          _
        // Predicated region
        $region69: #{tpu_custom_call.1} parent=55 // pred_check
          %p370 = pneg %p154
        $region70: #{tpu_custom_call.1} parent=55 // pred_check_branch
          %372 = sbr.rel (%p370) target = $region72
        $region71: #{tpu_custom_call.1} parent=55 // pred_region
          %373 = dma.done [#allocation9], 5120
        $region72: #{tpu_custom_call.1} parent=55 // pred_fallthru
          _
        // Predicated region
        $region73: #{tpu_custom_call.1} parent=55 // pred_check
          %p374 = pneg %p196
        $region74: #{tpu_custom_call.1} parent=55 // pred_check_branch
          %376 = sbr.rel (%p374) target = $region76
        $region75: #{tpu_custom_call.1} parent=55 // pred_region
          %377 = dma.done [#allocation9], 1024
        $region76: #{tpu_custom_call.1} parent=55 // pred_fallthru
          _
        %s378 = sand.u32 %s36, 1
        %s379 = scalar_lea.sflag [#allocation3], %s378
        %s380 = sand.u32 %s36, 1
        %s381 = smul.addr %s380, 180
        %s382 = scalar_lea.vmem [#allocation2], %s381
        %p383 = pneg %p49
        %p384 = pneg %p46
        %p385 = pneg %p70
        %p386 = pneg %p67
        %p387 = pneg %p91
        %p388 = pneg %p88
        %p389 = pneg %p112
        %p390 = pneg %p109
        %p391 = pneg %p133
        %p392 = pneg %p130
        %p393 = pneg %p154
        %p394 = pneg %p151
        %p395 = pneg %p175
        %p396 = pneg %p172
        %p397 = pneg %p196
        %p398 = pneg %p193
        %p399 = pneg %p217
        %p400 = pneg %p214
        %p401 = pneg %p243
        %p402 = pneg %p240
        %s403 = sand.u32 %s230, 1
        %s404 = scalar_lea.sflag [#allocation4], %s403
        %s405 = sand.u32 %s230, 1
        %s406 = smul.addr %s405, 8
        %s407 = scalar_lea.vmem [#allocation11], %s406
        %v409 = vld [vmem:[#allocation5] sm:$0xf]
        %v410 = vld [vmem:[#allocation5 + $0x4] sm:$0xf]
        %v411 = vld [vmem:[#allocation5 + $0x8] sm:$0xf]
        %v412 = vld [vmem:[#allocation5 + $0xc] sm:$0xf]
        %v413 = vld [vmem:[#allocation5 + $0x10] sm:$0xf]
        %v414 = vld [vmem:[#allocation5 + $0x14] sm:$0xf]
        %v415 = vld [vmem:[#allocation5 + $0x18] sm:$0x1]
        %v416 = vld [vmem:[%s2] sm:$0x1]
        %v417 = vld [vmem:[%s357] sm:$0xf]
        %v419 = vlaneseq
        %v420 = vshrl.u32 %v419, 7
        %v421 = vsub.s32 0, %v420
        %v422 = vrot.slane %v416, %v421
        %v431 = vunpack.c.l.b16 %v409
        %v432 = vunpack.c.l.b16 %v410
        %v433 = vunpack.c.l.b16 %v411
        %v434 = vunpack.c.l.b16 %v412
        %v435 = vunpack.c.l.b16 %v413
        %v436 = vunpack.c.l.b16 %v414
        %v437 = vunpack.c.l.b16 %v415
        %v438 = vpack.c.b16 %v432, %v431
        %v439 = vpack.c.b16 %v434, %v433
        %v440 = vpack.c.b16 %v436, %v435
        %v441 = vpack.c.b16 %v437, %v437
        %vm445 = vcmask 408576
        %v447 = vsel %vm445, %v417, 0
        %vm449 = vcmask 1040384
        %v451 = vsel %vm449, %v441, 0
        %453 = vmatprep.subr.bf16.mxu0 0
        %454 = vmatpush1.bf16.msra.mxu0 0
        %455 = vmatprep.subr.bf16.mxu0 0
        %456 = vmatpush1.bf16.msra.mxu0 0
        %457 = vmatprep.subr.bf16.mxu0 0
        %458 = vmatpush1.bf16.msra.mxu0 0
        %459 = vmatprep.subr.bf16.mxu0 0
        %460 = vmatpush1.bf16.msra.mxu0 0
        %461 = vmatprep.subr.bf16.mxu0 0
        %462 = vmatpush1.bf16.msra.mxu0 %v451
        %463 = vmatprep.subr.bf16.mxu0 0
        %464 = vmatpush1.bf16.msra.mxu0 %v440
        %465 = vmatprep.subr.bf16.mxu0 0
        %466 = vmatpush1.bf16.msra.mxu0 %v439
        %467 = vmatprep.subr.bf16.mxu0 0
        %468 = vmatpush1.bf16.msra.mxu0 %v438
        %469 = vmatprep.subr.bf16.mxu0 0
        %470 = vmatpush2.bf16.msra.mxu0 0
        %471 = vmatprep.subr.bf16.mxu0 0
        %472 = vmatpush2.bf16.msra.mxu0 0
        %473 = vmatprep.subr.bf16.mxu0 0
        %474 = vmatpush2.bf16.msra.mxu0 0
        %475 = vmatprep.subr.bf16.mxu0 0
        %476 = vmatpush2.bf16.msra.mxu0 0
        %477 = vmatprep.subr.bf16.mxu0 0
        %478 = vmatpush2.bf16.msra.mxu0 0
        %479 = vmatprep.subr.bf16.mxu0 0
        %480 = vmatpush2.bf16.msra.mxu0 0
        %481 = vmatprep.subr.bf16.mxu0 0
        %482 = vmatpush2.bf16.msra.mxu0 0
        %483 = vmatprep.subr.bf16.mxu0 0
        %484 = vmatpush2.bf16.msra.mxu0 0
        %485 = vmatprep.mubr.bf16.mxu0 0
        %486 = vmatmul.mubr.bf16.gmra.mxu0 %v447
        %v487 = vpop.f32.mrf.mxu0
        %v488 = vadd.f32 %v422, %v487
        %v489 = vpop.f32.mrf.mxu0
        %v490 = vpop.f32.mrf.mxu0
        %v491 = vpop.f32.mrf.mxu0
        %492 = vdwg.mxu0
        %v493 = vmax.f32 %v488, 0.0
        %s494 = scalar_lea.vmem %s357, 4 [#allocation2]
        %v495 = vld [vmem:[%s494] sm:$0xf]
        %v497 = vsel %vm445, %v495, 0
        %499 = vmatprep.subr.bf16.mxu0 0
        %500 = vmatpush1.bf16.msra.mxu0 0
        %501 = vmatprep.subr.bf16.mxu0 0
        %502 = vmatpush1.bf16.msra.mxu0 0
        %503 = vmatprep.subr.bf16.mxu0 0
        %504 = vmatpush1.bf16.msra.mxu0 0
        %505 = vmatprep.subr.bf16.mxu0 0
        %506 = vmatpush1.bf16.msra.mxu0 0
        %507 = vmatprep.subr.bf16.mxu0 0
        %508 = vmatpush1.bf16.msra.mxu0 %v451
        %509 = vmatprep.subr.bf16.mxu0 0
        %510 = vmatpush1.bf16.msra.mxu0 %v440
        %511 = vmatprep.subr.bf16.mxu0 0
        %512 = vmatpush1.bf16.msra.mxu0 %v439
        %513 = vmatprep.subr.bf16.mxu0 0
        %514 = vmatpush1.bf16.msra.mxu0 %v438
        %515 = vmatprep.subr.bf16.mxu0 0
        %516 = vmatpush2.bf16.msra.mxu0 0
        %517 = vmatprep.subr.bf16.mxu0 0
        %518 = vmatpush2.bf16.msra.mxu0 0
        %519 = vmatprep.subr.bf16.mxu0 0
        %520 = vmatpush2.bf16.msra.mxu0 0
        %521 = vmatprep.subr.bf16.mxu0 0
        %522 = vmatpush2.bf16.msra.mxu0 0
        %523 = vmatprep.subr.bf16.mxu0 0
        %524 = vmatpush2.bf16.msra.mxu0 0
        %525 = vmatprep.subr.bf16.mxu0 0
        %526 = vmatpush2.bf16.msra.mxu0 0
        %527 = vmatprep.subr.bf16.mxu0 0
        %528 = vmatpush2.bf16.msra.mxu0 0
        %529 = vmatprep.subr.bf16.mxu0 0
        %530 = vmatpush2.bf16.msra.mxu0 0
        %531 = vmatprep.mubr.bf16.mxu0 0
        %532 = vmatmul.mubr.bf16.gmra.mxu0 %v497
        %v533 = vpop.f32.mrf.mxu0
        %v534 = vadd.f32 %v422, %v533
        %v535 = vpop.f32.mrf.mxu0
        %v536 = vpop.f32.mrf.mxu0
        %v537 = vpop.f32.mrf.mxu0
        %538 = vdwg.mxu0
        %v539 = vmax.f32 %v534, 0.0
        %v540 = vmax.f32 %v493, %v539
        %s541 = scalar_lea.vmem %s357, 8 [#allocation2]
        %v542 = vld [vmem:[%s541] sm:$0xf]
        %v544 = vsel %vm445, %v542, 0
        %546 = vmatprep.subr.bf16.mxu0 0
        %547 = vmatpush1.bf16.msra.mxu0 0
        %548 = vmatprep.subr.bf16.mxu0 0
        %549 = vmatpush1.bf16.msra.mxu0 0
        %550 = vmatprep.subr.bf16.mxu0 0
        %551 = vmatpush1.bf16.msra.mxu0 0
        %552 = vmatprep.subr.bf16.mxu0 0
        %553 = vmatpush1.bf16.msra.mxu0 0
        %554 = vmatprep.subr.bf16.mxu0 0
        %555 = vmatpush1.bf16.msra.mxu0 %v451
        %556 = vmatprep.subr.bf16.mxu0 0
        %557 = vmatpush1.bf16.msra.mxu0 %v440
        %558 = vmatprep.subr.bf16.mxu0 0
        %559 = vmatpush1.bf16.msra.mxu0 %v439
        %560 = vmatprep.subr.bf16.mxu0 0
        %561 = vmatpush1.bf16.msra.mxu0 %v438
        %562 = vmatprep.subr.bf16.mxu0 0
        %563 = vmatpush2.bf16.msra.mxu0 0
        %564 = vmatprep.subr.bf16.mxu0 0
        %565 = vmatpush2.bf16.msra.mxu0 0
        %566 = vmatprep.subr.bf16.mxu0 0
        %567 = vmatpush2.bf16.msra.mxu0 0
        %568 = vmatprep.subr.bf16.mxu0 0
        %569 = vmatpush2.bf16.msra.mxu0 0
        %570 = vmatprep.subr.bf16.mxu0 0
        %571 = vmatpush2.bf16.msra.mxu0 0
        %572 = vmatprep.subr.bf16.mxu0 0
        %573 = vmatpush2.bf16.msra.mxu0 0
        %574 = vmatprep.subr.bf16.mxu0 0
        %575 = vmatpush2.bf16.msra.mxu0 0
        %576 = vmatprep.subr.bf16.mxu0 0
        %577 = vmatpush2.bf16.msra.mxu0 0
        %578 = vmatprep.mubr.bf16.mxu0 0
        %579 = vmatmul.mubr.bf16.gmra.mxu0 %v544
        %v580 = vpop.f32.mrf.mxu0
        %v581 = vadd.f32 %v422, %v580
        %v582 = vpop.f32.mrf.mxu0
        %v583 = vpop.f32.mrf.mxu0
        %v584 = vpop.f32.mrf.mxu0
        %585 = vdwg.mxu0
        %v586 = vmax.f32 %v581, 0.0
        %v587 = vmax.f32 %v540, %v586
        %s588 = scalar_lea.vmem %s357, 12 [#allocation2]
        %v589 = vld [vmem:[%s588] sm:$0xf]
        %v591 = vsel %vm445, %v589, 0
        %593 = vmatprep.subr.bf16.mxu0 0
        %594 = vmatpush1.bf16.msra.mxu0 0
        %595 = vmatprep.subr.bf16.mxu0 0
        %596 = vmatpush1.bf16.msra.mxu0 0
        %597 = vmatprep.subr.bf16.mxu0 0
        %598 = vmatpush1.bf16.msra.mxu0 0
        %599 = vmatprep.subr.bf16.mxu0 0
        %600 = vmatpush1.bf16.msra.mxu0 0
        %601 = vmatprep.subr.bf16.mxu0 0
        %602 = vmatpush1.bf16.msra.mxu0 %v451
        %603 = vmatprep.subr.bf16.mxu0 0
        %604 = vmatpush1.bf16.msra.mxu0 %v440
        %605 = vmatprep.subr.bf16.mxu0 0
        %606 = vmatpush1.bf16.msra.mxu0 %v439
        %607 = vmatprep.subr.bf16.mxu0 0
        %608 = vmatpush1.bf16.msra.mxu0 %v438
        %609 = vmatprep.subr.bf16.mxu0 0
        %610 = vmatpush2.bf16.msra.mxu0 0
        %611 = vmatprep.subr.bf16.mxu0 0
        %612 = vmatpush2.bf16.msra.mxu0 0
        %613 = vmatprep.subr.bf16.mxu0 0
        %614 = vmatpush2.bf16.msra.mxu0 0
        %615 = vmatprep.subr.bf16.mxu0 0
        %616 = vmatpush2.bf16.msra.mxu0 0
        %617 = vmatprep.subr.bf16.mxu0 0
        %618 = vmatpush2.bf16.msra.mxu0 0
        %619 = vmatprep.subr.bf16.mxu0 0
        %620 = vmatpush2.bf16.msra.mxu0 0
        %621 = vmatprep.subr.bf16.mxu0 0
        %622 = vmatpush2.bf16.msra.mxu0 0
        %623 = vmatprep.subr.bf16.mxu0 0
        %624 = vmatpush2.bf16.msra.mxu0 0
        %625 = vmatprep.mubr.bf16.mxu0 0
        %626 = vmatmul.mubr.bf16.gmra.mxu0 %v591
        %v627 = vpop.f32.mrf.mxu0
        %v628 = vadd.f32 %v422, %v627
        %v629 = vpop.f32.mrf.mxu0
        %v630 = vpop.f32.mrf.mxu0
        %v631 = vpop.f32.mrf.mxu0
        %632 = vdwg.mxu0
        %v633 = vmax.f32 %v628, 0.0
        %v634 = vmax.f32 %v587, %v633
        %s635 = scalar_lea.vmem %s357, 16 [#allocation2]
        %v636 = vld [vmem:[%s635] sm:$0xf]
        %v638 = vsel %vm445, %v636, 0
        %640 = vmatprep.subr.bf16.mxu0 0
        %641 = vmatpush1.bf16.msra.mxu0 0
        %642 = vmatprep.subr.bf16.mxu0 0
        %643 = vmatpush1.bf16.msra.mxu0 0
        %644 = vmatprep.subr.bf16.mxu0 0
        %645 = vmatpush1.bf16.msra.mxu0 0
        %646 = vmatprep.subr.bf16.mxu0 0
        %647 = vmatpush1.bf16.msra.mxu0 0
        %648 = vmatprep.subr.bf16.mxu0 0
        %649 = vmatpush1.bf16.msra.mxu0 %v451
        %650 = vmatprep.subr.bf16.mxu0 0
        %651 = vmatpush1.bf16.msra.mxu0 %v440
        %652 = vmatprep.subr.bf16.mxu0 0
        %653 = vmatpush1.bf16.msra.mxu0 %v439
        %654 = vmatprep.subr.bf16.mxu0 0
        %655 = vmatpush1.bf16.msra.mxu0 %v438
        %656 = vmatprep.subr.bf16.mxu0 0
        %657 = vmatpush2.bf16.msra.mxu0 0
        %658 = vmatprep.subr.bf16.mxu0 0
        %659 = vmatpush2.bf16.msra.mxu0 0
        %660 = vmatprep.subr.bf16.mxu0 0
        %661 = vmatpush2.bf16.msra.mxu0 0
        %662 = vmatprep.subr.bf16.mxu0 0
        %663 = vmatpush2.bf16.msra.mxu0 0
        %664 = vmatprep.subr.bf16.mxu0 0
        %665 = vmatpush2.bf16.msra.mxu0 0
        %666 = vmatprep.subr.bf16.mxu0 0
        %667 = vmatpush2.bf16.msra.mxu0 0
        %668 = vmatprep.subr.bf16.mxu0 0
        %669 = vmatpush2.bf16.msra.mxu0 0
        %670 = vmatprep.subr.bf16.mxu0 0
        %671 = vmatpush2.bf16.msra.mxu0 0
        %672 = vmatprep.mubr.bf16.mxu0 0
        %673 = vmatmul.mubr.bf16.gmra.mxu0 %v638
        %v674 = vpop.f32.mrf.mxu0
        %v675 = vadd.f32 %v422, %v674
        %v676 = vpop.f32.mrf.mxu0
        %v677 = vpop.f32.mrf.mxu0
        %v678 = vpop.f32.mrf.mxu0
        %679 = vdwg.mxu0
        %v680 = vmax.f32 %v675, 0.0
        %v681 = vmax.f32 %v634, %v680
        %v682 = vpack.c.bf16 %v681, %v681
        %v683 = vld [vmem:[#allocation7] sm:$0xff]
        %v684 = vld [vmem:[#allocation7 + $0x8] sm:$0xff]
        %v685 = vld [vmem:[#allocation7 + $0x10] sm:$0xf]
        %v686 = vld [vmem:[#allocation7 + $0x14] sm:$0xff]
        %v687 = vld [vmem:[#allocation7 + $0x1c] sm:$0xff]
        %v688 = vld [vmem:[#allocation7 + $0x24] sm:$0xf]
        %v689 = vld [vmem:[#allocation7 + $0x28] sm:$0xff]
        %v690 = vld [vmem:[#allocation7 + $0x30] sm:$0xff]
        %v691 = vld [vmem:[#allocation7 + $0x38] sm:$0xf]
        %v692 = vld [vmem:[#allocation7 + $0x3c] sm:$0xff]
        %v693 = vld [vmem:[#allocation7 + $0x44] sm:$0xff]
        %v694 = vld [vmem:[#allocation7 + $0x4c] sm:$0xf]
        %v695 = vld [vmem:[#allocation7 + $0x50] sm:$0xff]
        %v696 = vld [vmem:[#allocation7 + $0x58] sm:$0xff]
        %v697 = vld [vmem:[#allocation7 + $0x60] sm:$0xf]
        %v698 = vld [vmem:[#allocation7 + $0x64] sm:$0xff]
        %v699 = vld [vmem:[#allocation7 + $0x6c] sm:$0xff]
        %v700 = vld [vmem:[#allocation7 + $0x74] sm:$0xf]
        %v701 = vld [vmem:[#allocation7 + $0x78] sm:$0x11]
        %v702 = vld [vmem:[#allocation7 + $0x80] sm:$0x11]
        %v703 = vld [vmem:[#allocation7 + $0x88] sm:$0x1]
        %s704 = scalar_lea.vmem %s357, 20 [#allocation2]
        %v705 = vld [vmem:[%s704] sm:$0xf]
        %v707 = vsel %vm445, %v705, 0
        %709 = vmatprep.subr.bf16.mxu0 0
        %710 = vmatpush1.bf16.msra.mxu0 0
        %711 = vmatprep.subr.bf16.mxu0 0
        %712 = vmatpush1.bf16.msra.mxu0 0
        %713 = vmatprep.subr.bf16.mxu0 0
        %714 = vmatpush1.bf16.msra.mxu0 0
        %715 = vmatprep.subr.bf16.mxu0 0
        %716 = vmatpush1.bf16.msra.mxu0 0
        %717 = vmatprep.subr.bf16.mxu0 0
        %718 = vmatpush1.bf16.msra.mxu0 %v451
        %719 = vmatprep.subr.bf16.mxu0 0
        %720 = vmatpush1.bf16.msra.mxu0 %v440
        %721 = vmatprep.subr.bf16.mxu0 0
        %722 = vmatpush1.bf16.msra.mxu0 %v439
        %723 = vmatprep.subr.bf16.mxu0 0
        %724 = vmatpush1.bf16.msra.mxu0 %v438
        %725 = vmatprep.subr.bf16.mxu0 0
        %726 = vmatpush2.bf16.msra.mxu0 0
        %727 = vmatprep.subr.bf16.mxu0 0
        %728 = vmatpush2.bf16.msra.mxu0 0
        %729 = vmatprep.subr.bf16.mxu0 0
        %730 = vmatpush2.bf16.msra.mxu0 0
        %731 = vmatprep.subr.bf16.mxu0 0
        %732 = vmatpush2.bf16.msra.mxu0 0
        %733 = vmatprep.subr.bf16.mxu0 0
        %734 = vmatpush2.bf16.msra.mxu0 0
        %735 = vmatprep.subr.bf16.mxu0 0
        %736 = vmatpush2.bf16.msra.mxu0 0
        %737 = vmatprep.subr.bf16.mxu0 0
        %738 = vmatpush2.bf16.msra.mxu0 0
        %739 = vmatprep.subr.bf16.mxu0 0
        %740 = vmatpush2.bf16.msra.mxu0 0
        %741 = vmatprep.mubr.bf16.mxu0 0
        %742 = vmatmul.mubr.bf16.gmra.mxu0 %v707
        %v743 = vpop.f32.mrf.mxu0
        %v744 = vadd.f32 %v422, %v743
        %v745 = vpop.f32.mrf.mxu0
        %v746 = vpop.f32.mrf.mxu0
        %v747 = vpop.f32.mrf.mxu0
        %748 = vdwg.mxu0
        %v749 = vmax.f32 %v744, 0.0
        %s750 = scalar_lea.vmem %s357, 24 [#allocation2]
        %v751 = vld [vmem:[%s750] sm:$0xf]
        %v753 = vsel %vm445, %v751, 0
        %755 = vmatprep.subr.bf16.mxu0 0
        %756 = vmatpush1.bf16.msra.mxu0 0
        %757 = vmatprep.subr.bf16.mxu0 0
        %758 = vmatpush1.bf16.msra.mxu0 0
        %759 = vmatprep.subr.bf16.mxu0 0
        %760 = vmatpush1.bf16.msra.mxu0 0
        %761 = vmatprep.subr.bf16.mxu0 0
        %762 = vmatpush1.bf16.msra.mxu0 0
        %763 = vmatprep.subr.bf16.mxu0 0
        %764 = vmatpush1.bf16.msra.mxu0 %v451
        %765 = vmatprep.subr.bf16.mxu0 0
        %766 = vmatpush1.bf16.msra.mxu0 %v440
        %767 = vmatprep.subr.bf16.mxu0 0
        %768 = vmatpush1.bf16.msra.mxu0 %v439
        %769 = vmatprep.subr.bf16.mxu0 0
        %770 = vmatpush1.bf16.msra.mxu0 %v438
        %771 = vmatprep.subr.bf16.mxu0 0
        %772 = vmatpush2.bf16.msra.mxu0 0
        %773 = vmatprep.subr.bf16.mxu0 0
        %774 = vmatpush2.bf16.msra.mxu0 0
        %775 = vmatprep.subr.bf16.mxu0 0
        %776 = vmatpush2.bf16.msra.mxu0 0
        %777 = vmatprep.subr.bf16.mxu0 0
        %778 = vmatpush2.bf16.msra.mxu0 0
        %779 = vmatprep.subr.bf16.mxu0 0
        %780 = vmatpush2.bf16.msra.mxu0 0
        %781 = vmatprep.subr.bf16.mxu0 0
        %782 = vmatpush2.bf16.msra.mxu0 0
        %783 = vmatprep.subr.bf16.mxu0 0
        %784 = vmatpush2.bf16.msra.mxu0 0
        %785 = vmatprep.subr.bf16.mxu0 0
        %786 = vmatpush2.bf16.msra.mxu0 0
        %787 = vmatprep.mubr.bf16.mxu0 0
        %788 = vmatmul.mubr.bf16.gmra.mxu0 %v753
        %v789 = vpop.f32.mrf.mxu0
        %v790 = vadd.f32 %v422, %v789
        %v791 = vpop.f32.mrf.mxu0
        %v792 = vpop.f32.mrf.mxu0
        %v793 = vpop.f32.mrf.mxu0
        %794 = vdwg.mxu0
        %v795 = vmax.f32 %v790, 0.0
        %v796 = vmax.f32 %v749, %v795
        %s797 = scalar_lea.vmem %s357, 28 [#allocation2]
        %v798 = vld [vmem:[%s797] sm:$0xf]
        %v800 = vsel %vm445, %v798, 0
        %802 = vmatprep.subr.bf16.mxu0 0
        %803 = vmatpush1.bf16.msra.mxu0 0
        %804 = vmatprep.subr.bf16.mxu0 0
        %805 = vmatpush1.bf16.msra.mxu0 0
        %806 = vmatprep.subr.bf16.mxu0 0
        %807 = vmatpush1.bf16.msra.mxu0 0
        %808 = vmatprep.subr.bf16.mxu0 0
        %809 = vmatpush1.bf16.msra.mxu0 0
        %810 = vmatprep.subr.bf16.mxu0 0
        %811 = vmatpush1.bf16.msra.mxu0 %v451
        %812 = vmatprep.subr.bf16.mxu0 0
        %813 = vmatpush1.bf16.msra.mxu0 %v440
        %814 = vmatprep.subr.bf16.mxu0 0
        %815 = vmatpush1.bf16.msra.mxu0 %v439
        %816 = vmatprep.subr.bf16.mxu0 0
        %817 = vmatpush1.bf16.msra.mxu0 %v438
        %818 = vmatprep.subr.bf16.mxu0 0
        %819 = vmatpush2.bf16.msra.mxu0 0
        %820 = vmatprep.subr.bf16.mxu0 0
        %821 = vmatpush2.bf16.msra.mxu0 0
        %822 = vmatprep.subr.bf16.mxu0 0
        %823 = vmatpush2.bf16.msra.mxu0 0
        %824 = vmatprep.subr.bf16.mxu0 0
        %825 = vmatpush2.bf16.msra.mxu0 0
        %826 = vmatprep.subr.bf16.mxu0 0
        %827 = vmatpush2.bf16.msra.mxu0 0
        %828 = vmatprep.subr.bf16.mxu0 0
        %829 = vmatpush2.bf16.msra.mxu0 0
        %830 = vmatprep.subr.bf16.mxu0 0
        %831 = vmatpush2.bf16.msra.mxu0 0
        %832 = vmatprep.subr.bf16.mxu0 0
        %833 = vmatpush2.bf16.msra.mxu0 0
        %834 = vmatprep.mubr.bf16.mxu0 0
        %835 = vmatmul.mubr.bf16.gmra.mxu0 %v800
        %v836 = vpop.f32.mrf.mxu0
        %v837 = vadd.f32 %v422, %v836
        %v838 = vpop.f32.mrf.mxu0
        %v839 = vpop.f32.mrf.mxu0
        %v840 = vpop.f32.mrf.mxu0
        %841 = vdwg.mxu0
        %v842 = vmax.f32 %v837, 0.0
        %v843 = vmax.f32 %v796, %v842
        %s844 = scalar_lea.vmem %s357, 32 [#allocation2]
        %v845 = vld [vmem:[%s844] sm:$0xf]
        %v847 = vsel %vm445, %v845, 0
        %849 = vmatprep.subr.bf16.mxu0 0
        %850 = vmatpush1.bf16.msra.mxu0 0
        %851 = vmatprep.subr.bf16.mxu0 0
        %852 = vmatpush1.bf16.msra.mxu0 0
        %853 = vmatprep.subr.bf16.mxu0 0
        %854 = vmatpush1.bf16.msra.mxu0 0
        %855 = vmatprep.subr.bf16.mxu0 0
        %856 = vmatpush1.bf16.msra.mxu0 0
        %857 = vmatprep.subr.bf16.mxu0 0
        %858 = vmatpush1.bf16.msra.mxu0 %v451
        %859 = vmatprep.subr.bf16.mxu0 0
        %860 = vmatpush1.bf16.msra.mxu0 %v440
        %861 = vmatprep.subr.bf16.mxu0 0
        %862 = vmatpush1.bf16.msra.mxu0 %v439
        %863 = vmatprep.subr.bf16.mxu0 0
        %864 = vmatpush1.bf16.msra.mxu0 %v438
        %865 = vmatprep.subr.bf16.mxu0 0
        %866 = vmatpush2.bf16.msra.mxu0 0
        %867 = vmatprep.subr.bf16.mxu0 0
        %868 = vmatpush2.bf16.msra.mxu0 0
        %869 = vmatprep.subr.bf16.mxu0 0
        %870 = vmatpush2.bf16.msra.mxu0 0
        %871 = vmatprep.subr.bf16.mxu0 0
        %872 = vmatpush2.bf16.msra.mxu0 0
        %873 = vmatprep.subr.bf16.mxu0 0
        %874 = vmatpush2.bf16.msra.mxu0 0
        %875 = vmatprep.subr.bf16.mxu0 0
        %876 = vmatpush2.bf16.msra.mxu0 0
        %877 = vmatprep.subr.bf16.mxu0 0
        %878 = vmatpush2.bf16.msra.mxu0 0
        %879 = vmatprep.subr.bf16.mxu0 0
        %880 = vmatpush2.bf16.msra.mxu0 0
        %881 = vmatprep.mubr.bf16.mxu0 0
        %882 = vmatmul.mubr.bf16.gmra.mxu0 %v847
        %v883 = vpop.f32.mrf.mxu0
        %v884 = vadd.f32 %v422, %v883
        %v885 = vpop.f32.mrf.mxu0
        %v886 = vpop.f32.mrf.mxu0
        %v887 = vpop.f32.mrf.mxu0
        %888 = vdwg.mxu0
        %v889 = vmax.f32 %v884, 0.0
        %v890 = vmax.f32 %v843, %v889
        %s891 = scalar_lea.vmem %s357, 36 [#allocation2]
        %v892 = vld [vmem:[%s891] sm:$0xf]
        %v894 = vsel %vm445, %v892, 0
        %896 = vmatprep.subr.bf16.mxu0 0
        %897 = vmatpush1.bf16.msra.mxu0 0
        %898 = vmatprep.subr.bf16.mxu0 0
        %899 = vmatpush1.bf16.msra.mxu0 0
        %900 = vmatprep.subr.bf16.mxu0 0
        %901 = vmatpush1.bf16.msra.mxu0 0
        %902 = vmatprep.subr.bf16.mxu0 0
        %903 = vmatpush1.bf16.msra.mxu0 0
        %904 = vmatprep.subr.bf16.mxu0 0
        %905 = vmatpush1.bf16.msra.mxu0 %v451
        %906 = vmatprep.subr.bf16.mxu0 0
        %907 = vmatpush1.bf16.msra.mxu0 %v440
        %908 = vmatprep.subr.bf16.mxu0 0
        %909 = vmatpush1.bf16.msra.mxu0 %v439
        %910 = vmatprep.subr.bf16.mxu0 0
        %911 = vmatpush1.bf16.msra.mxu0 %v438
        %912 = vmatprep.subr.bf16.mxu0 0
        %913 = vmatpush2.bf16.msra.mxu0 0
        %914 = vmatprep.subr.bf16.mxu0 0
        %915 = vmatpush2.bf16.msra.mxu0 0
        %916 = vmatprep.subr.bf16.mxu0 0
        %917 = vmatpush2.bf16.msra.mxu0 0
        %918 = vmatprep.subr.bf16.mxu0 0
        %919 = vmatpush2.bf16.msra.mxu0 0
        %920 = vmatprep.subr.bf16.mxu0 0
        %921 = vmatpush2.bf16.msra.mxu0 0
        %922 = vmatprep.subr.bf16.mxu0 0
        %923 = vmatpush2.bf16.msra.mxu0 0
        %924 = vmatprep.subr.bf16.mxu0 0
        %925 = vmatpush2.bf16.msra.mxu0 0
        %926 = vmatprep.subr.bf16.mxu0 0
        %927 = vmatpush2.bf16.msra.mxu0 0
        %928 = vmatprep.mubr.bf16.mxu0 0
        %929 = vmatmul.mubr.bf16.gmra.mxu0 %v894
        %v930 = vpop.f32.mrf.mxu0
        %v931 = vadd.f32 %v422, %v930
        %v932 = vpop.f32.mrf.mxu0
        %v933 = vpop.f32.mrf.mxu0
        %v934 = vpop.f32.mrf.mxu0
        %935 = vdwg.mxu0
        %v936 = vmax.f32 %v931, 0.0
        %v937 = vmax.f32 %v890, %v936
        %v938 = vpack.c.bf16 %v937, %v937
        %s939 = scalar_lea.vmem [#allocation7], 140
        %v940 = vld [vmem:[%s939] sm:$0xff]
        %v941 = vld [vmem:[%s939 + $0x8] sm:$0xff]
        %v942 = vld [vmem:[%s939 + $0x10] sm:$0xf]
        %v943 = vld [vmem:[%s939 + $0x14] sm:$0xff]
        %v944 = vld [vmem:[%s939 + $0x1c] sm:$0xff]
        %v945 = vld [vmem:[%s939 + $0x24] sm:$0xf]
        %v946 = vld [vmem:[%s939 + $0x28] sm:$0xff]
        %v947 = vld [vmem:[%s939 + $0x30] sm:$0xff]
        %v948 = vld [vmem:[%s939 + $0x38] sm:$0xf]
        %v949 = vld [vmem:[%s939 + $0x3c] sm:$0xff]
        %v950 = vld [vmem:[%s939 + $0x44] sm:$0xff]
        %v951 = vld [vmem:[%s939 + $0x4c] sm:$0xf]
        %v952 = vld [vmem:[%s939 + $0x50] sm:$0xff]
        %v953 = vld [vmem:[%s939 + $0x58] sm:$0xff]
        %v954 = vld [vmem:[%s939 + $0x60] sm:$0xf]
        %v955 = vld [vmem:[%s939 + $0x64] sm:$0xff]
        %v956 = vld [vmem:[%s939 + $0x6c] sm:$0xff]
        %v957 = vld [vmem:[%s939 + $0x74] sm:$0xf]
        %v958 = vld [vmem:[%s939 + $0x78] sm:$0x11]
        %v959 = vld [vmem:[%s939 + $0x80] sm:$0x11]
        %v960 = vld [vmem:[%s939 + $0x88] sm:$0x1]
        %v982 = vunpack.c.l.b16 %v940
        %v983 = vunpack.c.h.b16 %v940
        %v984 = vunpack.c.l.b16 %v941
        %v985 = vunpack.c.h.b16 %v941
        %v986 = vunpack.c.l.b16 %v942
        %v987 = vunpack.c.l.b16 %v943
        %v988 = vunpack.c.h.b16 %v943
        %v989 = vunpack.c.l.b16 %v944
        %v990 = vunpack.c.h.b16 %v944
        %v991 = vunpack.c.l.b16 %v945
        %v992 = vunpack.c.l.b16 %v946
        %v993 = vunpack.c.h.b16 %v946
        %v994 = vunpack.c.l.b16 %v947
        %v995 = vunpack.c.h.b16 %v947
        %v996 = vunpack.c.l.b16 %v948
        %v997 = vunpack.c.l.b16 %v949
        %v998 = vunpack.c.h.b16 %v949
        %v999 = vunpack.c.l.b16 %v950
        %v1000 = vunpack.c.h.b16 %v950
        %v1001 = vunpack.c.l.b16 %v951
        %v1002 = vunpack.c.l.b16 %v952
        %v1003 = vunpack.c.h.b16 %v952
        %v1004 = vunpack.c.l.b16 %v953
        %v1005 = vunpack.c.h.b16 %v953
        %v1006 = vunpack.c.l.b16 %v954
        %v1007 = vunpack.c.l.b16 %v955
        %v1008 = vunpack.c.h.b16 %v955
        %v1009 = vunpack.c.l.b16 %v956
        %v1010 = vunpack.c.h.b16 %v956
        %v1011 = vunpack.c.l.b16 %v957
        %v1012 = vunpack.c.l.b16 %v958
        %v1013 = vunpack.c.h.b16 %v958
        %v1014 = vunpack.c.l.b16 %v959
        %v1015 = vunpack.c.h.b16 %v959
        %v1016 = vunpack.c.l.b16 %v960
        %v1017 = vpack.c.b16 %v987, %v982
        %v1018 = vpack.c.b16 %v988, %v983
        %v1019 = vpack.c.b16 %v989, %v984
        %v1020 = vpack.c.b16 %v990, %v985
        %v1021 = vpack.c.b16 %v991, %v986
        %v1022 = vpack.c.b16 %v997, %v992
        %v1023 = vpack.c.b16 %v998, %v993
        %v1024 = vpack.c.b16 %v999, %v994
        %v1025 = vpack.c.b16 %v1000, %v995
        %v1026 = vpack.c.b16 %v1001, %v996
        %v1027 = vpack.c.b16 %v1007, %v1002
        %v1028 = vpack.c.b16 %v1008, %v1003
        %v1029 = vpack.c.b16 %v1009, %v1004
        %v1030 = vpack.c.b16 %v1010, %v1005
        %v1031 = vpack.c.b16 %v1011, %v1006
        %v1032 = vpack.c.b16 %v1012, %v1012
        %v1033 = vpack.c.b16 %v1013, %v1013
        %v1034 = vpack.c.b16 %v1014, %v1014
        %v1035 = vpack.c.b16 %v1015, %v1015
        %v1036 = vpack.c.b16 %v1016, %v1016
        %v1053 = vsel %vm445, %v938, 0
        %v1056 = vsel %vm449, %v1032, 0
        %v1059 = vsel %vm449, %v1033, 0
        %v1062 = vsel %vm449, %v1034, 0
        %v1065 = vsel %vm449, %v1035, 0
        %v1068 = vsel %vm449, %v1036, 0
        %1070 = vmatprep.subr.bf16.mxu0 0
        %1071 = vmatpush1.bf16.msra.mxu0 0
        %1072 = vmatprep.subr.bf16.mxu0 0
        %1073 = vmatpush1.bf16.msra.mxu0 0
        %1074 = vmatprep.subr.bf16.mxu0 0
        %1075 = vmatpush1.bf16.msra.mxu0 0
        %1076 = vmatprep.subr.bf16.mxu0 0
        %1077 = vmatpush1.bf16.msra.mxu0 0
        %1078 = vmatprep.subr.bf16.mxu0 %v1059
        %1079 = vmatpush1.bf16.msra.mxu0 %v1056
        %1080 = vmatprep.subr.bf16.mxu0 %v1028
        %1081 = vmatpush1.bf16.msra.mxu0 %v1027
        %1082 = vmatprep.subr.bf16.mxu0 %v1023
        %1083 = vmatpush1.bf16.msra.mxu0 %v1022
        %1084 = vmatprep.subr.bf16.mxu0 %v1018
        %1085 = vmatpush1.bf16.msra.mxu0 %v1017
        %1086 = vmatprep.subr.bf16.mxu0 0
        %1087 = vmatpush2.bf16.msra.mxu0 0
        %1088 = vmatprep.subr.bf16.mxu0 0
        %1089 = vmatpush2.bf16.msra.mxu0 0
        %1090 = vmatprep.subr.bf16.mxu0 0
        %1091 = vmatpush2.bf16.msra.mxu0 0
        %1092 = vmatprep.subr.bf16.mxu0 0
        %1093 = vmatpush2.bf16.msra.mxu0 0
        %1094 = vmatprep.subr.bf16.mxu0 0
        %1095 = vmatpush2.bf16.msra.mxu0 0
        %1096 = vmatprep.subr.bf16.mxu0 0
        %1097 = vmatpush2.bf16.msra.mxu0 0
        %1098 = vmatprep.subr.bf16.mxu0 0
        %1099 = vmatpush2.bf16.msra.mxu0 0
        %1100 = vmatprep.subr.bf16.mxu0 0
        %1101 = vmatpush2.bf16.msra.mxu0 0
        %1102 = vmatprep.mubr.bf16.mxu0 0
        %1103 = vmatmul.mubr.bf16.gmra.mxu0 %v1053
        %v1104 = vpop.f32.mrf.mxu0
        %v1105 = vadd.f32 0.0, %v1104
        %v1106 = vpop.f32.mrf.mxu0
        %v1107 = vadd.f32 0.0, %v1106
        %v1108 = vpop.f32.mrf.mxu0
        %v1109 = vpop.f32.mrf.mxu0
        %1110 = vdwg.mxu0
        %1111 = vmatprep.subr.bf16.mxu0 0
        %1112 = vmatpush1.bf16.msra.mxu0 0
        %1113 = vmatprep.subr.bf16.mxu0 0
        %1114 = vmatpush1.bf16.msra.mxu0 0
        %1115 = vmatprep.subr.bf16.mxu0 0
        %1116 = vmatpush1.bf16.msra.mxu0 0
        %1117 = vmatprep.subr.bf16.mxu0 0
        %1118 = vmatpush1.bf16.msra.mxu0 0
        %1119 = vmatprep.subr.bf16.mxu0 %v1065
        %1120 = vmatpush1.bf16.msra.mxu0 %v1062
        %1121 = vmatprep.subr.bf16.mxu0 %v1030
        %1122 = vmatpush1.bf16.msra.mxu0 %v1029
        %1123 = vmatprep.subr.bf16.mxu0 %v1025
        %1124 = vmatpush1.bf16.msra.mxu0 %v1024
        %1125 = vmatprep.subr.bf16.mxu0 %v1020
        %1126 = vmatpush1.bf16.msra.mxu0 %v1019
        %1127 = vmatprep.subr.bf16.mxu0 0
        %1128 = vmatpush2.bf16.msra.mxu0 0
        %1129 = vmatprep.subr.bf16.mxu0 0
        %1130 = vmatpush2.bf16.msra.mxu0 0
        %1131 = vmatprep.subr.bf16.mxu0 0
        %1132 = vmatpush2.bf16.msra.mxu0 0
        %1133 = vmatprep.subr.bf16.mxu0 0
        %1134 = vmatpush2.bf16.msra.mxu0 0
        %1135 = vmatprep.subr.bf16.mxu0 0
        %1136 = vmatpush2.bf16.msra.mxu0 0
        %1137 = vmatprep.subr.bf16.mxu0 0
        %1138 = vmatpush2.bf16.msra.mxu0 0
        %1139 = vmatprep.subr.bf16.mxu0 0
        %1140 = vmatpush2.bf16.msra.mxu0 0
        %1141 = vmatprep.subr.bf16.mxu0 0
        %1142 = vmatpush2.bf16.msra.mxu0 0
        %1143 = vmatprep.mubr.bf16.mxu0 0
        %1144 = vmatmul.mubr.bf16.gmra.mxu0 %v1053
        %v1145 = vpop.f32.mrf.mxu0
        %v1146 = vadd.f32 0.0, %v1145
        %v1147 = vpop.f32.mrf.mxu0
        %v1148 = vadd.f32 0.0, %v1147
        %v1149 = vpop.f32.mrf.mxu0
        %v1150 = vpop.f32.mrf.mxu0
        %1151 = vdwg.mxu0
        %1152 = vmatprep.subr.bf16.mxu0 0
        %1153 = vmatpush1.bf16.msra.mxu0 0
        %1154 = vmatprep.subr.bf16.mxu0 0
        %1155 = vmatpush1.bf16.msra.mxu0 0
        %1156 = vmatprep.subr.bf16.mxu0 0
        %1157 = vmatpush1.bf16.msra.mxu0 0
        %1158 = vmatprep.subr.bf16.mxu0 0
        %1159 = vmatpush1.bf16.msra.mxu0 0
        %1160 = vmatprep.subr.bf16.mxu0 0
        %1161 = vmatpush1.bf16.msra.mxu0 %v1068
        %1162 = vmatprep.subr.bf16.mxu0 0
        %1163 = vmatpush1.bf16.msra.mxu0 %v1031
        %1164 = vmatprep.subr.bf16.mxu0 0
        %1165 = vmatpush1.bf16.msra.mxu0 %v1026
        %1166 = vmatprep.subr.bf16.mxu0 0
        %1167 = vmatpush1.bf16.msra.mxu0 %v1021
        %1168 = vmatprep.subr.bf16.mxu0 0
        %1169 = vmatpush2.bf16.msra.mxu0 0
        %1170 = vmatprep.subr.bf16.mxu0 0
        %1171 = vmatpush2.bf16.msra.mxu0 0
        %1172 = vmatprep.subr.bf16.mxu0 0
        %1173 = vmatpush2.bf16.msra.mxu0 0
        %1174 = vmatprep.subr.bf16.mxu0 0
        %1175 = vmatpush2.bf16.msra.mxu0 0
        %1176 = vmatprep.subr.bf16.mxu0 0
        %1177 = vmatpush2.bf16.msra.mxu0 0
        %1178 = vmatprep.subr.bf16.mxu0 0
        %1179 = vmatpush2.bf16.msra.mxu0 0
        %1180 = vmatprep.subr.bf16.mxu0 0
        %1181 = vmatpush2.bf16.msra.mxu0 0
        %1182 = vmatprep.subr.bf16.mxu0 0
        %1183 = vmatpush2.bf16.msra.mxu0 0
        %1184 = vmatprep.mubr.bf16.mxu0 0
        %1185 = vmatmul.mubr.bf16.gmra.mxu0 %v1053
        %v1186 = vpop.f32.mrf.mxu0
        %v1187 = vadd.f32 0.0, %v1186
        %v1188 = vpop.f32.mrf.mxu0
        %v1189 = vpop.f32.mrf.mxu0
        %v1190 = vpop.f32.mrf.mxu0
        %1191 = vdwg.mxu0
        %v1213 = vunpack.c.l.b16 %v683
        %v1214 = vunpack.c.h.b16 %v683
        %v1215 = vunpack.c.l.b16 %v684
        %v1216 = vunpack.c.h.b16 %v684
        %v1217 = vunpack.c.l.b16 %v685
        %v1218 = vunpack.c.l.b16 %v686
        %v1219 = vunpack.c.h.b16 %v686
        %v1220 = vunpack.c.l.b16 %v687
        %v1221 = vunpack.c.h.b16 %v687
        %v1222 = vunpack.c.l.b16 %v688
        %v1223 = vunpack.c.l.b16 %v689
        %v1224 = vunpack.c.h.b16 %v689
        %v1225 = vunpack.c.l.b16 %v690
        %v1226 = vunpack.c.h.b16 %v690
        %v1227 = vunpack.c.l.b16 %v691
        %v1228 = vunpack.c.l.b16 %v692
        %v1229 = vunpack.c.h.b16 %v692
        %v1230 = vunpack.c.l.b16 %v693
        %v1231 = vunpack.c.h.b16 %v693
        %v1232 = vunpack.c.l.b16 %v694
        %v1233 = vunpack.c.l.b16 %v695
        %v1234 = vunpack.c.h.b16 %v695
        %v1235 = vunpack.c.l.b16 %v696
        %v1236 = vunpack.c.h.b16 %v696
        %v1237 = vunpack.c.l.b16 %v697
        %v1238 = vunpack.c.l.b16 %v698
        %v1239 = vunpack.c.h.b16 %v698
        %v1240 = vunpack.c.l.b16 %v699
        %v1241 = vunpack.c.h.b16 %v699
        %v1242 = vunpack.c.l.b16 %v700
        %v1243 = vunpack.c.l.b16 %v701
        %v1244 = vunpack.c.h.b16 %v701
        %v1245 = vunpack.c.l.b16 %v702
        %v1246 = vunpack.c.h.b16 %v702
        %v1247 = vunpack.c.l.b16 %v703
        %v1248 = vpack.c.b16 %v1218, %v1213
        %v1249 = vpack.c.b16 %v1219, %v1214
        %v1250 = vpack.c.b16 %v1220, %v1215
        %v1251 = vpack.c.b16 %v1221, %v1216
        %v1252 = vpack.c.b16 %v1222, %v1217
        %v1253 = vpack.c.b16 %v1228, %v1223
        %v1254 = vpack.c.b16 %v1229, %v1224
        %v1255 = vpack.c.b16 %v1230, %v1225
        %v1256 = vpack.c.b16 %v1231, %v1226
        %v1257 = vpack.c.b16 %v1232, %v1227
        %v1258 = vpack.c.b16 %v1238, %v1233
        %v1259 = vpack.c.b16 %v1239, %v1234
        %v1260 = vpack.c.b16 %v1240, %v1235
        %v1261 = vpack.c.b16 %v1241, %v1236
        %v1262 = vpack.c.b16 %v1242, %v1237
        %v1263 = vpack.c.b16 %v1243, %v1243
        %v1264 = vpack.c.b16 %v1244, %v1244
        %v1265 = vpack.c.b16 %v1245, %v1245
        %v1266 = vpack.c.b16 %v1246, %v1246
        %v1267 = vpack.c.b16 %v1247, %v1247
        %v1284 = vsel %vm445, %v682, 0
        %v1287 = vsel %vm449, %v1263, 0
        %v1290 = vsel %vm449, %v1264, 0
        %v1293 = vsel %vm449, %v1265, 0
        %v1296 = vsel %vm449, %v1266, 0
        %v1299 = vsel %vm449, %v1267, 0
        %1301 = vmatprep.subr.bf16.mxu0 0
        %1302 = vmatpush1.bf16.msra.mxu0 0
        %1303 = vmatprep.subr.bf16.mxu0 0
        %1304 = vmatpush1.bf16.msra.mxu0 0
        %1305 = vmatprep.subr.bf16.mxu0 0
        %1306 = vmatpush1.bf16.msra.mxu0 0
        %1307 = vmatprep.subr.bf16.mxu0 0
        %1308 = vmatpush1.bf16.msra.mxu0 0
        %1309 = vmatprep.subr.bf16.mxu0 %v1290
        %1310 = vmatpush1.bf16.msra.mxu0 %v1287
        %1311 = vmatprep.subr.bf16.mxu0 %v1259
        %1312 = vmatpush1.bf16.msra.mxu0 %v1258
        %1313 = vmatprep.subr.bf16.mxu0 %v1254
        %1314 = vmatpush1.bf16.msra.mxu0 %v1253
        %1315 = vmatprep.subr.bf16.mxu0 %v1249
        %1316 = vmatpush1.bf16.msra.mxu0 %v1248
        %1317 = vmatprep.subr.bf16.mxu0 0
        %1318 = vmatpush2.bf16.msra.mxu0 0
        %1319 = vmatprep.subr.bf16.mxu0 0
        %1320 = vmatpush2.bf16.msra.mxu0 0
        %1321 = vmatprep.subr.bf16.mxu0 0
        %1322 = vmatpush2.bf16.msra.mxu0 0
        %1323 = vmatprep.subr.bf16.mxu0 0
        %1324 = vmatpush2.bf16.msra.mxu0 0
        %1325 = vmatprep.subr.bf16.mxu0 0
        %1326 = vmatpush2.bf16.msra.mxu0 0
        %1327 = vmatprep.subr.bf16.mxu0 0
        %1328 = vmatpush2.bf16.msra.mxu0 0
        %1329 = vmatprep.subr.bf16.mxu0 0
        %1330 = vmatpush2.bf16.msra.mxu0 0
        %1331 = vmatprep.subr.bf16.mxu0 0
        %1332 = vmatpush2.bf16.msra.mxu0 0
        %1333 = vmatprep.mubr.bf16.mxu0 0
        %1334 = vmatmul.mubr.bf16.gmra.mxu0 %v1284
        %v1335 = vpop.f32.mrf.mxu0
        %v1336 = vadd.f32 %v1105, %v1335
        %v1337 = vpop.f32.mrf.mxu0
        %v1338 = vadd.f32 %v1107, %v1337
        %v1339 = vpop.f32.mrf.mxu0
        %v1340 = vpop.f32.mrf.mxu0
        %1341 = vdwg.mxu0
        %1342 = vmatprep.subr.bf16.mxu0 0
        %1343 = vmatpush1.bf16.msra.mxu0 0
        %1344 = vmatprep.subr.bf16.mxu0 0
        %1345 = vmatpush1.bf16.msra.mxu0 0
        %1346 = vmatprep.subr.bf16.mxu0 0
        %1347 = vmatpush1.bf16.msra.mxu0 0
        %1348 = vmatprep.subr.bf16.mxu0 0
        %1349 = vmatpush1.bf16.msra.mxu0 0
        %1350 = vmatprep.subr.bf16.mxu0 %v1296
        %1351 = vmatpush1.bf16.msra.mxu0 %v1293
        %1352 = vmatprep.subr.bf16.mxu0 %v1261
        %1353 = vmatpush1.bf16.msra.mxu0 %v1260
        %1354 = vmatprep.subr.bf16.mxu0 %v1256
        %1355 = vmatpush1.bf16.msra.mxu0 %v1255
        %1356 = vmatprep.subr.bf16.mxu0 %v1251
        %1357 = vmatpush1.bf16.msra.mxu0 %v1250
        %1358 = vmatprep.subr.bf16.mxu0 0
        %1359 = vmatpush2.bf16.msra.mxu0 0
        %1360 = vmatprep.subr.bf16.mxu0 0
        %1361 = vmatpush2.bf16.msra.mxu0 0
        %1362 = vmatprep.subr.bf16.mxu0 0
        %1363 = vmatpush2.bf16.msra.mxu0 0
        %1364 = vmatprep.subr.bf16.mxu0 0
        %1365 = vmatpush2.bf16.msra.mxu0 0
        %1366 = vmatprep.subr.bf16.mxu0 0
        %1367 = vmatpush2.bf16.msra.mxu0 0
        %1368 = vmatprep.subr.bf16.mxu0 0
        %1369 = vmatpush2.bf16.msra.mxu0 0
        %1370 = vmatprep.subr.bf16.mxu0 0
        %1371 = vmatpush2.bf16.msra.mxu0 0
        %1372 = vmatprep.subr.bf16.mxu0 0
        %1373 = vmatpush2.bf16.msra.mxu0 0
        %1374 = vmatprep.mubr.bf16.mxu0 0
        %1375 = vmatmul.mubr.bf16.gmra.mxu0 %v1284
        %v1376 = vpop.f32.mrf.mxu0
        %v1377 = vadd.f32 %v1146, %v1376
        %v1378 = vpop.f32.mrf.mxu0
        %v1379 = vadd.f32 %v1148, %v1378
        %v1380 = vpop.f32.mrf.mxu0
        %v1381 = vpop.f32.mrf.mxu0
        %1382 = vdwg.mxu0
        %1383 = vmatprep.subr.bf16.mxu0 0
        %1384 = vmatpush1.bf16.msra.mxu0 0
        %1385 = vmatprep.subr.bf16.mxu0 0
        %1386 = vmatpush1.bf16.msra.mxu0 0
        %1387 = vmatprep.subr.bf16.mxu0 0
        %1388 = vmatpush1.bf16.msra.mxu0 0
        %1389 = vmatprep.subr.bf16.mxu0 0
        %1390 = vmatpush1.bf16.msra.mxu0 0
        %1391 = vmatprep.subr.bf16.mxu0 0
        %1392 = vmatpush1.bf16.msra.mxu0 %v1299
        %1393 = vmatprep.subr.bf16.mxu0 0
        %1394 = vmatpush1.bf16.msra.mxu0 %v1262
        %1395 = vmatprep.subr.bf16.mxu0 0
        %1396 = vmatpush1.bf16.msra.mxu0 %v1257
        %1397 = vmatprep.subr.bf16.mxu0 0
        %1398 = vmatpush1.bf16.msra.mxu0 %v1252
        %1399 = vmatprep.subr.bf16.mxu0 0
        %1400 = vmatpush2.bf16.msra.mxu0 0
        %1401 = vmatprep.subr.bf16.mxu0 0
        %1402 = vmatpush2.bf16.msra.mxu0 0
        %1403 = vmatprep.subr.bf16.mxu0 0
        %1404 = vmatpush2.bf16.msra.mxu0 0
        %1405 = vmatprep.subr.bf16.mxu0 0
        %1406 = vmatpush2.bf16.msra.mxu0 0
        %1407 = vmatprep.subr.bf16.mxu0 0
        %1408 = vmatpush2.bf16.msra.mxu0 0
        %1409 = vmatprep.subr.bf16.mxu0 0
        %1410 = vmatpush2.bf16.msra.mxu0 0
        %1411 = vmatprep.subr.bf16.mxu0 0
        %1412 = vmatpush2.bf16.msra.mxu0 0
        %1413 = vmatprep.subr.bf16.mxu0 0
        %1414 = vmatpush2.bf16.msra.mxu0 0
        %1415 = vmatprep.mubr.bf16.mxu0 0
        %1416 = vmatmul.mubr.bf16.gmra.mxu0 %v1284
        %v1417 = vpop.f32.mrf.mxu0
        %v1418 = vadd.f32 %v1187, %v1417
        %v1419 = vpop.f32.mrf.mxu0
        %v1420 = vpop.f32.mrf.mxu0
        %v1421 = vpop.f32.mrf.mxu0
        %1422 = vdwg.mxu0
        %s1423 = scalar_lea.vmem %s357, 40 [#allocation2]
        %v1424 = vld [vmem:[%s1423] sm:$0xf]
        %v1426 = vsel %vm445, %v1424, 0
        %1428 = vmatprep.subr.bf16.mxu0 0
        %1429 = vmatpush1.bf16.msra.mxu0 0
        %1430 = vmatprep.subr.bf16.mxu0 0
        %1431 = vmatpush1.bf16.msra.mxu0 0
        %1432 = vmatprep.subr.bf16.mxu0 0
        %1433 = vmatpush1.bf16.msra.mxu0 0
        %1434 = vmatprep.subr.bf16.mxu0 0
        %1435 = vmatpush1.bf16.msra.mxu0 0
        %1436 = vmatprep.subr.bf16.mxu0 0
        %1437 = vmatpush1.bf16.msra.mxu0 %v451
        %1438 = vmatprep.subr.bf16.mxu0 0
        %1439 = vmatpush1.bf16.msra.mxu0 %v440
        %1440 = vmatprep.subr.bf16.mxu0 0
        %1441 = vmatpush1.bf16.msra.mxu0 %v439
        %1442 = vmatprep.subr.bf16.mxu0 0
        %1443 = vmatpush1.bf16.msra.mxu0 %v438
        %1444 = vmatprep.subr.bf16.mxu0 0
        %1445 = vmatpush2.bf16.msra.mxu0 0
        %1446 = vmatprep.subr.bf16.mxu0 0
        %1447 = vmatpush2.bf16.msra.mxu0 0
        %1448 = vmatprep.subr.bf16.mxu0 0
        %1449 = vmatpush2.bf16.msra.mxu0 0
        %1450 = vmatprep.subr.bf16.mxu0 0
        %1451 = vmatpush2.bf16.msra.mxu0 0
        %1452 = vmatprep.subr.bf16.mxu0 0
        %1453 = vmatpush2.bf16.msra.mxu0 0
        %1454 = vmatprep.subr.bf16.mxu0 0
        %1455 = vmatpush2.bf16.msra.mxu0 0
        %1456 = vmatprep.subr.bf16.mxu0 0
        %1457 = vmatpush2.bf16.msra.mxu0 0
        %1458 = vmatprep.subr.bf16.mxu0 0
        %1459 = vmatpush2.bf16.msra.mxu0 0
        %1460 = vmatprep.mubr.bf16.mxu0 0
        %1461 = vmatmul.mubr.bf16.gmra.mxu0 %v1426
        %v1462 = vpop.f32.mrf.mxu0
        %v1463 = vadd.f32 %v422, %v1462
        %v1464 = vpop.f32.mrf.mxu0
        %v1465 = vpop.f32.mrf.mxu0
        %v1466 = vpop.f32.mrf.mxu0
        %1467 = vdwg.mxu0
        %v1468 = vmax.f32 %v1463, 0.0
        %s1469 = scalar_lea.vmem %s357, 44 [#allocation2]
        %v1470 = vld [vmem:[%s1469] sm:$0xf]
        %v1472 = vsel %vm445, %v1470, 0
        %1474 = vmatprep.subr.bf16.mxu0 0
        %1475 = vmatpush1.bf16.msra.mxu0 0
        %1476 = vmatprep.subr.bf16.mxu0 0
        %1477 = vmatpush1.bf16.msra.mxu0 0
        %1478 = vmatprep.subr.bf16.mxu0 0
        %1479 = vmatpush1.bf16.msra.mxu0 0
        %1480 = vmatprep.subr.bf16.mxu0 0
        %1481 = vmatpush1.bf16.msra.mxu0 0
        %1482 = vmatprep.subr.bf16.mxu0 0
        %1483 = vmatpush1.bf16.msra.mxu0 %v451
        %1484 = vmatprep.subr.bf16.mxu0 0
        %1485 = vmatpush1.bf16.msra.mxu0 %v440
        %1486 = vmatprep.subr.bf16.mxu0 0
        %1487 = vmatpush1.bf16.msra.mxu0 %v439
        %1488 = vmatprep.subr.bf16.mxu0 0
        %1489 = vmatpush1.bf16.msra.mxu0 %v438
        %1490 = vmatprep.subr.bf16.mxu0 0
        %1491 = vmatpush2.bf16.msra.mxu0 0
        %1492 = vmatprep.subr.bf16.mxu0 0
        %1493 = vmatpush2.bf16.msra.mxu0 0
        %1494 = vmatprep.subr.bf16.mxu0 0
        %1495 = vmatpush2.bf16.msra.mxu0 0
        %1496 = vmatprep.subr.bf16.mxu0 0
        %1497 = vmatpush2.bf16.msra.mxu0 0
        %1498 = vmatprep.subr.bf16.mxu0 0
        %1499 = vmatpush2.bf16.msra.mxu0 0
        %1500 = vmatprep.subr.bf16.mxu0 0
        %1501 = vmatpush2.bf16.msra.mxu0 0
        %1502 = vmatprep.subr.bf16.mxu0 0
        %1503 = vmatpush2.bf16.msra.mxu0 0
        %1504 = vmatprep.subr.bf16.mxu0 0
        %1505 = vmatpush2.bf16.msra.mxu0 0
        %1506 = vmatprep.mubr.bf16.mxu0 0
        %1507 = vmatmul.mubr.bf16.gmra.mxu0 %v1472
        %v1508 = vpop.f32.mrf.mxu0
        %v1509 = vadd.f32 %v422, %v1508
        %v1510 = vpop.f32.mrf.mxu0
        %v1511 = vpop.f32.mrf.mxu0
        %v1512 = vpop.f32.mrf.mxu0
        %1513 = vdwg.mxu0
        %v1514 = vmax.f32 %v1509, 0.0
        %v1515 = vmax.f32 %v1468, %v1514
        %s1516 = scalar_lea.vmem %s357, 48 [#allocation2]
        %v1517 = vld [vmem:[%s1516] sm:$0xf]
        %v1519 = vsel %vm445, %v1517, 0
        %1521 = vmatprep.subr.bf16.mxu0 0
        %1522 = vmatpush1.bf16.msra.mxu0 0
        %1523 = vmatprep.subr.bf16.mxu0 0
        %1524 = vmatpush1.bf16.msra.mxu0 0
        %1525 = vmatprep.subr.bf16.mxu0 0
        %1526 = vmatpush1.bf16.msra.mxu0 0
        %1527 = vmatprep.subr.bf16.mxu0 0
        %1528 = vmatpush1.bf16.msra.mxu0 0
        %1529 = vmatprep.subr.bf16.mxu0 0
        %1530 = vmatpush1.bf16.msra.mxu0 %v451
        %1531 = vmatprep.subr.bf16.mxu0 0
        %1532 = vmatpush1.bf16.msra.mxu0 %v440
        %1533 = vmatprep.subr.bf16.mxu0 0
        %1534 = vmatpush1.bf16.msra.mxu0 %v439
        %1535 = vmatprep.subr.bf16.mxu0 0
        %1536 = vmatpush1.bf16.msra.mxu0 %v438
        %1537 = vmatprep.subr.bf16.mxu0 0
        %1538 = vmatpush2.bf16.msra.mxu0 0
        %1539 = vmatprep.subr.bf16.mxu0 0
        %1540 = vmatpush2.bf16.msra.mxu0 0
        %1541 = vmatprep.subr.bf16.mxu0 0
        %1542 = vmatpush2.bf16.msra.mxu0 0
        %1543 = vmatprep.subr.bf16.mxu0 0
        %1544 = vmatpush2.bf16.msra.mxu0 0
        %1545 = vmatprep.subr.bf16.mxu0 0
        %1546 = vmatpush2.bf16.msra.mxu0 0
        %1547 = vmatprep.subr.bf16.mxu0 0
        %1548 = vmatpush2.bf16.msra.mxu0 0
        %1549 = vmatprep.subr.bf16.mxu0 0
        %1550 = vmatpush2.bf16.msra.mxu0 0
        %1551 = vmatprep.subr.bf16.mxu0 0
        %1552 = vmatpush2.bf16.msra.mxu0 0
        %1553 = vmatprep.mubr.bf16.mxu0 0
        %1554 = vmatmul.mubr.bf16.gmra.mxu0 %v1519
        %v1555 = vpop.f32.mrf.mxu0
        %v1556 = vadd.f32 %v422, %v1555
        %v1557 = vpop.f32.mrf.mxu0
        %v1558 = vpop.f32.mrf.mxu0
        %v1559 = vpop.f32.mrf.mxu0
        %1560 = vdwg.mxu0
        %v1561 = vmax.f32 %v1556, 0.0
        %v1562 = vmax.f32 %v1515, %v1561
        %s1563 = scalar_lea.vmem %s357, 52 [#allocation2]
        %v1564 = vld [vmem:[%s1563] sm:$0xf]
        %v1566 = vsel %vm445, %v1564, 0
        %1568 = vmatprep.subr.bf16.mxu0 0
        %1569 = vmatpush1.bf16.msra.mxu0 0
        %1570 = vmatprep.subr.bf16.mxu0 0
        %1571 = vmatpush1.bf16.msra.mxu0 0
        %1572 = vmatprep.subr.bf16.mxu0 0
        %1573 = vmatpush1.bf16.msra.mxu0 0
        %1574 = vmatprep.subr.bf16.mxu0 0
        %1575 = vmatpush1.bf16.msra.mxu0 0
        %1576 = vmatprep.subr.bf16.mxu0 0
        %1577 = vmatpush1.bf16.msra.mxu0 %v451
        %1578 = vmatprep.subr.bf16.mxu0 0
        %1579 = vmatpush1.bf16.msra.mxu0 %v440
        %1580 = vmatprep.subr.bf16.mxu0 0
        %1581 = vmatpush1.bf16.msra.mxu0 %v439
        %1582 = vmatprep.subr.bf16.mxu0 0
        %1583 = vmatpush1.bf16.msra.mxu0 %v438
        %1584 = vmatprep.subr.bf16.mxu0 0
        %1585 = vmatpush2.bf16.msra.mxu0 0
        %1586 = vmatprep.subr.bf16.mxu0 0
        %1587 = vmatpush2.bf16.msra.mxu0 0
        %1588 = vmatprep.subr.bf16.mxu0 0
        %1589 = vmatpush2.bf16.msra.mxu0 0
        %1590 = vmatprep.subr.bf16.mxu0 0
        %1591 = vmatpush2.bf16.msra.mxu0 0
        %1592 = vmatprep.subr.bf16.mxu0 0
        %1593 = vmatpush2.bf16.msra.mxu0 0
        %1594 = vmatprep.subr.bf16.mxu0 0
        %1595 = vmatpush2.bf16.msra.mxu0 0
        %1596 = vmatprep.subr.bf16.mxu0 0
        %1597 = vmatpush2.bf16.msra.mxu0 0
        %1598 = vmatprep.subr.bf16.mxu0 0
        %1599 = vmatpush2.bf16.msra.mxu0 0
        %1600 = vmatprep.mubr.bf16.mxu0 0
        %1601 = vmatmul.mubr.bf16.gmra.mxu0 %v1566
        %v1602 = vpop.f32.mrf.mxu0
        %v1603 = vadd.f32 %v422, %v1602
        %v1604 = vpop.f32.mrf.mxu0
        %v1605 = vpop.f32.mrf.mxu0
        %v1606 = vpop.f32.mrf.mxu0
        %1607 = vdwg.mxu0
        %v1608 = vmax.f32 %v1603, 0.0
        %v1609 = vmax.f32 %v1562, %v1608
        %s1610 = scalar_lea.vmem %s357, 56 [#allocation2]
        %v1611 = vld [vmem:[%s1610] sm:$0xf]
        %v1613 = vsel %vm445, %v1611, 0
        %1615 = vmatprep.subr.bf16.mxu0 0
        %1616 = vmatpush1.bf16.msra.mxu0 0
        %1617 = vmatprep.subr.bf16.mxu0 0
        %1618 = vmatpush1.bf16.msra.mxu0 0
        %1619 = vmatprep.subr.bf16.mxu0 0
        %1620 = vmatpush1.bf16.msra.mxu0 0
        %1621 = vmatprep.subr.bf16.mxu0 0
        %1622 = vmatpush1.bf16.msra.mxu0 0
        %1623 = vmatprep.subr.bf16.mxu0 0
        %1624 = vmatpush1.bf16.msra.mxu0 %v451
        %1625 = vmatprep.subr.bf16.mxu0 0
        %1626 = vmatpush1.bf16.msra.mxu0 %v440
        %1627 = vmatprep.subr.bf16.mxu0 0
        %1628 = vmatpush1.bf16.msra.mxu0 %v439
        %1629 = vmatprep.subr.bf16.mxu0 0
        %1630 = vmatpush1.bf16.msra.mxu0 %v438
        %1631 = vmatprep.subr.bf16.mxu0 0
        %1632 = vmatpush2.bf16.msra.mxu0 0
        %1633 = vmatprep.subr.bf16.mxu0 0
        %1634 = vmatpush2.bf16.msra.mxu0 0
        %1635 = vmatprep.subr.bf16.mxu0 0
        %1636 = vmatpush2.bf16.msra.mxu0 0
        %1637 = vmatprep.subr.bf16.mxu0 0
        %1638 = vmatpush2.bf16.msra.mxu0 0
        %1639 = vmatprep.subr.bf16.mxu0 0
        %1640 = vmatpush2.bf16.msra.mxu0 0
        %1641 = vmatprep.subr.bf16.mxu0 0
        %1642 = vmatpush2.bf16.msra.mxu0 0
        %1643 = vmatprep.subr.bf16.mxu0 0
        %1644 = vmatpush2.bf16.msra.mxu0 0
        %1645 = vmatprep.subr.bf16.mxu0 0
        %1646 = vmatpush2.bf16.msra.mxu0 0
        %1647 = vmatprep.mubr.bf16.mxu0 0
        %1648 = vmatmul.mubr.bf16.gmra.mxu0 %v1613
        %v1649 = vpop.f32.mrf.mxu0
        %v1650 = vadd.f32 %v422, %v1649
        %v1651 = vpop.f32.mrf.mxu0
        %v1652 = vpop.f32.mrf.mxu0
        %v1653 = vpop.f32.mrf.mxu0
        %1654 = vdwg.mxu0
        %v1655 = vmax.f32 %v1650, 0.0
        %v1656 = vmax.f32 %v1609, %v1655
        %v1657 = vpack.c.bf16 %v1656, %v1656
        %s1658 = scalar_lea.vmem [#allocation7], 280
        %v1659 = vld [vmem:[%s1658] sm:$0xff]
        %v1660 = vld [vmem:[%s1658 + $0x8] sm:$0xff]
        %v1661 = vld [vmem:[%s1658 + $0x10] sm:$0xf]
        %v1662 = vld [vmem:[%s1658 + $0x14] sm:$0xff]
        %v1663 = vld [vmem:[%s1658 + $0x1c] sm:$0xff]
        %v1664 = vld [vmem:[%s1658 + $0x24] sm:$0xf]
        %v1665 = vld [vmem:[%s1658 + $0x28] sm:$0xff]
        %v1666 = vld [vmem:[%s1658 + $0x30] sm:$0xff]
        %v1667 = vld [vmem:[%s1658 + $0x38] sm:$0xf]
        %v1668 = vld [vmem:[%s1658 + $0x3c] sm:$0xff]
        %v1669 = vld [vmem:[%s1658 + $0x44] sm:$0xff]
        %v1670 = vld [vmem:[%s1658 + $0x4c] sm:$0xf]
        %v1671 = vld [vmem:[%s1658 + $0x50] sm:$0xff]
        %v1672 = vld [vmem:[%s1658 + $0x58] sm:$0xff]
        %v1673 = vld [vmem:[%s1658 + $0x60] sm:$0xf]
        %v1674 = vld [vmem:[%s1658 + $0x64] sm:$0xff]
        %v1675 = vld [vmem:[%s1658 + $0x6c] sm:$0xff]
        %v1676 = vld [vmem:[%s1658 + $0x74] sm:$0xf]
        %v1677 = vld [vmem:[%s1658 + $0x78] sm:$0x11]
        %v1678 = vld [vmem:[%s1658 + $0x80] sm:$0x11]
        %v1679 = vld [vmem:[%s1658 + $0x88] sm:$0x1]
        %v1701 = vunpack.c.l.b16 %v1659
        %v1702 = vunpack.c.h.b16 %v1659
        %v1703 = vunpack.c.l.b16 %v1660
        %v1704 = vunpack.c.h.b16 %v1660
        %v1705 = vunpack.c.l.b16 %v1661
        %v1706 = vunpack.c.l.b16 %v1662
        %v1707 = vunpack.c.h.b16 %v1662
        %v1708 = vunpack.c.l.b16 %v1663
        %v1709 = vunpack.c.h.b16 %v1663
        %v1710 = vunpack.c.l.b16 %v1664
        %v1711 = vunpack.c.l.b16 %v1665
        %v1712 = vunpack.c.h.b16 %v1665
        %v1713 = vunpack.c.l.b16 %v1666
        %v1714 = vunpack.c.h.b16 %v1666
        %v1715 = vunpack.c.l.b16 %v1667
        %v1716 = vunpack.c.l.b16 %v1668
        %v1717 = vunpack.c.h.b16 %v1668
        %v1718 = vunpack.c.l.b16 %v1669
        %v1719 = vunpack.c.h.b16 %v1669
        %v1720 = vunpack.c.l.b16 %v1670
        %v1721 = vunpack.c.l.b16 %v1671
        %v1722 = vunpack.c.h.b16 %v1671
        %v1723 = vunpack.c.l.b16 %v1672
        %v1724 = vunpack.c.h.b16 %v1672
        %v1725 = vunpack.c.l.b16 %v1673
        %v1726 = vunpack.c.l.b16 %v1674
        %v1727 = vunpack.c.h.b16 %v1674
        %v1728 = vunpack.c.l.b16 %v1675
        %v1729 = vunpack.c.h.b16 %v1675
        %v1730 = vunpack.c.l.b16 %v1676
        %v1731 = vunpack.c.l.b16 %v1677
        %v1732 = vunpack.c.h.b16 %v1677
        %v1733 = vunpack.c.l.b16 %v1678
        %v1734 = vunpack.c.h.b16 %v1678
        %v1735 = vunpack.c.l.b16 %v1679
        %v1736 = vpack.c.b16 %v1706, %v1701
        %v1737 = vpack.c.b16 %v1707, %v1702
        %v1738 = vpack.c.b16 %v1708, %v1703
        %v1739 = vpack.c.b16 %v1709, %v1704
        %v1740 = vpack.c.b16 %v1710, %v1705
        %v1741 = vpack.c.b16 %v1716, %v1711
        %v1742 = vpack.c.b16 %v1717, %v1712
        %v1743 = vpack.c.b16 %v1718, %v1713
        %v1744 = vpack.c.b16 %v1719, %v1714
        %v1745 = vpack.c.b16 %v1720, %v1715
        %v1746 = vpack.c.b16 %v1726, %v1721
        %v1747 = vpack.c.b16 %v1727, %v1722
        %v1748 = vpack.c.b16 %v1728, %v1723
        %v1749 = vpack.c.b16 %v1729, %v1724
        %v1750 = vpack.c.b16 %v1730, %v1725
        %v1751 = vpack.c.b16 %v1731, %v1731
        %v1752 = vpack.c.b16 %v1732, %v1732
        %v1753 = vpack.c.b16 %v1733, %v1733
        %v1754 = vpack.c.b16 %v1734, %v1734
        %v1755 = vpack.c.b16 %v1735, %v1735
        %v1772 = vsel %vm445, %v1657, 0
        %v1775 = vsel %vm449, %v1751, 0
        %v1778 = vsel %vm449, %v1752, 0
        %v1781 = vsel %vm449, %v1753, 0
        %v1784 = vsel %vm449, %v1754, 0
        %v1787 = vsel %vm449, %v1755, 0
        %1789 = vmatprep.subr.bf16.mxu0 0
        %1790 = vmatpush1.bf16.msra.mxu0 0
        %1791 = vmatprep.subr.bf16.mxu0 0
        %1792 = vmatpush1.bf16.msra.mxu0 0
        %1793 = vmatprep.subr.bf16.mxu0 0
        %1794 = vmatpush1.bf16.msra.mxu0 0
        %1795 = vmatprep.subr.bf16.mxu0 0
        %1796 = vmatpush1.bf16.msra.mxu0 0
        %1797 = vmatprep.subr.bf16.mxu0 %v1778
        %1798 = vmatpush1.bf16.msra.mxu0 %v1775
        %1799 = vmatprep.subr.bf16.mxu0 %v1747
        %1800 = vmatpush1.bf16.msra.mxu0 %v1746
        %1801 = vmatprep.subr.bf16.mxu0 %v1742
        %1802 = vmatpush1.bf16.msra.mxu0 %v1741
        %1803 = vmatprep.subr.bf16.mxu0 %v1737
        %1804 = vmatpush1.bf16.msra.mxu0 %v1736
        %1805 = vmatprep.subr.bf16.mxu0 0
        %1806 = vmatpush2.bf16.msra.mxu0 0
        %1807 = vmatprep.subr.bf16.mxu0 0
        %1808 = vmatpush2.bf16.msra.mxu0 0
        %1809 = vmatprep.subr.bf16.mxu0 0
        %1810 = vmatpush2.bf16.msra.mxu0 0
        %1811 = vmatprep.subr.bf16.mxu0 0
        %1812 = vmatpush2.bf16.msra.mxu0 0
        %1813 = vmatprep.subr.bf16.mxu0 0
        %1814 = vmatpush2.bf16.msra.mxu0 0
        %1815 = vmatprep.subr.bf16.mxu0 0
        %1816 = vmatpush2.bf16.msra.mxu0 0
        %1817 = vmatprep.subr.bf16.mxu0 0
        %1818 = vmatpush2.bf16.msra.mxu0 0
        %1819 = vmatprep.subr.bf16.mxu0 0
        %1820 = vmatpush2.bf16.msra.mxu0 0
        %1821 = vmatprep.mubr.bf16.mxu0 0
        %1822 = vmatmul.mubr.bf16.gmra.mxu0 %v1772
        %v1823 = vpop.f32.mrf.mxu0
        %v1824 = vadd.f32 0.0, %v1823
        %v1825 = vpop.f32.mrf.mxu0
        %v1826 = vadd.f32 0.0, %v1825
        %v1827 = vpop.f32.mrf.mxu0
        %v1828 = vpop.f32.mrf.mxu0
        %1829 = vdwg.mxu0
        %1830 = vmatprep.subr.bf16.mxu0 0
        %1831 = vmatpush1.bf16.msra.mxu0 0
        %1832 = vmatprep.subr.bf16.mxu0 0
        %1833 = vmatpush1.bf16.msra.mxu0 0
        %1834 = vmatprep.subr.bf16.mxu0 0
        %1835 = vmatpush1.bf16.msra.mxu0 0
        %1836 = vmatprep.subr.bf16.mxu0 0
        %1837 = vmatpush1.bf16.msra.mxu0 0
        %1838 = vmatprep.subr.bf16.mxu0 %v1784
        %1839 = vmatpush1.bf16.msra.mxu0 %v1781
        %1840 = vmatprep.subr.bf16.mxu0 %v1749
        %1841 = vmatpush1.bf16.msra.mxu0 %v1748
        %1842 = vmatprep.subr.bf16.mxu0 %v1744
        %1843 = vmatpush1.bf16.msra.mxu0 %v1743
        %1844 = vmatprep.subr.bf16.mxu0 %v1739
        %1845 = vmatpush1.bf16.msra.mxu0 %v1738
        %1846 = vmatprep.subr.bf16.mxu0 0
        %1847 = vmatpush2.bf16.msra.mxu0 0
        %1848 = vmatprep.subr.bf16.mxu0 0
        %1849 = vmatpush2.bf16.msra.mxu0 0
        %1850 = vmatprep.subr.bf16.mxu0 0
        %1851 = vmatpush2.bf16.msra.mxu0 0
        %1852 = vmatprep.subr.bf16.mxu0 0
        %1853 = vmatpush2.bf16.msra.mxu0 0
        %1854 = vmatprep.subr.bf16.mxu0 0
        %1855 = vmatpush2.bf16.msra.mxu0 0
        %1856 = vmatprep.subr.bf16.mxu0 0
        %1857 = vmatpush2.bf16.msra.mxu0 0
        %1858 = vmatprep.subr.bf16.mxu0 0
        %1859 = vmatpush2.bf16.msra.mxu0 0
        %1860 = vmatprep.subr.bf16.mxu0 0
        %1861 = vmatpush2.bf16.msra.mxu0 0
        %1862 = vmatprep.mubr.bf16.mxu0 0
        %1863 = vmatmul.mubr.bf16.gmra.mxu0 %v1772
        %v1864 = vpop.f32.mrf.mxu0
        %v1865 = vadd.f32 0.0, %v1864
        %v1866 = vpop.f32.mrf.mxu0
        %v1867 = vadd.f32 0.0, %v1866
        %v1868 = vpop.f32.mrf.mxu0
        %v1869 = vpop.f32.mrf.mxu0
        %1870 = vdwg.mxu0
        %1871 = vmatprep.subr.bf16.mxu0 0
        %1872 = vmatpush1.bf16.msra.mxu0 0
        %1873 = vmatprep.subr.bf16.mxu0 0
        %1874 = vmatpush1.bf16.msra.mxu0 0
        %1875 = vmatprep.subr.bf16.mxu0 0
        %1876 = vmatpush1.bf16.msra.mxu0 0
        %1877 = vmatprep.subr.bf16.mxu0 0
        %1878 = vmatpush1.bf16.msra.mxu0 0
        %1879 = vmatprep.subr.bf16.mxu0 0
        %1880 = vmatpush1.bf16.msra.mxu0 %v1787
        %1881 = vmatprep.subr.bf16.mxu0 0
        %1882 = vmatpush1.bf16.msra.mxu0 %v1750
        %1883 = vmatprep.subr.bf16.mxu0 0
        %1884 = vmatpush1.bf16.msra.mxu0 %v1745
        %1885 = vmatprep.subr.bf16.mxu0 0
        %1886 = vmatpush1.bf16.msra.mxu0 %v1740
        %1887 = vmatprep.subr.bf16.mxu0 0
        %1888 = vmatpush2.bf16.msra.mxu0 0
        %1889 = vmatprep.subr.bf16.mxu0 0
        %1890 = vmatpush2.bf16.msra.mxu0 0
        %1891 = vmatprep.subr.bf16.mxu0 0
        %1892 = vmatpush2.bf16.msra.mxu0 0
        %1893 = vmatprep.subr.bf16.mxu0 0
        %1894 = vmatpush2.bf16.msra.mxu0 0
        %1895 = vmatprep.subr.bf16.mxu0 0
        %1896 = vmatpush2.bf16.msra.mxu0 0
        %1897 = vmatprep.subr.bf16.mxu0 0
        %1898 = vmatpush2.bf16.msra.mxu0 0
        %1899 = vmatprep.subr.bf16.mxu0 0
        %1900 = vmatpush2.bf16.msra.mxu0 0
        %1901 = vmatprep.subr.bf16.mxu0 0
        %1902 = vmatpush2.bf16.msra.mxu0 0
        %1903 = vmatprep.mubr.bf16.mxu0 0
        %1904 = vmatmul.mubr.bf16.gmra.mxu0 %v1772
        %v1905 = vpop.f32.mrf.mxu0
        %v1906 = vadd.f32 0.0, %v1905
        %v1907 = vpop.f32.mrf.mxu0
        %v1908 = vpop.f32.mrf.mxu0
        %v1909 = vpop.f32.mrf.mxu0
        %1910 = vdwg.mxu0
        %v1911 = vadd.f32 %v1336, %v1824
        %v1912 = vadd.f32 %v1338, %v1826
        %v1913 = vadd.f32 %v1377, %v1865
        %v1914 = vadd.f32 %v1379, %v1867
        %v1915 = vadd.f32 %v1418, %v1906
        %s1916 = scalar_lea.vmem %s357, 60 [#allocation2]
        %v1917 = vld [vmem:[%s1916] sm:$0xf]
        %v1919 = vsel %vm445, %v1917, 0
        %1921 = vmatprep.subr.bf16.mxu0 0
        %1922 = vmatpush1.bf16.msra.mxu0 0
        %1923 = vmatprep.subr.bf16.mxu0 0
        %1924 = vmatpush1.bf16.msra.mxu0 0
        %1925 = vmatprep.subr.bf16.mxu0 0
        %1926 = vmatpush1.bf16.msra.mxu0 0
        %1927 = vmatprep.subr.bf16.mxu0 0
        %1928 = vmatpush1.bf16.msra.mxu0 0
        %1929 = vmatprep.subr.bf16.mxu0 0
        %1930 = vmatpush1.bf16.msra.mxu0 %v451
        %1931 = vmatprep.subr.bf16.mxu0 0
        %1932 = vmatpush1.bf16.msra.mxu0 %v440
        %1933 = vmatprep.subr.bf16.mxu0 0
        %1934 = vmatpush1.bf16.msra.mxu0 %v439
        %1935 = vmatprep.subr.bf16.mxu0 0
        %1936 = vmatpush1.bf16.msra.mxu0 %v438
        %1937 = vmatprep.subr.bf16.mxu0 0
        %1938 = vmatpush2.bf16.msra.mxu0 0
        %1939 = vmatprep.subr.bf16.mxu0 0
        %1940 = vmatpush2.bf16.msra.mxu0 0
        %1941 = vmatprep.subr.bf16.mxu0 0
        %1942 = vmatpush2.bf16.msra.mxu0 0
        %1943 = vmatprep.subr.bf16.mxu0 0
        %1944 = vmatpush2.bf16.msra.mxu0 0
        %1945 = vmatprep.subr.bf16.mxu0 0
        %1946 = vmatpush2.bf16.msra.mxu0 0
        %1947 = vmatprep.subr.bf16.mxu0 0
        %1948 = vmatpush2.bf16.msra.mxu0 0
        %1949 = vmatprep.subr.bf16.mxu0 0
        %1950 = vmatpush2.bf16.msra.mxu0 0
        %1951 = vmatprep.subr.bf16.mxu0 0
        %1952 = vmatpush2.bf16.msra.mxu0 0
        %1953 = vmatprep.mubr.bf16.mxu0 0
        %1954 = vmatmul.mubr.bf16.gmra.mxu0 %v1919
        %v1955 = vpop.f32.mrf.mxu0
        %v1956 = vadd.f32 %v422, %v1955
        %v1957 = vpop.f32.mrf.mxu0
        %v1958 = vpop.f32.mrf.mxu0
        %v1959 = vpop.f32.mrf.mxu0
        %1960 = vdwg.mxu0
        %v1961 = vmax.f32 %v1956, 0.0
        %s1962 = scalar_lea.vmem %s357, 64 [#allocation2]
        %v1963 = vld [vmem:[%s1962] sm:$0xf]
        %v1965 = vsel %vm445, %v1963, 0
        %1967 = vmatprep.subr.bf16.mxu0 0
        %1968 = vmatpush1.bf16.msra.mxu0 0
        %1969 = vmatprep.subr.bf16.mxu0 0
        %1970 = vmatpush1.bf16.msra.mxu0 0
        %1971 = vmatprep.subr.bf16.mxu0 0
        %1972 = vmatpush1.bf16.msra.mxu0 0
        %1973 = vmatprep.subr.bf16.mxu0 0
        %1974 = vmatpush1.bf16.msra.mxu0 0
        %1975 = vmatprep.subr.bf16.mxu0 0
        %1976 = vmatpush1.bf16.msra.mxu0 %v451
        %1977 = vmatprep.subr.bf16.mxu0 0
        %1978 = vmatpush1.bf16.msra.mxu0 %v440
        %1979 = vmatprep.subr.bf16.mxu0 0
        %1980 = vmatpush1.bf16.msra.mxu0 %v439
        %1981 = vmatprep.subr.bf16.mxu0 0
        %1982 = vmatpush1.bf16.msra.mxu0 %v438
        %1983 = vmatprep.subr.bf16.mxu0 0
        %1984 = vmatpush2.bf16.msra.mxu0 0
        %1985 = vmatprep.subr.bf16.mxu0 0
        %1986 = vmatpush2.bf16.msra.mxu0 0
        %1987 = vmatprep.subr.bf16.mxu0 0
        %1988 = vmatpush2.bf16.msra.mxu0 0
        %1989 = vmatprep.subr.bf16.mxu0 0
        %1990 = vmatpush2.bf16.msra.mxu0 0
        %1991 = vmatprep.subr.bf16.mxu0 0
        %1992 = vmatpush2.bf16.msra.mxu0 0
        %1993 = vmatprep.subr.bf16.mxu0 0
        %1994 = vmatpush2.bf16.msra.mxu0 0
        %1995 = vmatprep.subr.bf16.mxu0 0
        %1996 = vmatpush2.bf16.msra.mxu0 0
        %1997 = vmatprep.subr.bf16.mxu0 0
        %1998 = vmatpush2.bf16.msra.mxu0 0
        %1999 = vmatprep.mubr.bf16.mxu0 0
        %2000 = vmatmul.mubr.bf16.gmra.mxu0 %v1965
        %v2001 = vpop.f32.mrf.mxu0
        %v2002 = vadd.f32 %v422, %v2001
        %v2003 = vpop.f32.mrf.mxu0
        %v2004 = vpop.f32.mrf.mxu0
        %v2005 = vpop.f32.mrf.mxu0
        %2006 = vdwg.mxu0
        %v2007 = vmax.f32 %v2002, 0.0
        %v2008 = vmax.f32 %v1961, %v2007
        %s2009 = scalar_lea.vmem %s357, 68 [#allocation2]
        %v2010 = vld [vmem:[%s2009] sm:$0xf]
        %v2012 = vsel %vm445, %v2010, 0
        %2014 = vmatprep.subr.bf16.mxu0 0
        %2015 = vmatpush1.bf16.msra.mxu0 0
        %2016 = vmatprep.subr.bf16.mxu0 0
        %2017 = vmatpush1.bf16.msra.mxu0 0
        %2018 = vmatprep.subr.bf16.mxu0 0
        %2019 = vmatpush1.bf16.msra.mxu0 0
        %2020 = vmatprep.subr.bf16.mxu0 0
        %2021 = vmatpush1.bf16.msra.mxu0 0
        %2022 = vmatprep.subr.bf16.mxu0 0
        %2023 = vmatpush1.bf16.msra.mxu0 %v451
        %2024 = vmatprep.subr.bf16.mxu0 0
        %2025 = vmatpush1.bf16.msra.mxu0 %v440
        %2026 = vmatprep.subr.bf16.mxu0 0
        %2027 = vmatpush1.bf16.msra.mxu0 %v439
        %2028 = vmatprep.subr.bf16.mxu0 0
        %2029 = vmatpush1.bf16.msra.mxu0 %v438
        %2030 = vmatprep.subr.bf16.mxu0 0
        %2031 = vmatpush2.bf16.msra.mxu0 0
        %2032 = vmatprep.subr.bf16.mxu0 0
        %2033 = vmatpush2.bf16.msra.mxu0 0
        %2034 = vmatprep.subr.bf16.mxu0 0
        %2035 = vmatpush2.bf16.msra.mxu0 0
        %2036 = vmatprep.subr.bf16.mxu0 0
        %2037 = vmatpush2.bf16.msra.mxu0 0
        %2038 = vmatprep.subr.bf16.mxu0 0
        %2039 = vmatpush2.bf16.msra.mxu0 0
        %2040 = vmatprep.subr.bf16.mxu0 0
        %2041 = vmatpush2.bf16.msra.mxu0 0
        %2042 = vmatprep.subr.bf16.mxu0 0
        %2043 = vmatpush2.bf16.msra.mxu0 0
        %2044 = vmatprep.subr.bf16.mxu0 0
        %2045 = vmatpush2.bf16.msra.mxu0 0
        %2046 = vmatprep.mubr.bf16.mxu0 0
        %2047 = vmatmul.mubr.bf16.gmra.mxu0 %v2012
        %v2048 = vpop.f32.mrf.mxu0
        %v2049 = vadd.f32 %v422, %v2048
        %v2050 = vpop.f32.mrf.mxu0
        %v2051 = vpop.f32.mrf.mxu0
        %v2052 = vpop.f32.mrf.mxu0
        %2053 = vdwg.mxu0
        %v2054 = vmax.f32 %v2049, 0.0
        %v2055 = vmax.f32 %v2008, %v2054
        %s2056 = scalar_lea.vmem %s357, 72 [#allocation2]
        %v2057 = vld [vmem:[%s2056] sm:$0xf]
        %v2059 = vsel %vm445, %v2057, 0
        %2061 = vmatprep.subr.bf16.mxu0 0
        %2062 = vmatpush1.bf16.msra.mxu0 0
        %2063 = vmatprep.subr.bf16.mxu0 0
        %2064 = vmatpush1.bf16.msra.mxu0 0
        %2065 = vmatprep.subr.bf16.mxu0 0
        %2066 = vmatpush1.bf16.msra.mxu0 0
        %2067 = vmatprep.subr.bf16.mxu0 0
        %2068 = vmatpush1.bf16.msra.mxu0 0
        %2069 = vmatprep.subr.bf16.mxu0 0
        %2070 = vmatpush1.bf16.msra.mxu0 %v451
        %2071 = vmatprep.subr.bf16.mxu0 0
        %2072 = vmatpush1.bf16.msra.mxu0 %v440
        %2073 = vmatprep.subr.bf16.mxu0 0
        %2074 = vmatpush1.bf16.msra.mxu0 %v439
        %2075 = vmatprep.subr.bf16.mxu0 0
        %2076 = vmatpush1.bf16.msra.mxu0 %v438
        %2077 = vmatprep.subr.bf16.mxu0 0
        %2078 = vmatpush2.bf16.msra.mxu0 0
        %2079 = vmatprep.subr.bf16.mxu0 0
        %2080 = vmatpush2.bf16.msra.mxu0 0
        %2081 = vmatprep.subr.bf16.mxu0 0
        %2082 = vmatpush2.bf16.msra.mxu0 0
        %2083 = vmatprep.subr.bf16.mxu0 0
        %2084 = vmatpush2.bf16.msra.mxu0 0
        %2085 = vmatprep.subr.bf16.mxu0 0
        %2086 = vmatpush2.bf16.msra.mxu0 0
        %2087 = vmatprep.subr.bf16.mxu0 0
        %2088 = vmatpush2.bf16.msra.mxu0 0
        %2089 = vmatprep.subr.bf16.mxu0 0
        %2090 = vmatpush2.bf16.msra.mxu0 0
        %2091 = vmatprep.subr.bf16.mxu0 0
        %2092 = vmatpush2.bf16.msra.mxu0 0
        %2093 = vmatprep.mubr.bf16.mxu0 0
        %2094 = vmatmul.mubr.bf16.gmra.mxu0 %v2059
        %v2095 = vpop.f32.mrf.mxu0
        %v2096 = vadd.f32 %v422, %v2095
        %v2097 = vpop.f32.mrf.mxu0
        %v2098 = vpop.f32.mrf.mxu0
        %v2099 = vpop.f32.mrf.mxu0
        %2100 = vdwg.mxu0
        %v2101 = vmax.f32 %v2096, 0.0
        %v2102 = vmax.f32 %v2055, %v2101
        %s2103 = scalar_lea.vmem %s357, 76 [#allocation2]
        %v2104 = vld [vmem:[%s2103] sm:$0xf]
        %v2106 = vsel %vm445, %v2104, 0
        %2108 = vmatprep.subr.bf16.mxu0 0
        %2109 = vmatpush1.bf16.msra.mxu0 0
        %2110 = vmatprep.subr.bf16.mxu0 0
        %2111 = vmatpush1.bf16.msra.mxu0 0
        %2112 = vmatprep.subr.bf16.mxu0 0
        %2113 = vmatpush1.bf16.msra.mxu0 0
        %2114 = vmatprep.subr.bf16.mxu0 0
        %2115 = vmatpush1.bf16.msra.mxu0 0
        %2116 = vmatprep.subr.bf16.mxu0 0
        %2117 = vmatpush1.bf16.msra.mxu0 %v451
        %2118 = vmatprep.subr.bf16.mxu0 0
        %2119 = vmatpush1.bf16.msra.mxu0 %v440
        %2120 = vmatprep.subr.bf16.mxu0 0
        %2121 = vmatpush1.bf16.msra.mxu0 %v439
        %2122 = vmatprep.subr.bf16.mxu0 0
        %2123 = vmatpush1.bf16.msra.mxu0 %v438
        %2124 = vmatprep.subr.bf16.mxu0 0
        %2125 = vmatpush2.bf16.msra.mxu0 0
        %2126 = vmatprep.subr.bf16.mxu0 0
        %2127 = vmatpush2.bf16.msra.mxu0 0
        %2128 = vmatprep.subr.bf16.mxu0 0
        %2129 = vmatpush2.bf16.msra.mxu0 0
        %2130 = vmatprep.subr.bf16.mxu0 0
        %2131 = vmatpush2.bf16.msra.mxu0 0
        %2132 = vmatprep.subr.bf16.mxu0 0
        %2133 = vmatpush2.bf16.msra.mxu0 0
        %2134 = vmatprep.subr.bf16.mxu0 0
        %2135 = vmatpush2.bf16.msra.mxu0 0
        %2136 = vmatprep.subr.bf16.mxu0 0
        %2137 = vmatpush2.bf16.msra.mxu0 0
        %2138 = vmatprep.subr.bf16.mxu0 0
        %2139 = vmatpush2.bf16.msra.mxu0 0
        %2140 = vmatprep.mubr.bf16.mxu0 0
        %2141 = vmatmul.mubr.bf16.gmra.mxu0 %v2106
        %v2142 = vpop.f32.mrf.mxu0
        %v2143 = vadd.f32 %v422, %v2142
        %v2144 = vpop.f32.mrf.mxu0
        %v2145 = vpop.f32.mrf.mxu0
        %v2146 = vpop.f32.mrf.mxu0
        %2147 = vdwg.mxu0
        %v2148 = vmax.f32 %v2143, 0.0
        %v2149 = vmax.f32 %v2102, %v2148
        %v2150 = vpack.c.bf16 %v2149, %v2149
        %s2151 = scalar_lea.vmem [#allocation7], 420
        %v2152 = vld [vmem:[%s2151] sm:$0xff]
        %v2153 = vld [vmem:[%s2151 + $0x8] sm:$0xff]
        %v2154 = vld [vmem:[%s2151 + $0x10] sm:$0xf]
        %v2155 = vld [vmem:[%s2151 + $0x14] sm:$0xff]
        %v2156 = vld [vmem:[%s2151 + $0x1c] sm:$0xff]
        %v2157 = vld [vmem:[%s2151 + $0x24] sm:$0xf]
        %v2158 = vld [vmem:[%s2151 + $0x28] sm:$0xff]
        %v2159 = vld [vmem:[%s2151 + $0x30] sm:$0xff]
        %v2160 = vld [vmem:[%s2151 + $0x38] sm:$0xf]
        %v2161 = vld [vmem:[%s2151 + $0x3c] sm:$0xff]
        %v2162 = vld [vmem:[%s2151 + $0x44] sm:$0xff]
        %v2163 = vld [vmem:[%s2151 + $0x4c] sm:$0xf]
        %v2164 = vld [vmem:[%s2151 + $0x50] sm:$0xff]
        %v2165 = vld [vmem:[%s2151 + $0x58] sm:$0xff]
        %v2166 = vld [vmem:[%s2151 + $0x60] sm:$0xf]
        %v2167 = vld [vmem:[%s2151 + $0x64] sm:$0xff]
        %v2168 = vld [vmem:[%s2151 + $0x6c] sm:$0xff]
        %v2169 = vld [vmem:[%s2151 + $0x74] sm:$0xf]
        %v2170 = vld [vmem:[%s2151 + $0x78] sm:$0x11]
        %v2171 = vld [vmem:[%s2151 + $0x80] sm:$0x11]
        %v2172 = vld [vmem:[%s2151 + $0x88] sm:$0x1]
        %v2194 = vunpack.c.l.b16 %v2152
        %v2195 = vunpack.c.h.b16 %v2152
        %v2196 = vunpack.c.l.b16 %v2153
        %v2197 = vunpack.c.h.b16 %v2153
        %v2198 = vunpack.c.l.b16 %v2154
        %v2199 = vunpack.c.l.b16 %v2155
        %v2200 = vunpack.c.h.b16 %v2155
        %v2201 = vunpack.c.l.b16 %v2156
        %v2202 = vunpack.c.h.b16 %v2156
        %v2203 = vunpack.c.l.b16 %v2157
        %v2204 = vunpack.c.l.b16 %v2158
        %v2205 = vunpack.c.h.b16 %v2158
        %v2206 = vunpack.c.l.b16 %v2159
        %v2207 = vunpack.c.h.b16 %v2159
        %v2208 = vunpack.c.l.b16 %v2160
        %v2209 = vunpack.c.l.b16 %v2161
        %v2210 = vunpack.c.h.b16 %v2161
        %v2211 = vunpack.c.l.b16 %v2162
        %v2212 = vunpack.c.h.b16 %v2162
        %v2213 = vunpack.c.l.b16 %v2163
        %v2214 = vunpack.c.l.b16 %v2164
        %v2215 = vunpack.c.h.b16 %v2164
        %v2216 = vunpack.c.l.b16 %v2165
        %v2217 = vunpack.c.h.b16 %v2165
        %v2218 = vunpack.c.l.b16 %v2166
        %v2219 = vunpack.c.l.b16 %v2167
        %v2220 = vunpack.c.h.b16 %v2167
        %v2221 = vunpack.c.l.b16 %v2168
        %v2222 = vunpack.c.h.b16 %v2168
        %v2223 = vunpack.c.l.b16 %v2169
        %v2224 = vunpack.c.l.b16 %v2170
        %v2225 = vunpack.c.h.b16 %v2170
        %v2226 = vunpack.c.l.b16 %v2171
        %v2227 = vunpack.c.h.b16 %v2171
        %v2228 = vunpack.c.l.b16 %v2172
        %v2229 = vpack.c.b16 %v2199, %v2194
        %v2230 = vpack.c.b16 %v2200, %v2195
        %v2231 = vpack.c.b16 %v2201, %v2196
        %v2232 = vpack.c.b16 %v2202, %v2197
        %v2233 = vpack.c.b16 %v2203, %v2198
        %v2234 = vpack.c.b16 %v2209, %v2204
        %v2235 = vpack.c.b16 %v2210, %v2205
        %v2236 = vpack.c.b16 %v2211, %v2206
        %v2237 = vpack.c.b16 %v2212, %v2207
        %v2238 = vpack.c.b16 %v2213, %v2208
        %v2239 = vpack.c.b16 %v2219, %v2214
        %v2240 = vpack.c.b16 %v2220, %v2215
        %v2241 = vpack.c.b16 %v2221, %v2216
        %v2242 = vpack.c.b16 %v2222, %v2217
        %v2243 = vpack.c.b16 %v2223, %v2218
        %v2244 = vpack.c.b16 %v2224, %v2224
        %v2245 = vpack.c.b16 %v2225, %v2225
        %v2246 = vpack.c.b16 %v2226, %v2226
        %v2247 = vpack.c.b16 %v2227, %v2227
        %v2248 = vpack.c.b16 %v2228, %v2228
        %v2265 = vsel %vm445, %v2150, 0
        %v2268 = vsel %vm449, %v2244, 0
        %v2271 = vsel %vm449, %v2245, 0
        %v2274 = vsel %vm449, %v2246, 0
        %v2277 = vsel %vm449, %v2247, 0
        %v2280 = vsel %vm449, %v2248, 0
        %2282 = vmatprep.subr.bf16.mxu0 0
        %2283 = vmatpush1.bf16.msra.mxu0 0
        %2284 = vmatprep.subr.bf16.mxu0 0
        %2285 = vmatpush1.bf16.msra.mxu0 0
        %2286 = vmatprep.subr.bf16.mxu0 0
        %2287 = vmatpush1.bf16.msra.mxu0 0
        %2288 = vmatprep.subr.bf16.mxu0 0
        %2289 = vmatpush1.bf16.msra.mxu0 0
        %2290 = vmatprep.subr.bf16.mxu0 %v2271
        %2291 = vmatpush1.bf16.msra.mxu0 %v2268
        %2292 = vmatprep.subr.bf16.mxu0 %v2240
        %2293 = vmatpush1.bf16.msra.mxu0 %v2239
        %2294 = vmatprep.subr.bf16.mxu0 %v2235
        %2295 = vmatpush1.bf16.msra.mxu0 %v2234
        %2296 = vmatprep.subr.bf16.mxu0 %v2230
        %2297 = vmatpush1.bf16.msra.mxu0 %v2229
        %2298 = vmatprep.subr.bf16.mxu0 0
        %2299 = vmatpush2.bf16.msra.mxu0 0
        %2300 = vmatprep.subr.bf16.mxu0 0
        %2301 = vmatpush2.bf16.msra.mxu0 0
        %2302 = vmatprep.subr.bf16.mxu0 0
        %2303 = vmatpush2.bf16.msra.mxu0 0
        %2304 = vmatprep.subr.bf16.mxu0 0
        %2305 = vmatpush2.bf16.msra.mxu0 0
        %2306 = vmatprep.subr.bf16.mxu0 0
        %2307 = vmatpush2.bf16.msra.mxu0 0
        %2308 = vmatprep.subr.bf16.mxu0 0
        %2309 = vmatpush2.bf16.msra.mxu0 0
        %2310 = vmatprep.subr.bf16.mxu0 0
        %2311 = vmatpush2.bf16.msra.mxu0 0
        %2312 = vmatprep.subr.bf16.mxu0 0
        %2313 = vmatpush2.bf16.msra.mxu0 0
        %2314 = vmatprep.mubr.bf16.mxu0 0
        %2315 = vmatmul.mubr.bf16.gmra.mxu0 %v2265
        %v2316 = vpop.f32.mrf.mxu0
        %v2317 = vadd.f32 0.0, %v2316
        %v2318 = vpop.f32.mrf.mxu0
        %v2319 = vadd.f32 0.0, %v2318
        %v2320 = vpop.f32.mrf.mxu0
        %v2321 = vpop.f32.mrf.mxu0
        %2322 = vdwg.mxu0
        %2323 = vmatprep.subr.bf16.mxu0 0
        %2324 = vmatpush1.bf16.msra.mxu0 0
        %2325 = vmatprep.subr.bf16.mxu0 0
        %2326 = vmatpush1.bf16.msra.mxu0 0
        %2327 = vmatprep.subr.bf16.mxu0 0
        %2328 = vmatpush1.bf16.msra.mxu0 0
        %2329 = vmatprep.subr.bf16.mxu0 0
        %2330 = vmatpush1.bf16.msra.mxu0 0
        %2331 = vmatprep.subr.bf16.mxu0 %v2277
        %2332 = vmatpush1.bf16.msra.mxu0 %v2274
        %2333 = vmatprep.subr.bf16.mxu0 %v2242
        %2334 = vmatpush1.bf16.msra.mxu0 %v2241
        %2335 = vmatprep.subr.bf16.mxu0 %v2237
        %2336 = vmatpush1.bf16.msra.mxu0 %v2236
        %2337 = vmatprep.subr.bf16.mxu0 %v2232
        %2338 = vmatpush1.bf16.msra.mxu0 %v2231
        %2339 = vmatprep.subr.bf16.mxu0 0
        %2340 = vmatpush2.bf16.msra.mxu0 0
        %2341 = vmatprep.subr.bf16.mxu0 0
        %2342 = vmatpush2.bf16.msra.mxu0 0
        %2343 = vmatprep.subr.bf16.mxu0 0
        %2344 = vmatpush2.bf16.msra.mxu0 0
        %2345 = vmatprep.subr.bf16.mxu0 0
        %2346 = vmatpush2.bf16.msra.mxu0 0
        %2347 = vmatprep.subr.bf16.mxu0 0
        %2348 = vmatpush2.bf16.msra.mxu0 0
        %2349 = vmatprep.subr.bf16.mxu0 0
        %2350 = vmatpush2.bf16.msra.mxu0 0
        %2351 = vmatprep.subr.bf16.mxu0 0
        %2352 = vmatpush2.bf16.msra.mxu0 0
        %2353 = vmatprep.subr.bf16.mxu0 0
        %2354 = vmatpush2.bf16.msra.mxu0 0
        %2355 = vmatprep.mubr.bf16.mxu0 0
        %2356 = vmatmul.mubr.bf16.gmra.mxu0 %v2265
        %v2357 = vpop.f32.mrf.mxu0
        %v2358 = vadd.f32 0.0, %v2357
        %v2359 = vpop.f32.mrf.mxu0
        %v2360 = vadd.f32 0.0, %v2359
        %v2361 = vpop.f32.mrf.mxu0
        %v2362 = vpop.f32.mrf.mxu0
        %2363 = vdwg.mxu0
        %2364 = vmatprep.subr.bf16.mxu0 0
        %2365 = vmatpush1.bf16.msra.mxu0 0
        %2366 = vmatprep.subr.bf16.mxu0 0
        %2367 = vmatpush1.bf16.msra.mxu0 0
        %2368 = vmatprep.subr.bf16.mxu0 0
        %2369 = vmatpush1.bf16.msra.mxu0 0
        %2370 = vmatprep.subr.bf16.mxu0 0
        %2371 = vmatpush1.bf16.msra.mxu0 0
        %2372 = vmatprep.subr.bf16.mxu0 0
        %2373 = vmatpush1.bf16.msra.mxu0 %v2280
        %2374 = vmatprep.subr.bf16.mxu0 0
        %2375 = vmatpush1.bf16.msra.mxu0 %v2243
        %2376 = vmatprep.subr.bf16.mxu0 0
        %2377 = vmatpush1.bf16.msra.mxu0 %v2238
        %2378 = vmatprep.subr.bf16.mxu0 0
        %2379 = vmatpush1.bf16.msra.mxu0 %v2233
        %2380 = vmatprep.subr.bf16.mxu0 0
        %2381 = vmatpush2.bf16.msra.mxu0 0
        %2382 = vmatprep.subr.bf16.mxu0 0
        %2383 = vmatpush2.bf16.msra.mxu0 0
        %2384 = vmatprep.subr.bf16.mxu0 0
        %2385 = vmatpush2.bf16.msra.mxu0 0
        %2386 = vmatprep.subr.bf16.mxu0 0
        %2387 = vmatpush2.bf16.msra.mxu0 0
        %2388 = vmatprep.subr.bf16.mxu0 0
        %2389 = vmatpush2.bf16.msra.mxu0 0
        %2390 = vmatprep.subr.bf16.mxu0 0
        %2391 = vmatpush2.bf16.msra.mxu0 0
        %2392 = vmatprep.subr.bf16.mxu0 0
        %2393 = vmatpush2.bf16.msra.mxu0 0
        %2394 = vmatprep.subr.bf16.mxu0 0
        %2395 = vmatpush2.bf16.msra.mxu0 0
        %2396 = vmatprep.mubr.bf16.mxu0 0
        %2397 = vmatmul.mubr.bf16.gmra.mxu0 %v2265
        %v2398 = vpop.f32.mrf.mxu0
        %v2399 = vadd.f32 0.0, %v2398
        %v2400 = vpop.f32.mrf.mxu0
        %v2401 = vpop.f32.mrf.mxu0
        %v2402 = vpop.f32.mrf.mxu0
        %2403 = vdwg.mxu0
        %v2404 = vadd.f32 %v1911, %v2317
        %v2405 = vadd.f32 %v1912, %v2319
        %v2406 = vadd.f32 %v1913, %v2358
        %v2407 = vadd.f32 %v1914, %v2360
        %v2408 = vadd.f32 %v1915, %v2399
        %s2409 = scalar_lea.vmem %s357, 80 [#allocation2]
        %v2410 = vld [vmem:[%s2409] sm:$0xf]
        %v2412 = vsel %vm445, %v2410, 0
        %2414 = vmatprep.subr.bf16.mxu0 0
        %2415 = vmatpush1.bf16.msra.mxu0 0
        %2416 = vmatprep.subr.bf16.mxu0 0
        %2417 = vmatpush1.bf16.msra.mxu0 0
        %2418 = vmatprep.subr.bf16.mxu0 0
        %2419 = vmatpush1.bf16.msra.mxu0 0
        %2420 = vmatprep.subr.bf16.mxu0 0
        %2421 = vmatpush1.bf16.msra.mxu0 0
        %2422 = vmatprep.subr.bf16.mxu0 0
        %2423 = vmatpush1.bf16.msra.mxu0 %v451
        %2424 = vmatprep.subr.bf16.mxu0 0
        %2425 = vmatpush1.bf16.msra.mxu0 %v440
        %2426 = vmatprep.subr.bf16.mxu0 0
        %2427 = vmatpush1.bf16.msra.mxu0 %v439
        %2428 = vmatprep.subr.bf16.mxu0 0
        %2429 = vmatpush1.bf16.msra.mxu0 %v438
        %2430 = vmatprep.subr.bf16.mxu0 0
        %2431 = vmatpush2.bf16.msra.mxu0 0
        %2432 = vmatprep.subr.bf16.mxu0 0
        %2433 = vmatpush2.bf16.msra.mxu0 0
        %2434 = vmatprep.subr.bf16.mxu0 0
        %2435 = vmatpush2.bf16.msra.mxu0 0
        %2436 = vmatprep.subr.bf16.mxu0 0
        %2437 = vmatpush2.bf16.msra.mxu0 0
        %2438 = vmatprep.subr.bf16.mxu0 0
        %2439 = vmatpush2.bf16.msra.mxu0 0
        %2440 = vmatprep.subr.bf16.mxu0 0
        %2441 = vmatpush2.bf16.msra.mxu0 0
        %2442 = vmatprep.subr.bf16.mxu0 0
        %2443 = vmatpush2.bf16.msra.mxu0 0
        %2444 = vmatprep.subr.bf16.mxu0 0
        %2445 = vmatpush2.bf16.msra.mxu0 0
        %2446 = vmatprep.mubr.bf16.mxu0 0
        %2447 = vmatmul.mubr.bf16.gmra.mxu0 %v2412
        %v2448 = vpop.f32.mrf.mxu0
        %v2449 = vadd.f32 %v422, %v2448
        %v2450 = vpop.f32.mrf.mxu0
        %v2451 = vpop.f32.mrf.mxu0
        %v2452 = vpop.f32.mrf.mxu0
        %2453 = vdwg.mxu0
        %v2454 = vmax.f32 %v2449, 0.0
        %s2455 = scalar_lea.vmem %s357, 84 [#allocation2]
        %v2456 = vld [vmem:[%s2455] sm:$0xf]
        %v2458 = vsel %vm445, %v2456, 0
        %2460 = vmatprep.subr.bf16.mxu0 0
        %2461 = vmatpush1.bf16.msra.mxu0 0
        %2462 = vmatprep.subr.bf16.mxu0 0
        %2463 = vmatpush1.bf16.msra.mxu0 0
        %2464 = vmatprep.subr.bf16.mxu0 0
        %2465 = vmatpush1.bf16.msra.mxu0 0
        %2466 = vmatprep.subr.bf16.mxu0 0
        %2467 = vmatpush1.bf16.msra.mxu0 0
        %2468 = vmatprep.subr.bf16.mxu0 0
        %2469 = vmatpush1.bf16.msra.mxu0 %v451
        %2470 = vmatprep.subr.bf16.mxu0 0
        %2471 = vmatpush1.bf16.msra.mxu0 %v440
        %2472 = vmatprep.subr.bf16.mxu0 0
        %2473 = vmatpush1.bf16.msra.mxu0 %v439
        %2474 = vmatprep.subr.bf16.mxu0 0
        %2475 = vmatpush1.bf16.msra.mxu0 %v438
        %2476 = vmatprep.subr.bf16.mxu0 0
        %2477 = vmatpush2.bf16.msra.mxu0 0
        %2478 = vmatprep.subr.bf16.mxu0 0
        %2479 = vmatpush2.bf16.msra.mxu0 0
        %2480 = vmatprep.subr.bf16.mxu0 0
        %2481 = vmatpush2.bf16.msra.mxu0 0
        %2482 = vmatprep.subr.bf16.mxu0 0
        %2483 = vmatpush2.bf16.msra.mxu0 0
        %2484 = vmatprep.subr.bf16.mxu0 0
        %2485 = vmatpush2.bf16.msra.mxu0 0
        %2486 = vmatprep.subr.bf16.mxu0 0
        %2487 = vmatpush2.bf16.msra.mxu0 0
        %2488 = vmatprep.subr.bf16.mxu0 0
        %2489 = vmatpush2.bf16.msra.mxu0 0
        %2490 = vmatprep.subr.bf16.mxu0 0
        %2491 = vmatpush2.bf16.msra.mxu0 0
        %2492 = vmatprep.mubr.bf16.mxu0 0
        %2493 = vmatmul.mubr.bf16.gmra.mxu0 %v2458
        %v2494 = vpop.f32.mrf.mxu0
        %v2495 = vadd.f32 %v422, %v2494
        %v2496 = vpop.f32.mrf.mxu0
        %v2497 = vpop.f32.mrf.mxu0
        %v2498 = vpop.f32.mrf.mxu0
        %2499 = vdwg.mxu0
        %v2500 = vmax.f32 %v2495, 0.0
        %v2501 = vmax.f32 %v2454, %v2500
        %s2502 = scalar_lea.vmem %s357, 88 [#allocation2]
        %v2503 = vld [vmem:[%s2502] sm:$0xf]
        %v2505 = vsel %vm445, %v2503, 0
        %2507 = vmatprep.subr.bf16.mxu0 0
        %2508 = vmatpush1.bf16.msra.mxu0 0
        %2509 = vmatprep.subr.bf16.mxu0 0
        %2510 = vmatpush1.bf16.msra.mxu0 0
        %2511 = vmatprep.subr.bf16.mxu0 0
        %2512 = vmatpush1.bf16.msra.mxu0 0
        %2513 = vmatprep.subr.bf16.mxu0 0
        %2514 = vmatpush1.bf16.msra.mxu0 0
        %2515 = vmatprep.subr.bf16.mxu0 0
        %2516 = vmatpush1.bf16.msra.mxu0 %v451
        %2517 = vmatprep.subr.bf16.mxu0 0
        %2518 = vmatpush1.bf16.msra.mxu0 %v440
        %2519 = vmatprep.subr.bf16.mxu0 0
        %2520 = vmatpush1.bf16.msra.mxu0 %v439
        %2521 = vmatprep.subr.bf16.mxu0 0
        %2522 = vmatpush1.bf16.msra.mxu0 %v438
        %2523 = vmatprep.subr.bf16.mxu0 0
        %2524 = vmatpush2.bf16.msra.mxu0 0
        %2525 = vmatprep.subr.bf16.mxu0 0
        %2526 = vmatpush2.bf16.msra.mxu0 0
        %2527 = vmatprep.subr.bf16.mxu0 0
        %2528 = vmatpush2.bf16.msra.mxu0 0
        %2529 = vmatprep.subr.bf16.mxu0 0
        %2530 = vmatpush2.bf16.msra.mxu0 0
        %2531 = vmatprep.subr.bf16.mxu0 0
        %2532 = vmatpush2.bf16.msra.mxu0 0
        %2533 = vmatprep.subr.bf16.mxu0 0
        %2534 = vmatpush2.bf16.msra.mxu0 0
        %2535 = vmatprep.subr.bf16.mxu0 0
        %2536 = vmatpush2.bf16.msra.mxu0 0
        %2537 = vmatprep.subr.bf16.mxu0 0
        %2538 = vmatpush2.bf16.msra.mxu0 0
        %2539 = vmatprep.mubr.bf16.mxu0 0
        %2540 = vmatmul.mubr.bf16.gmra.mxu0 %v2505
        %v2541 = vpop.f32.mrf.mxu0
        %v2542 = vadd.f32 %v422, %v2541
        %v2543 = vpop.f32.mrf.mxu0
        %v2544 = vpop.f32.mrf.mxu0
        %v2545 = vpop.f32.mrf.mxu0
        %2546 = vdwg.mxu0
        %v2547 = vmax.f32 %v2542, 0.0
        %v2548 = vmax.f32 %v2501, %v2547
        %s2549 = scalar_lea.vmem %s357, 92 [#allocation2]
        %v2550 = vld [vmem:[%s2549] sm:$0xf]
        %v2552 = vsel %vm445, %v2550, 0
        %2554 = vmatprep.subr.bf16.mxu0 0
        %2555 = vmatpush1.bf16.msra.mxu0 0
        %2556 = vmatprep.subr.bf16.mxu0 0
        %2557 = vmatpush1.bf16.msra.mxu0 0
        %2558 = vmatprep.subr.bf16.mxu0 0
        %2559 = vmatpush1.bf16.msra.mxu0 0
        %2560 = vmatprep.subr.bf16.mxu0 0
        %2561 = vmatpush1.bf16.msra.mxu0 0
        %2562 = vmatprep.subr.bf16.mxu0 0
        %2563 = vmatpush1.bf16.msra.mxu0 %v451
        %2564 = vmatprep.subr.bf16.mxu0 0
        %2565 = vmatpush1.bf16.msra.mxu0 %v440
        %2566 = vmatprep.subr.bf16.mxu0 0
        %2567 = vmatpush1.bf16.msra.mxu0 %v439
        %2568 = vmatprep.subr.bf16.mxu0 0
        %2569 = vmatpush1.bf16.msra.mxu0 %v438
        %2570 = vmatprep.subr.bf16.mxu0 0
        %2571 = vmatpush2.bf16.msra.mxu0 0
        %2572 = vmatprep.subr.bf16.mxu0 0
        %2573 = vmatpush2.bf16.msra.mxu0 0
        %2574 = vmatprep.subr.bf16.mxu0 0
        %2575 = vmatpush2.bf16.msra.mxu0 0
        %2576 = vmatprep.subr.bf16.mxu0 0
        %2577 = vmatpush2.bf16.msra.mxu0 0
        %2578 = vmatprep.subr.bf16.mxu0 0
        %2579 = vmatpush2.bf16.msra.mxu0 0
        %2580 = vmatprep.subr.bf16.mxu0 0
        %2581 = vmatpush2.bf16.msra.mxu0 0
        %2582 = vmatprep.subr.bf16.mxu0 0
        %2583 = vmatpush2.bf16.msra.mxu0 0
        %2584 = vmatprep.subr.bf16.mxu0 0
        %2585 = vmatpush2.bf16.msra.mxu0 0
        %2586 = vmatprep.mubr.bf16.mxu0 0
        %2587 = vmatmul.mubr.bf16.gmra.mxu0 %v2552
        %v2588 = vpop.f32.mrf.mxu0
        %v2589 = vadd.f32 %v422, %v2588
        %v2590 = vpop.f32.mrf.mxu0
        %v2591 = vpop.f32.mrf.mxu0
        %v2592 = vpop.f32.mrf.mxu0
        %2593 = vdwg.mxu0
        %v2594 = vmax.f32 %v2589, 0.0
        %v2595 = vmax.f32 %v2548, %v2594
        %s2596 = scalar_lea.vmem %s357, 96 [#allocation2]
        %v2597 = vld [vmem:[%s2596] sm:$0xf]
        %v2599 = vsel %vm445, %v2597, 0
        %2601 = vmatprep.subr.bf16.mxu0 0
        %2602 = vmatpush1.bf16.msra.mxu0 0
        %2603 = vmatprep.subr.bf16.mxu0 0
        %2604 = vmatpush1.bf16.msra.mxu0 0
        %2605 = vmatprep.subr.bf16.mxu0 0
        %2606 = vmatpush1.bf16.msra.mxu0 0
        %2607 = vmatprep.subr.bf16.mxu0 0
        %2608 = vmatpush1.bf16.msra.mxu0 0
        %2609 = vmatprep.subr.bf16.mxu0 0
        %2610 = vmatpush1.bf16.msra.mxu0 %v451
        %2611 = vmatprep.subr.bf16.mxu0 0
        %2612 = vmatpush1.bf16.msra.mxu0 %v440
        %2613 = vmatprep.subr.bf16.mxu0 0
        %2614 = vmatpush1.bf16.msra.mxu0 %v439
        %2615 = vmatprep.subr.bf16.mxu0 0
        %2616 = vmatpush1.bf16.msra.mxu0 %v438
        %2617 = vmatprep.subr.bf16.mxu0 0
        %2618 = vmatpush2.bf16.msra.mxu0 0
        %2619 = vmatprep.subr.bf16.mxu0 0
        %2620 = vmatpush2.bf16.msra.mxu0 0
        %2621 = vmatprep.subr.bf16.mxu0 0
        %2622 = vmatpush2.bf16.msra.mxu0 0
        %2623 = vmatprep.subr.bf16.mxu0 0
        %2624 = vmatpush2.bf16.msra.mxu0 0
        %2625 = vmatprep.subr.bf16.mxu0 0
        %2626 = vmatpush2.bf16.msra.mxu0 0
        %2627 = vmatprep.subr.bf16.mxu0 0
        %2628 = vmatpush2.bf16.msra.mxu0 0
        %2629 = vmatprep.subr.bf16.mxu0 0
        %2630 = vmatpush2.bf16.msra.mxu0 0
        %2631 = vmatprep.subr.bf16.mxu0 0
        %2632 = vmatpush2.bf16.msra.mxu0 0
        %2633 = vmatprep.mubr.bf16.mxu0 0
        %2634 = vmatmul.mubr.bf16.gmra.mxu0 %v2599
        %v2635 = vpop.f32.mrf.mxu0
        %v2636 = vadd.f32 %v422, %v2635
        %v2637 = vpop.f32.mrf.mxu0
        %v2638 = vpop.f32.mrf.mxu0
        %v2639 = vpop.f32.mrf.mxu0
        %2640 = vdwg.mxu0
        %v2641 = vmax.f32 %v2636, 0.0
        %v2642 = vmax.f32 %v2595, %v2641
        %v2643 = vpack.c.bf16 %v2642, %v2642
        %s2644 = scalar_lea.vmem [#allocation7], 560
        %v2645 = vld [vmem:[%s2644] sm:$0xff]
        %v2646 = vld [vmem:[%s2644 + $0x8] sm:$0xff]
        %v2647 = vld [vmem:[%s2644 + $0x10] sm:$0xf]
        %v2648 = vld [vmem:[%s2644 + $0x14] sm:$0xff]
        %v2649 = vld [vmem:[%s2644 + $0x1c] sm:$0xff]
        %v2650 = vld [vmem:[%s2644 + $0x24] sm:$0xf]
        %v2651 = vld [vmem:[%s2644 + $0x28] sm:$0xff]
        %v2652 = vld [vmem:[%s2644 + $0x30] sm:$0xff]
        %v2653 = vld [vmem:[%s2644 + $0x38] sm:$0xf]
        %v2654 = vld [vmem:[%s2644 + $0x3c] sm:$0xff]
        %v2655 = vld [vmem:[%s2644 + $0x44] sm:$0xff]
        %v2656 = vld [vmem:[%s2644 + $0x4c] sm:$0xf]
        %v2657 = vld [vmem:[%s2644 + $0x50] sm:$0xff]
        %v2658 = vld [vmem:[%s2644 + $0x58] sm:$0xff]
        %v2659 = vld [vmem:[%s2644 + $0x60] sm:$0xf]
        %v2660 = vld [vmem:[%s2644 + $0x64] sm:$0xff]
        %v2661 = vld [vmem:[%s2644 + $0x6c] sm:$0xff]
        %v2662 = vld [vmem:[%s2644 + $0x74] sm:$0xf]
        %v2663 = vld [vmem:[%s2644 + $0x78] sm:$0x11]
        %v2664 = vld [vmem:[%s2644 + $0x80] sm:$0x11]
        %v2665 = vld [vmem:[%s2644 + $0x88] sm:$0x1]
        %v2687 = vunpack.c.l.b16 %v2645
        %v2688 = vunpack.c.h.b16 %v2645
        %v2689 = vunpack.c.l.b16 %v2646
        %v2690 = vunpack.c.h.b16 %v2646
        %v2691 = vunpack.c.l.b16 %v2647
        %v2692 = vunpack.c.l.b16 %v2648
        %v2693 = vunpack.c.h.b16 %v2648
        %v2694 = vunpack.c.l.b16 %v2649
        %v2695 = vunpack.c.h.b16 %v2649
        %v2696 = vunpack.c.l.b16 %v2650
        %v2697 = vunpack.c.l.b16 %v2651
        %v2698 = vunpack.c.h.b16 %v2651
        %v2699 = vunpack.c.l.b16 %v2652
        %v2700 = vunpack.c.h.b16 %v2652
        %v2701 = vunpack.c.l.b16 %v2653
        %v2702 = vunpack.c.l.b16 %v2654
        %v2703 = vunpack.c.h.b16 %v2654
        %v2704 = vunpack.c.l.b16 %v2655
        %v2705 = vunpack.c.h.b16 %v2655
        %v2706 = vunpack.c.l.b16 %v2656
        %v2707 = vunpack.c.l.b16 %v2657
        %v2708 = vunpack.c.h.b16 %v2657
        %v2709 = vunpack.c.l.b16 %v2658
        %v2710 = vunpack.c.h.b16 %v2658
        %v2711 = vunpack.c.l.b16 %v2659
        %v2712 = vunpack.c.l.b16 %v2660
        %v2713 = vunpack.c.h.b16 %v2660
        %v2714 = vunpack.c.l.b16 %v2661
        %v2715 = vunpack.c.h.b16 %v2661
        %v2716 = vunpack.c.l.b16 %v2662
        %v2717 = vunpack.c.l.b16 %v2663
        %v2718 = vunpack.c.h.b16 %v2663
        %v2719 = vunpack.c.l.b16 %v2664
        %v2720 = vunpack.c.h.b16 %v2664
        %v2721 = vunpack.c.l.b16 %v2665
        %v2722 = vpack.c.b16 %v2692, %v2687
        %v2723 = vpack.c.b16 %v2693, %v2688
        %v2724 = vpack.c.b16 %v2694, %v2689
        %v2725 = vpack.c.b16 %v2695, %v2690
        %v2726 = vpack.c.b16 %v2696, %v2691
        %v2727 = vpack.c.b16 %v2702, %v2697
        %v2728 = vpack.c.b16 %v2703, %v2698
        %v2729 = vpack.c.b16 %v2704, %v2699
        %v2730 = vpack.c.b16 %v2705, %v2700
        %v2731 = vpack.c.b16 %v2706, %v2701
        %v2732 = vpack.c.b16 %v2712, %v2707
        %v2733 = vpack.c.b16 %v2713, %v2708
        %v2734 = vpack.c.b16 %v2714, %v2709
        %v2735 = vpack.c.b16 %v2715, %v2710
        %v2736 = vpack.c.b16 %v2716, %v2711
        %v2737 = vpack.c.b16 %v2717, %v2717
        %v2738 = vpack.c.b16 %v2718, %v2718
        %v2739 = vpack.c.b16 %v2719, %v2719
        %v2740 = vpack.c.b16 %v2720, %v2720
        %v2741 = vpack.c.b16 %v2721, %v2721
        %v2758 = vsel %vm445, %v2643, 0
        %v2761 = vsel %vm449, %v2737, 0
        %v2764 = vsel %vm449, %v2738, 0
        %v2767 = vsel %vm449, %v2739, 0
        %v2770 = vsel %vm449, %v2740, 0
        %v2773 = vsel %vm449, %v2741, 0
        %2775 = vmatprep.subr.bf16.mxu0 0
        %2776 = vmatpush1.bf16.msra.mxu0 0
        %2777 = vmatprep.subr.bf16.mxu0 0
        %2778 = vmatpush1.bf16.msra.mxu0 0
        %2779 = vmatprep.subr.bf16.mxu0 0
        %2780 = vmatpush1.bf16.msra.mxu0 0
        %2781 = vmatprep.subr.bf16.mxu0 0
        %2782 = vmatpush1.bf16.msra.mxu0 0
        %2783 = vmatprep.subr.bf16.mxu0 %v2764
        %2784 = vmatpush1.bf16.msra.mxu0 %v2761
        %2785 = vmatprep.subr.bf16.mxu0 %v2733
        %2786 = vmatpush1.bf16.msra.mxu0 %v2732
        %2787 = vmatprep.subr.bf16.mxu0 %v2728
        %2788 = vmatpush1.bf16.msra.mxu0 %v2727
        %2789 = vmatprep.subr.bf16.mxu0 %v2723
        %2790 = vmatpush1.bf16.msra.mxu0 %v2722
        %2791 = vmatprep.subr.bf16.mxu0 0
        %2792 = vmatpush2.bf16.msra.mxu0 0
        %2793 = vmatprep.subr.bf16.mxu0 0
        %2794 = vmatpush2.bf16.msra.mxu0 0
        %2795 = vmatprep.subr.bf16.mxu0 0
        %2796 = vmatpush2.bf16.msra.mxu0 0
        %2797 = vmatprep.subr.bf16.mxu0 0
        %2798 = vmatpush2.bf16.msra.mxu0 0
        %2799 = vmatprep.subr.bf16.mxu0 0
        %2800 = vmatpush2.bf16.msra.mxu0 0
        %2801 = vmatprep.subr.bf16.mxu0 0
        %2802 = vmatpush2.bf16.msra.mxu0 0
        %2803 = vmatprep.subr.bf16.mxu0 0
        %2804 = vmatpush2.bf16.msra.mxu0 0
        %2805 = vmatprep.subr.bf16.mxu0 0
        %2806 = vmatpush2.bf16.msra.mxu0 0
        %2807 = vmatprep.mubr.bf16.mxu0 0
        %2808 = vmatmul.mubr.bf16.gmra.mxu0 %v2758
        %v2809 = vpop.f32.mrf.mxu0
        %v2810 = vadd.f32 0.0, %v2809
        %v2811 = vpop.f32.mrf.mxu0
        %v2812 = vadd.f32 0.0, %v2811
        %v2813 = vpop.f32.mrf.mxu0
        %v2814 = vpop.f32.mrf.mxu0
        %2815 = vdwg.mxu0
        %2816 = vmatprep.subr.bf16.mxu0 0
        %2817 = vmatpush1.bf16.msra.mxu0 0
        %2818 = vmatprep.subr.bf16.mxu0 0
        %2819 = vmatpush1.bf16.msra.mxu0 0
        %2820 = vmatprep.subr.bf16.mxu0 0
        %2821 = vmatpush1.bf16.msra.mxu0 0
        %2822 = vmatprep.subr.bf16.mxu0 0
        %2823 = vmatpush1.bf16.msra.mxu0 0
        %2824 = vmatprep.subr.bf16.mxu0 %v2770
        %2825 = vmatpush1.bf16.msra.mxu0 %v2767
        %2826 = vmatprep.subr.bf16.mxu0 %v2735
        %2827 = vmatpush1.bf16.msra.mxu0 %v2734
        %2828 = vmatprep.subr.bf16.mxu0 %v2730
        %2829 = vmatpush1.bf16.msra.mxu0 %v2729
        %2830 = vmatprep.subr.bf16.mxu0 %v2725
        %2831 = vmatpush1.bf16.msra.mxu0 %v2724
        %2832 = vmatprep.subr.bf16.mxu0 0
        %2833 = vmatpush2.bf16.msra.mxu0 0
        %2834 = vmatprep.subr.bf16.mxu0 0
        %2835 = vmatpush2.bf16.msra.mxu0 0
        %2836 = vmatprep.subr.bf16.mxu0 0
        %2837 = vmatpush2.bf16.msra.mxu0 0
        %2838 = vmatprep.subr.bf16.mxu0 0
        %2839 = vmatpush2.bf16.msra.mxu0 0
        %2840 = vmatprep.subr.bf16.mxu0 0
        %2841 = vmatpush2.bf16.msra.mxu0 0
        %2842 = vmatprep.subr.bf16.mxu0 0
        %2843 = vmatpush2.bf16.msra.mxu0 0
        %2844 = vmatprep.subr.bf16.mxu0 0
        %2845 = vmatpush2.bf16.msra.mxu0 0
        %2846 = vmatprep.subr.bf16.mxu0 0
        %2847 = vmatpush2.bf16.msra.mxu0 0
        %2848 = vmatprep.mubr.bf16.mxu0 0
        %2849 = vmatmul.mubr.bf16.gmra.mxu0 %v2758
        %v2850 = vpop.f32.mrf.mxu0
        %v2851 = vadd.f32 0.0, %v2850
        %v2852 = vpop.f32.mrf.mxu0
        %v2853 = vadd.f32 0.0, %v2852
        %v2854 = vpop.f32.mrf.mxu0
        %v2855 = vpop.f32.mrf.mxu0
        %2856 = vdwg.mxu0
        %2857 = vmatprep.subr.bf16.mxu0 0
        %2858 = vmatpush1.bf16.msra.mxu0 0
        %2859 = vmatprep.subr.bf16.mxu0 0
        %2860 = vmatpush1.bf16.msra.mxu0 0
        %2861 = vmatprep.subr.bf16.mxu0 0
        %2862 = vmatpush1.bf16.msra.mxu0 0
        %2863 = vmatprep.subr.bf16.mxu0 0
        %2864 = vmatpush1.bf16.msra.mxu0 0
        %2865 = vmatprep.subr.bf16.mxu0 0
        %2866 = vmatpush1.bf16.msra.mxu0 %v2773
        %2867 = vmatprep.subr.bf16.mxu0 0
        %2868 = vmatpush1.bf16.msra.mxu0 %v2736
        %2869 = vmatprep.subr.bf16.mxu0 0
        %2870 = vmatpush1.bf16.msra.mxu0 %v2731
        %2871 = vmatprep.subr.bf16.mxu0 0
        %2872 = vmatpush1.bf16.msra.mxu0 %v2726
        %2873 = vmatprep.subr.bf16.mxu0 0
        %2874 = vmatpush2.bf16.msra.mxu0 0
        %2875 = vmatprep.subr.bf16.mxu0 0
        %2876 = vmatpush2.bf16.msra.mxu0 0
        %2877 = vmatprep.subr.bf16.mxu0 0
        %2878 = vmatpush2.bf16.msra.mxu0 0
        %2879 = vmatprep.subr.bf16.mxu0 0
        %2880 = vmatpush2.bf16.msra.mxu0 0
        %2881 = vmatprep.subr.bf16.mxu0 0
        %2882 = vmatpush2.bf16.msra.mxu0 0
        %2883 = vmatprep.subr.bf16.mxu0 0
        %2884 = vmatpush2.bf16.msra.mxu0 0
        %2885 = vmatprep.subr.bf16.mxu0 0
        %2886 = vmatpush2.bf16.msra.mxu0 0
        %2887 = vmatprep.subr.bf16.mxu0 0
        %2888 = vmatpush2.bf16.msra.mxu0 0
        %2889 = vmatprep.mubr.bf16.mxu0 0
        %2890 = vmatmul.mubr.bf16.gmra.mxu0 %v2758
        %v2891 = vpop.f32.mrf.mxu0
        %v2892 = vadd.f32 0.0, %v2891
        %v2893 = vpop.f32.mrf.mxu0
        %v2894 = vpop.f32.mrf.mxu0
        %v2895 = vpop.f32.mrf.mxu0
        %2896 = vdwg.mxu0
        %v2897 = vadd.f32 %v2404, %v2810
        %v2898 = vadd.f32 %v2405, %v2812
        %v2899 = vadd.f32 %v2406, %v2851
        %v2900 = vadd.f32 %v2407, %v2853
        %v2901 = vadd.f32 %v2408, %v2892
        %s2902 = scalar_lea.vmem %s357, 100 [#allocation2]
        %v2903 = vld [vmem:[%s2902] sm:$0xf]
        %v2905 = vsel %vm445, %v2903, 0
        %2907 = vmatprep.subr.bf16.mxu0 0
        %2908 = vmatpush1.bf16.msra.mxu0 0
        %2909 = vmatprep.subr.bf16.mxu0 0
        %2910 = vmatpush1.bf16.msra.mxu0 0
        %2911 = vmatprep.subr.bf16.mxu0 0
        %2912 = vmatpush1.bf16.msra.mxu0 0
        %2913 = vmatprep.subr.bf16.mxu0 0
        %2914 = vmatpush1.bf16.msra.mxu0 0
        %2915 = vmatprep.subr.bf16.mxu0 0
        %2916 = vmatpush1.bf16.msra.mxu0 %v451
        %2917 = vmatprep.subr.bf16.mxu0 0
        %2918 = vmatpush1.bf16.msra.mxu0 %v440
        %2919 = vmatprep.subr.bf16.mxu0 0
        %2920 = vmatpush1.bf16.msra.mxu0 %v439
        %2921 = vmatprep.subr.bf16.mxu0 0
        %2922 = vmatpush1.bf16.msra.mxu0 %v438
        %2923 = vmatprep.subr.bf16.mxu0 0
        %2924 = vmatpush2.bf16.msra.mxu0 0
        %2925 = vmatprep.subr.bf16.mxu0 0
        %2926 = vmatpush2.bf16.msra.mxu0 0
        %2927 = vmatprep.subr.bf16.mxu0 0
        %2928 = vmatpush2.bf16.msra.mxu0 0
        %2929 = vmatprep.subr.bf16.mxu0 0
        %2930 = vmatpush2.bf16.msra.mxu0 0
        %2931 = vmatprep.subr.bf16.mxu0 0
        %2932 = vmatpush2.bf16.msra.mxu0 0
        %2933 = vmatprep.subr.bf16.mxu0 0
        %2934 = vmatpush2.bf16.msra.mxu0 0
        %2935 = vmatprep.subr.bf16.mxu0 0
        %2936 = vmatpush2.bf16.msra.mxu0 0
        %2937 = vmatprep.subr.bf16.mxu0 0
        %2938 = vmatpush2.bf16.msra.mxu0 0
        %2939 = vmatprep.mubr.bf16.mxu0 0
        %2940 = vmatmul.mubr.bf16.gmra.mxu0 %v2905
        %v2941 = vpop.f32.mrf.mxu0
        %v2942 = vadd.f32 %v422, %v2941
        %v2943 = vpop.f32.mrf.mxu0
        %v2944 = vpop.f32.mrf.mxu0
        %v2945 = vpop.f32.mrf.mxu0
        %2946 = vdwg.mxu0
        %v2947 = vmax.f32 %v2942, 0.0
        %s2948 = scalar_lea.vmem %s357, 104 [#allocation2]
        %v2949 = vld [vmem:[%s2948] sm:$0xf]
        %v2951 = vsel %vm445, %v2949, 0
        %2953 = vmatprep.subr.bf16.mxu0 0
        %2954 = vmatpush1.bf16.msra.mxu0 0
        %2955 = vmatprep.subr.bf16.mxu0 0
        %2956 = vmatpush1.bf16.msra.mxu0 0
        %2957 = vmatprep.subr.bf16.mxu0 0
        %2958 = vmatpush1.bf16.msra.mxu0 0
        %2959 = vmatprep.subr.bf16.mxu0 0
        %2960 = vmatpush1.bf16.msra.mxu0 0
        %2961 = vmatprep.subr.bf16.mxu0 0
        %2962 = vmatpush1.bf16.msra.mxu0 %v451
        %2963 = vmatprep.subr.bf16.mxu0 0
        %2964 = vmatpush1.bf16.msra.mxu0 %v440
        %2965 = vmatprep.subr.bf16.mxu0 0
        %2966 = vmatpush1.bf16.msra.mxu0 %v439
        %2967 = vmatprep.subr.bf16.mxu0 0
        %2968 = vmatpush1.bf16.msra.mxu0 %v438
        %2969 = vmatprep.subr.bf16.mxu0 0
        %2970 = vmatpush2.bf16.msra.mxu0 0
        %2971 = vmatprep.subr.bf16.mxu0 0
        %2972 = vmatpush2.bf16.msra.mxu0 0
        %2973 = vmatprep.subr.bf16.mxu0 0
        %2974 = vmatpush2.bf16.msra.mxu0 0
        %2975 = vmatprep.subr.bf16.mxu0 0
        %2976 = vmatpush2.bf16.msra.mxu0 0
        %2977 = vmatprep.subr.bf16.mxu0 0
        %2978 = vmatpush2.bf16.msra.mxu0 0
        %2979 = vmatprep.subr.bf16.mxu0 0
        %2980 = vmatpush2.bf16.msra.mxu0 0
        %2981 = vmatprep.subr.bf16.mxu0 0
        %2982 = vmatpush2.bf16.msra.mxu0 0
        %2983 = vmatprep.subr.bf16.mxu0 0
        %2984 = vmatpush2.bf16.msra.mxu0 0
        %2985 = vmatprep.mubr.bf16.mxu0 0
        %2986 = vmatmul.mubr.bf16.gmra.mxu0 %v2951
        %v2987 = vpop.f32.mrf.mxu0
        %v2988 = vadd.f32 %v422, %v2987
        %v2989 = vpop.f32.mrf.mxu0
        %v2990 = vpop.f32.mrf.mxu0
        %v2991 = vpop.f32.mrf.mxu0
        %2992 = vdwg.mxu0
        %v2993 = vmax.f32 %v2988, 0.0
        %v2994 = vmax.f32 %v2947, %v2993
        %s2995 = scalar_lea.vmem %s357, 108 [#allocation2]
        %v2996 = vld [vmem:[%s2995] sm:$0xf]
        %v2998 = vsel %vm445, %v2996, 0
        %3000 = vmatprep.subr.bf16.mxu0 0
        %3001 = vmatpush1.bf16.msra.mxu0 0
        %3002 = vmatprep.subr.bf16.mxu0 0
        %3003 = vmatpush1.bf16.msra.mxu0 0
        %3004 = vmatprep.subr.bf16.mxu0 0
        %3005 = vmatpush1.bf16.msra.mxu0 0
        %3006 = vmatprep.subr.bf16.mxu0 0
        %3007 = vmatpush1.bf16.msra.mxu0 0
        %3008 = vmatprep.subr.bf16.mxu0 0
        %3009 = vmatpush1.bf16.msra.mxu0 %v451
        %3010 = vmatprep.subr.bf16.mxu0 0
        %3011 = vmatpush1.bf16.msra.mxu0 %v440
        %3012 = vmatprep.subr.bf16.mxu0 0
        %3013 = vmatpush1.bf16.msra.mxu0 %v439
        %3014 = vmatprep.subr.bf16.mxu0 0
        %3015 = vmatpush1.bf16.msra.mxu0 %v438
        %3016 = vmatprep.subr.bf16.mxu0 0
        %3017 = vmatpush2.bf16.msra.mxu0 0
        %3018 = vmatprep.subr.bf16.mxu0 0
        %3019 = vmatpush2.bf16.msra.mxu0 0
        %3020 = vmatprep.subr.bf16.mxu0 0
        %3021 = vmatpush2.bf16.msra.mxu0 0
        %3022 = vmatprep.subr.bf16.mxu0 0
        %3023 = vmatpush2.bf16.msra.mxu0 0
        %3024 = vmatprep.subr.bf16.mxu0 0
        %3025 = vmatpush2.bf16.msra.mxu0 0
        %3026 = vmatprep.subr.bf16.mxu0 0
        %3027 = vmatpush2.bf16.msra.mxu0 0
        %3028 = vmatprep.subr.bf16.mxu0 0
        %3029 = vmatpush2.bf16.msra.mxu0 0
        %3030 = vmatprep.subr.bf16.mxu0 0
        %3031 = vmatpush2.bf16.msra.mxu0 0
        %3032 = vmatprep.mubr.bf16.mxu0 0
        %3033 = vmatmul.mubr.bf16.gmra.mxu0 %v2998
        %v3034 = vpop.f32.mrf.mxu0
        %v3035 = vadd.f32 %v422, %v3034
        %v3036 = vpop.f32.mrf.mxu0
        %v3037 = vpop.f32.mrf.mxu0
        %v3038 = vpop.f32.mrf.mxu0
        %3039 = vdwg.mxu0
        %v3040 = vmax.f32 %v3035, 0.0
        %v3041 = vmax.f32 %v2994, %v3040
        %s3042 = scalar_lea.vmem %s357, 112 [#allocation2]
        %v3043 = vld [vmem:[%s3042] sm:$0xf]
        %v3045 = vsel %vm445, %v3043, 0
        %3047 = vmatprep.subr.bf16.mxu0 0
        %3048 = vmatpush1.bf16.msra.mxu0 0
        %3049 = vmatprep.subr.bf16.mxu0 0
        %3050 = vmatpush1.bf16.msra.mxu0 0
        %3051 = vmatprep.subr.bf16.mxu0 0
        %3052 = vmatpush1.bf16.msra.mxu0 0
        %3053 = vmatprep.subr.bf16.mxu0 0
        %3054 = vmatpush1.bf16.msra.mxu0 0
        %3055 = vmatprep.subr.bf16.mxu0 0
        %3056 = vmatpush1.bf16.msra.mxu0 %v451
        %3057 = vmatprep.subr.bf16.mxu0 0
        %3058 = vmatpush1.bf16.msra.mxu0 %v440
        %3059 = vmatprep.subr.bf16.mxu0 0
        %3060 = vmatpush1.bf16.msra.mxu0 %v439
        %3061 = vmatprep.subr.bf16.mxu0 0
        %3062 = vmatpush1.bf16.msra.mxu0 %v438
        %3063 = vmatprep.subr.bf16.mxu0 0
        %3064 = vmatpush2.bf16.msra.mxu0 0
        %3065 = vmatprep.subr.bf16.mxu0 0
        %3066 = vmatpush2.bf16.msra.mxu0 0
        %3067 = vmatprep.subr.bf16.mxu0 0
        %3068 = vmatpush2.bf16.msra.mxu0 0
        %3069 = vmatprep.subr.bf16.mxu0 0
        %3070 = vmatpush2.bf16.msra.mxu0 0
        %3071 = vmatprep.subr.bf16.mxu0 0
        %3072 = vmatpush2.bf16.msra.mxu0 0
        %3073 = vmatprep.subr.bf16.mxu0 0
        %3074 = vmatpush2.bf16.msra.mxu0 0
        %3075 = vmatprep.subr.bf16.mxu0 0
        %3076 = vmatpush2.bf16.msra.mxu0 0
        %3077 = vmatprep.subr.bf16.mxu0 0
        %3078 = vmatpush2.bf16.msra.mxu0 0
        %3079 = vmatprep.mubr.bf16.mxu0 0
        %3080 = vmatmul.mubr.bf16.gmra.mxu0 %v3045
        %v3081 = vpop.f32.mrf.mxu0
        %v3082 = vadd.f32 %v422, %v3081
        %v3083 = vpop.f32.mrf.mxu0
        %v3084 = vpop.f32.mrf.mxu0
        %v3085 = vpop.f32.mrf.mxu0
        %3086 = vdwg.mxu0
        %v3087 = vmax.f32 %v3082, 0.0
        %v3088 = vmax.f32 %v3041, %v3087
        %s3089 = scalar_lea.vmem %s357, 116 [#allocation2]
        %v3090 = vld [vmem:[%s3089] sm:$0xf]
        %v3092 = vsel %vm445, %v3090, 0
        %3094 = vmatprep.subr.bf16.mxu0 0
        %3095 = vmatpush1.bf16.msra.mxu0 0
        %3096 = vmatprep.subr.bf16.mxu0 0
        %3097 = vmatpush1.bf16.msra.mxu0 0
        %3098 = vmatprep.subr.bf16.mxu0 0
        %3099 = vmatpush1.bf16.msra.mxu0 0
        %3100 = vmatprep.subr.bf16.mxu0 0
        %3101 = vmatpush1.bf16.msra.mxu0 0
        %3102 = vmatprep.subr.bf16.mxu0 0
        %3103 = vmatpush1.bf16.msra.mxu0 %v451
        %3104 = vmatprep.subr.bf16.mxu0 0
        %3105 = vmatpush1.bf16.msra.mxu0 %v440
        %3106 = vmatprep.subr.bf16.mxu0 0
        %3107 = vmatpush1.bf16.msra.mxu0 %v439
        %3108 = vmatprep.subr.bf16.mxu0 0
        %3109 = vmatpush1.bf16.msra.mxu0 %v438
        %3110 = vmatprep.subr.bf16.mxu0 0
        %3111 = vmatpush2.bf16.msra.mxu0 0
        %3112 = vmatprep.subr.bf16.mxu0 0
        %3113 = vmatpush2.bf16.msra.mxu0 0
        %3114 = vmatprep.subr.bf16.mxu0 0
        %3115 = vmatpush2.bf16.msra.mxu0 0
        %3116 = vmatprep.subr.bf16.mxu0 0
        %3117 = vmatpush2.bf16.msra.mxu0 0
        %3118 = vmatprep.subr.bf16.mxu0 0
        %3119 = vmatpush2.bf16.msra.mxu0 0
        %3120 = vmatprep.subr.bf16.mxu0 0
        %3121 = vmatpush2.bf16.msra.mxu0 0
        %3122 = vmatprep.subr.bf16.mxu0 0
        %3123 = vmatpush2.bf16.msra.mxu0 0
        %3124 = vmatprep.subr.bf16.mxu0 0
        %3125 = vmatpush2.bf16.msra.mxu0 0
        %3126 = vmatprep.mubr.bf16.mxu0 0
        %3127 = vmatmul.mubr.bf16.gmra.mxu0 %v3092
        %v3128 = vpop.f32.mrf.mxu0
        %v3129 = vadd.f32 %v422, %v3128
        %v3130 = vpop.f32.mrf.mxu0
        %v3131 = vpop.f32.mrf.mxu0
        %v3132 = vpop.f32.mrf.mxu0
        %3133 = vdwg.mxu0
        %v3134 = vmax.f32 %v3129, 0.0
        %v3135 = vmax.f32 %v3088, %v3134
        %v3136 = vpack.c.bf16 %v3135, %v3135
        %s3137 = scalar_lea.vmem [#allocation7], 700
        %v3138 = vld [vmem:[%s3137] sm:$0xff]
        %v3139 = vld [vmem:[%s3137 + $0x8] sm:$0xff]
        %v3140 = vld [vmem:[%s3137 + $0x10] sm:$0xf]
        %v3141 = vld [vmem:[%s3137 + $0x14] sm:$0xff]
        %v3142 = vld [vmem:[%s3137 + $0x1c] sm:$0xff]
        %v3143 = vld [vmem:[%s3137 + $0x24] sm:$0xf]
        %v3144 = vld [vmem:[%s3137 + $0x28] sm:$0xff]
        %v3145 = vld [vmem:[%s3137 + $0x30] sm:$0xff]
        %v3146 = vld [vmem:[%s3137 + $0x38] sm:$0xf]
        %v3147 = vld [vmem:[%s3137 + $0x3c] sm:$0xff]
        %v3148 = vld [vmem:[%s3137 + $0x44] sm:$0xff]
        %v3149 = vld [vmem:[%s3137 + $0x4c] sm:$0xf]
        %v3150 = vld [vmem:[%s3137 + $0x50] sm:$0xff]
        %v3151 = vld [vmem:[%s3137 + $0x58] sm:$0xff]
        %v3152 = vld [vmem:[%s3137 + $0x60] sm:$0xf]
        %v3153 = vld [vmem:[%s3137 + $0x64] sm:$0xff]
        %v3154 = vld [vmem:[%s3137 + $0x6c] sm:$0xff]
        %v3155 = vld [vmem:[%s3137 + $0x74] sm:$0xf]
        %v3156 = vld [vmem:[%s3137 + $0x78] sm:$0x11]
        %v3157 = vld [vmem:[%s3137 + $0x80] sm:$0x11]
        %v3158 = vld [vmem:[%s3137 + $0x88] sm:$0x1]
        %v3180 = vunpack.c.l.b16 %v3138
        %v3181 = vunpack.c.h.b16 %v3138
        %v3182 = vunpack.c.l.b16 %v3139
        %v3183 = vunpack.c.h.b16 %v3139
        %v3184 = vunpack.c.l.b16 %v3140
        %v3185 = vunpack.c.l.b16 %v3141
        %v3186 = vunpack.c.h.b16 %v3141
        %v3187 = vunpack.c.l.b16 %v3142
        %v3188 = vunpack.c.h.b16 %v3142
        %v3189 = vunpack.c.l.b16 %v3143
        %v3190 = vunpack.c.l.b16 %v3144
        %v3191 = vunpack.c.h.b16 %v3144
        %v3192 = vunpack.c.l.b16 %v3145
        %v3193 = vunpack.c.h.b16 %v3145
        %v3194 = vunpack.c.l.b16 %v3146
        %v3195 = vunpack.c.l.b16 %v3147
        %v3196 = vunpack.c.h.b16 %v3147
        %v3197 = vunpack.c.l.b16 %v3148
        %v3198 = vunpack.c.h.b16 %v3148
        %v3199 = vunpack.c.l.b16 %v3149
        %v3200 = vunpack.c.l.b16 %v3150
        %v3201 = vunpack.c.h.b16 %v3150
        %v3202 = vunpack.c.l.b16 %v3151
        %v3203 = vunpack.c.h.b16 %v3151
        %v3204 = vunpack.c.l.b16 %v3152
        %v3205 = vunpack.c.l.b16 %v3153
        %v3206 = vunpack.c.h.b16 %v3153
        %v3207 = vunpack.c.l.b16 %v3154
        %v3208 = vunpack.c.h.b16 %v3154
        %v3209 = vunpack.c.l.b16 %v3155
        %v3210 = vunpack.c.l.b16 %v3156
        %v3211 = vunpack.c.h.b16 %v3156
        %v3212 = vunpack.c.l.b16 %v3157
        %v3213 = vunpack.c.h.b16 %v3157
        %v3214 = vunpack.c.l.b16 %v3158
        %v3215 = vpack.c.b16 %v3185, %v3180
        %v3216 = vpack.c.b16 %v3186, %v3181
        %v3217 = vpack.c.b16 %v3187, %v3182
        %v3218 = vpack.c.b16 %v3188, %v3183
        %v3219 = vpack.c.b16 %v3189, %v3184
        %v3220 = vpack.c.b16 %v3195, %v3190
        %v3221 = vpack.c.b16 %v3196, %v3191
        %v3222 = vpack.c.b16 %v3197, %v3192
        %v3223 = vpack.c.b16 %v3198, %v3193
        %v3224 = vpack.c.b16 %v3199, %v3194
        %v3225 = vpack.c.b16 %v3205, %v3200
        %v3226 = vpack.c.b16 %v3206, %v3201
        %v3227 = vpack.c.b16 %v3207, %v3202
        %v3228 = vpack.c.b16 %v3208, %v3203
        %v3229 = vpack.c.b16 %v3209, %v3204
        %v3230 = vpack.c.b16 %v3210, %v3210
        %v3231 = vpack.c.b16 %v3211, %v3211
        %v3232 = vpack.c.b16 %v3212, %v3212
        %v3233 = vpack.c.b16 %v3213, %v3213
        %v3234 = vpack.c.b16 %v3214, %v3214
        %v3251 = vsel %vm445, %v3136, 0
        %v3254 = vsel %vm449, %v3230, 0
        %v3257 = vsel %vm449, %v3231, 0
        %v3260 = vsel %vm449, %v3232, 0
        %v3263 = vsel %vm449, %v3233, 0
        %v3266 = vsel %vm449, %v3234, 0
        %3268 = vmatprep.subr.bf16.mxu0 0
        %3269 = vmatpush1.bf16.msra.mxu0 0
        %3270 = vmatprep.subr.bf16.mxu0 0
        %3271 = vmatpush1.bf16.msra.mxu0 0
        %3272 = vmatprep.subr.bf16.mxu0 0
        %3273 = vmatpush1.bf16.msra.mxu0 0
        %3274 = vmatprep.subr.bf16.mxu0 0
        %3275 = vmatpush1.bf16.msra.mxu0 0
        %3276 = vmatprep.subr.bf16.mxu0 %v3257
        %3277 = vmatpush1.bf16.msra.mxu0 %v3254
        %3278 = vmatprep.subr.bf16.mxu0 %v3226
        %3279 = vmatpush1.bf16.msra.mxu0 %v3225
        %3280 = vmatprep.subr.bf16.mxu0 %v3221
        %3281 = vmatpush1.bf16.msra.mxu0 %v3220
        %3282 = vmatprep.subr.bf16.mxu0 %v3216
        %3283 = vmatpush1.bf16.msra.mxu0 %v3215
        %3284 = vmatprep.subr.bf16.mxu0 0
        %3285 = vmatpush2.bf16.msra.mxu0 0
        %3286 = vmatprep.subr.bf16.mxu0 0
        %3287 = vmatpush2.bf16.msra.mxu0 0
        %3288 = vmatprep.subr.bf16.mxu0 0
        %3289 = vmatpush2.bf16.msra.mxu0 0
        %3290 = vmatprep.subr.bf16.mxu0 0
        %3291 = vmatpush2.bf16.msra.mxu0 0
        %3292 = vmatprep.subr.bf16.mxu0 0
        %3293 = vmatpush2.bf16.msra.mxu0 0
        %3294 = vmatprep.subr.bf16.mxu0 0
        %3295 = vmatpush2.bf16.msra.mxu0 0
        %3296 = vmatprep.subr.bf16.mxu0 0
        %3297 = vmatpush2.bf16.msra.mxu0 0
        %3298 = vmatprep.subr.bf16.mxu0 0
        %3299 = vmatpush2.bf16.msra.mxu0 0
        %3300 = vmatprep.mubr.bf16.mxu0 0
        %3301 = vmatmul.mubr.bf16.gmra.mxu0 %v3251
        %v3302 = vpop.f32.mrf.mxu0
        %v3303 = vadd.f32 0.0, %v3302
        %v3304 = vpop.f32.mrf.mxu0
        %v3305 = vadd.f32 0.0, %v3304
        %v3306 = vpop.f32.mrf.mxu0
        %v3307 = vpop.f32.mrf.mxu0
        %3308 = vdwg.mxu0
        %3309 = vmatprep.subr.bf16.mxu0 0
        %3310 = vmatpush1.bf16.msra.mxu0 0
        %3311 = vmatprep.subr.bf16.mxu0 0
        %3312 = vmatpush1.bf16.msra.mxu0 0
        %3313 = vmatprep.subr.bf16.mxu0 0
        %3314 = vmatpush1.bf16.msra.mxu0 0
        %3315 = vmatprep.subr.bf16.mxu0 0
        %3316 = vmatpush1.bf16.msra.mxu0 0
        %3317 = vmatprep.subr.bf16.mxu0 %v3263
        %3318 = vmatpush1.bf16.msra.mxu0 %v3260
        %3319 = vmatprep.subr.bf16.mxu0 %v3228
        %3320 = vmatpush1.bf16.msra.mxu0 %v3227
        %3321 = vmatprep.subr.bf16.mxu0 %v3223
        %3322 = vmatpush1.bf16.msra.mxu0 %v3222
        %3323 = vmatprep.subr.bf16.mxu0 %v3218
        %3324 = vmatpush1.bf16.msra.mxu0 %v3217
        %3325 = vmatprep.subr.bf16.mxu0 0
        %3326 = vmatpush2.bf16.msra.mxu0 0
        %3327 = vmatprep.subr.bf16.mxu0 0
        %3328 = vmatpush2.bf16.msra.mxu0 0
        %3329 = vmatprep.subr.bf16.mxu0 0
        %3330 = vmatpush2.bf16.msra.mxu0 0
        %3331 = vmatprep.subr.bf16.mxu0 0
        %3332 = vmatpush2.bf16.msra.mxu0 0
        %3333 = vmatprep.subr.bf16.mxu0 0
        %3334 = vmatpush2.bf16.msra.mxu0 0
        %3335 = vmatprep.subr.bf16.mxu0 0
        %3336 = vmatpush2.bf16.msra.mxu0 0
        %3337 = vmatprep.subr.bf16.mxu0 0
        %3338 = vmatpush2.bf16.msra.mxu0 0
        %3339 = vmatprep.subr.bf16.mxu0 0
        %3340 = vmatpush2.bf16.msra.mxu0 0
        %3341 = vmatprep.mubr.bf16.mxu0 0
        %3342 = vmatmul.mubr.bf16.gmra.mxu0 %v3251
        %v3343 = vpop.f32.mrf.mxu0
        %v3344 = vadd.f32 0.0, %v3343
        %v3345 = vpop.f32.mrf.mxu0
        %v3346 = vadd.f32 0.0, %v3345
        %v3347 = vpop.f32.mrf.mxu0
        %v3348 = vpop.f32.mrf.mxu0
        %3349 = vdwg.mxu0
        %3350 = vmatprep.subr.bf16.mxu0 0
        %3351 = vmatpush1.bf16.msra.mxu0 0
        %3352 = vmatprep.subr.bf16.mxu0 0
        %3353 = vmatpush1.bf16.msra.mxu0 0
        %3354 = vmatprep.subr.bf16.mxu0 0
        %3355 = vmatpush1.bf16.msra.mxu0 0
        %3356 = vmatprep.subr.bf16.mxu0 0
        %3357 = vmatpush1.bf16.msra.mxu0 0
        %3358 = vmatprep.subr.bf16.mxu0 0
        %3359 = vmatpush1.bf16.msra.mxu0 %v3266
        %3360 = vmatprep.subr.bf16.mxu0 0
        %3361 = vmatpush1.bf16.msra.mxu0 %v3229
        %3362 = vmatprep.subr.bf16.mxu0 0
        %3363 = vmatpush1.bf16.msra.mxu0 %v3224
        %3364 = vmatprep.subr.bf16.mxu0 0
        %3365 = vmatpush1.bf16.msra.mxu0 %v3219
        %3366 = vmatprep.subr.bf16.mxu0 0
        %3367 = vmatpush2.bf16.msra.mxu0 0
        %3368 = vmatprep.subr.bf16.mxu0 0
        %3369 = vmatpush2.bf16.msra.mxu0 0
        %3370 = vmatprep.subr.bf16.mxu0 0
        %3371 = vmatpush2.bf16.msra.mxu0 0
        %3372 = vmatprep.subr.bf16.mxu0 0
        %3373 = vmatpush2.bf16.msra.mxu0 0
        %3374 = vmatprep.subr.bf16.mxu0 0
        %3375 = vmatpush2.bf16.msra.mxu0 0
        %3376 = vmatprep.subr.bf16.mxu0 0
        %3377 = vmatpush2.bf16.msra.mxu0 0
        %3378 = vmatprep.subr.bf16.mxu0 0
        %3379 = vmatpush2.bf16.msra.mxu0 0
        %3380 = vmatprep.subr.bf16.mxu0 0
        %3381 = vmatpush2.bf16.msra.mxu0 0
        %3382 = vmatprep.mubr.bf16.mxu0 0
        %3383 = vmatmul.mubr.bf16.gmra.mxu0 %v3251
        %v3384 = vpop.f32.mrf.mxu0
        %v3385 = vadd.f32 0.0, %v3384
        %v3386 = vpop.f32.mrf.mxu0
        %v3387 = vpop.f32.mrf.mxu0
        %v3388 = vpop.f32.mrf.mxu0
        %3389 = vdwg.mxu0
        %v3390 = vadd.f32 %v2897, %v3303
        %v3391 = vadd.f32 %v2898, %v3305
        %v3392 = vadd.f32 %v2899, %v3344
        %v3393 = vadd.f32 %v2900, %v3346
        %v3394 = vadd.f32 %v2901, %v3385
        %s3395 = scalar_lea.vmem %s357, 120 [#allocation2]
        %v3396 = vld [vmem:[%s3395] sm:$0xf]
        %v3398 = vsel %vm445, %v3396, 0
        %3400 = vmatprep.subr.bf16.mxu0 0
        %3401 = vmatpush1.bf16.msra.mxu0 0
        %3402 = vmatprep.subr.bf16.mxu0 0
        %3403 = vmatpush1.bf16.msra.mxu0 0
        %3404 = vmatprep.subr.bf16.mxu0 0
        %3405 = vmatpush1.bf16.msra.mxu0 0
        %3406 = vmatprep.subr.bf16.mxu0 0
        %3407 = vmatpush1.bf16.msra.mxu0 0
        %3408 = vmatprep.subr.bf16.mxu0 0
        %3409 = vmatpush1.bf16.msra.mxu0 %v451
        %3410 = vmatprep.subr.bf16.mxu0 0
        %3411 = vmatpush1.bf16.msra.mxu0 %v440
        %3412 = vmatprep.subr.bf16.mxu0 0
        %3413 = vmatpush1.bf16.msra.mxu0 %v439
        %3414 = vmatprep.subr.bf16.mxu0 0
        %3415 = vmatpush1.bf16.msra.mxu0 %v438
        %3416 = vmatprep.subr.bf16.mxu0 0
        %3417 = vmatpush2.bf16.msra.mxu0 0
        %3418 = vmatprep.subr.bf16.mxu0 0
        %3419 = vmatpush2.bf16.msra.mxu0 0
        %3420 = vmatprep.subr.bf16.mxu0 0
        %3421 = vmatpush2.bf16.msra.mxu0 0
        %3422 = vmatprep.subr.bf16.mxu0 0
        %3423 = vmatpush2.bf16.msra.mxu0 0
        %3424 = vmatprep.subr.bf16.mxu0 0
        %3425 = vmatpush2.bf16.msra.mxu0 0
        %3426 = vmatprep.subr.bf16.mxu0 0
        %3427 = vmatpush2.bf16.msra.mxu0 0
        %3428 = vmatprep.subr.bf16.mxu0 0
        %3429 = vmatpush2.bf16.msra.mxu0 0
        %3430 = vmatprep.subr.bf16.mxu0 0
        %3431 = vmatpush2.bf16.msra.mxu0 0
        %3432 = vmatprep.mubr.bf16.mxu0 0
        %3433 = vmatmul.mubr.bf16.gmra.mxu0 %v3398
        %v3434 = vpop.f32.mrf.mxu0
        %v3435 = vadd.f32 %v422, %v3434
        %v3436 = vpop.f32.mrf.mxu0
        %v3437 = vpop.f32.mrf.mxu0
        %v3438 = vpop.f32.mrf.mxu0
        %3439 = vdwg.mxu0
        %v3440 = vmax.f32 %v3435, 0.0
        %s3441 = scalar_lea.vmem %s357, 124 [#allocation2]
        %v3442 = vld [vmem:[%s3441] sm:$0xf]
        %v3444 = vsel %vm445, %v3442, 0
        %3446 = vmatprep.subr.bf16.mxu0 0
        %3447 = vmatpush1.bf16.msra.mxu0 0
        %3448 = vmatprep.subr.bf16.mxu0 0
        %3449 = vmatpush1.bf16.msra.mxu0 0
        %3450 = vmatprep.subr.bf16.mxu0 0
        %3451 = vmatpush1.bf16.msra.mxu0 0
        %3452 = vmatprep.subr.bf16.mxu0 0
        %3453 = vmatpush1.bf16.msra.mxu0 0
        %3454 = vmatprep.subr.bf16.mxu0 0
        %3455 = vmatpush1.bf16.msra.mxu0 %v451
        %3456 = vmatprep.subr.bf16.mxu0 0
        %3457 = vmatpush1.bf16.msra.mxu0 %v440
        %3458 = vmatprep.subr.bf16.mxu0 0
        %3459 = vmatpush1.bf16.msra.mxu0 %v439
        %3460 = vmatprep.subr.bf16.mxu0 0
        %3461 = vmatpush1.bf16.msra.mxu0 %v438
        %3462 = vmatprep.subr.bf16.mxu0 0
        %3463 = vmatpush2.bf16.msra.mxu0 0
        %3464 = vmatprep.subr.bf16.mxu0 0
        %3465 = vmatpush2.bf16.msra.mxu0 0
        %3466 = vmatprep.subr.bf16.mxu0 0
        %3467 = vmatpush2.bf16.msra.mxu0 0
        %3468 = vmatprep.subr.bf16.mxu0 0
        %3469 = vmatpush2.bf16.msra.mxu0 0
        %3470 = vmatprep.subr.bf16.mxu0 0
        %3471 = vmatpush2.bf16.msra.mxu0 0
        %3472 = vmatprep.subr.bf16.mxu0 0
        %3473 = vmatpush2.bf16.msra.mxu0 0
        %3474 = vmatprep.subr.bf16.mxu0 0
        %3475 = vmatpush2.bf16.msra.mxu0 0
        %3476 = vmatprep.subr.bf16.mxu0 0
        %3477 = vmatpush2.bf16.msra.mxu0 0
        %3478 = vmatprep.mubr.bf16.mxu0 0
        %3479 = vmatmul.mubr.bf16.gmra.mxu0 %v3444
        %v3480 = vpop.f32.mrf.mxu0
        %v3481 = vadd.f32 %v422, %v3480
        %v3482 = vpop.f32.mrf.mxu0
        %v3483 = vpop.f32.mrf.mxu0
        %v3484 = vpop.f32.mrf.mxu0
        %3485 = vdwg.mxu0
        %v3486 = vmax.f32 %v3481, 0.0
        %v3487 = vmax.f32 %v3440, %v3486
        %s3488 = scalar_lea.vmem %s357, 128 [#allocation2]
        %v3489 = vld [vmem:[%s3488] sm:$0xf]
        %v3491 = vsel %vm445, %v3489, 0
        %3493 = vmatprep.subr.bf16.mxu0 0
        %3494 = vmatpush1.bf16.msra.mxu0 0
        %3495 = vmatprep.subr.bf16.mxu0 0
        %3496 = vmatpush1.bf16.msra.mxu0 0
        %3497 = vmatprep.subr.bf16.mxu0 0
        %3498 = vmatpush1.bf16.msra.mxu0 0
        %3499 = vmatprep.subr.bf16.mxu0 0
        %3500 = vmatpush1.bf16.msra.mxu0 0
        %3501 = vmatprep.subr.bf16.mxu0 0
        %3502 = vmatpush1.bf16.msra.mxu0 %v451
        %3503 = vmatprep.subr.bf16.mxu0 0
        %3504 = vmatpush1.bf16.msra.mxu0 %v440
        %3505 = vmatprep.subr.bf16.mxu0 0
        %3506 = vmatpush1.bf16.msra.mxu0 %v439
        %3507 = vmatprep.subr.bf16.mxu0 0
        %3508 = vmatpush1.bf16.msra.mxu0 %v438
        %3509 = vmatprep.subr.bf16.mxu0 0
        %3510 = vmatpush2.bf16.msra.mxu0 0
        %3511 = vmatprep.subr.bf16.mxu0 0
        %3512 = vmatpush2.bf16.msra.mxu0 0
        %3513 = vmatprep.subr.bf16.mxu0 0
        %3514 = vmatpush2.bf16.msra.mxu0 0
        %3515 = vmatprep.subr.bf16.mxu0 0
        %3516 = vmatpush2.bf16.msra.mxu0 0
        %3517 = vmatprep.subr.bf16.mxu0 0
        %3518 = vmatpush2.bf16.msra.mxu0 0
        %3519 = vmatprep.subr.bf16.mxu0 0
        %3520 = vmatpush2.bf16.msra.mxu0 0
        %3521 = vmatprep.subr.bf16.mxu0 0
        %3522 = vmatpush2.bf16.msra.mxu0 0
        %3523 = vmatprep.subr.bf16.mxu0 0
        %3524 = vmatpush2.bf16.msra.mxu0 0
        %3525 = vmatprep.mubr.bf16.mxu0 0
        %3526 = vmatmul.mubr.bf16.gmra.mxu0 %v3491
        %v3527 = vpop.f32.mrf.mxu0
        %v3528 = vadd.f32 %v422, %v3527
        %v3529 = vpop.f32.mrf.mxu0
        %v3530 = vpop.f32.mrf.mxu0
        %v3531 = vpop.f32.mrf.mxu0
        %3532 = vdwg.mxu0
        %v3533 = vmax.f32 %v3528, 0.0
        %v3534 = vmax.f32 %v3487, %v3533
        %s3535 = scalar_lea.vmem %s357, 132 [#allocation2]
        %v3536 = vld [vmem:[%s3535] sm:$0xf]
        %v3538 = vsel %vm445, %v3536, 0
        %3540 = vmatprep.subr.bf16.mxu0 0
        %3541 = vmatpush1.bf16.msra.mxu0 0
        %3542 = vmatprep.subr.bf16.mxu0 0
        %3543 = vmatpush1.bf16.msra.mxu0 0
        %3544 = vmatprep.subr.bf16.mxu0 0
        %3545 = vmatpush1.bf16.msra.mxu0 0
        %3546 = vmatprep.subr.bf16.mxu0 0
        %3547 = vmatpush1.bf16.msra.mxu0 0
        %3548 = vmatprep.subr.bf16.mxu0 0
        %3549 = vmatpush1.bf16.msra.mxu0 %v451
        %3550 = vmatprep.subr.bf16.mxu0 0
        %3551 = vmatpush1.bf16.msra.mxu0 %v440
        %3552 = vmatprep.subr.bf16.mxu0 0
        %3553 = vmatpush1.bf16.msra.mxu0 %v439
        %3554 = vmatprep.subr.bf16.mxu0 0
        %3555 = vmatpush1.bf16.msra.mxu0 %v438
        %3556 = vmatprep.subr.bf16.mxu0 0
        %3557 = vmatpush2.bf16.msra.mxu0 0
        %3558 = vmatprep.subr.bf16.mxu0 0
        %3559 = vmatpush2.bf16.msra.mxu0 0
        %3560 = vmatprep.subr.bf16.mxu0 0
        %3561 = vmatpush2.bf16.msra.mxu0 0
        %3562 = vmatprep.subr.bf16.mxu0 0
        %3563 = vmatpush2.bf16.msra.mxu0 0
        %3564 = vmatprep.subr.bf16.mxu0 0
        %3565 = vmatpush2.bf16.msra.mxu0 0
        %3566 = vmatprep.subr.bf16.mxu0 0
        %3567 = vmatpush2.bf16.msra.mxu0 0
        %3568 = vmatprep.subr.bf16.mxu0 0
        %3569 = vmatpush2.bf16.msra.mxu0 0
        %3570 = vmatprep.subr.bf16.mxu0 0
        %3571 = vmatpush2.bf16.msra.mxu0 0
        %3572 = vmatprep.mubr.bf16.mxu0 0
        %3573 = vmatmul.mubr.bf16.gmra.mxu0 %v3538
        %v3574 = vpop.f32.mrf.mxu0
        %v3575 = vadd.f32 %v422, %v3574
        %v3576 = vpop.f32.mrf.mxu0
        %v3577 = vpop.f32.mrf.mxu0
        %v3578 = vpop.f32.mrf.mxu0
        %3579 = vdwg.mxu0
        %v3580 = vmax.f32 %v3575, 0.0
        %v3581 = vmax.f32 %v3534, %v3580
        %s3582 = scalar_lea.vmem %s357, 136 [#allocation2]
        %v3583 = vld [vmem:[%s3582] sm:$0xf]
        %v3585 = vsel %vm445, %v3583, 0
        %3587 = vmatprep.subr.bf16.mxu0 0
        %3588 = vmatpush1.bf16.msra.mxu0 0
        %3589 = vmatprep.subr.bf16.mxu0 0
        %3590 = vmatpush1.bf16.msra.mxu0 0
        %3591 = vmatprep.subr.bf16.mxu0 0
        %3592 = vmatpush1.bf16.msra.mxu0 0
        %3593 = vmatprep.subr.bf16.mxu0 0
        %3594 = vmatpush1.bf16.msra.mxu0 0
        %3595 = vmatprep.subr.bf16.mxu0 0
        %3596 = vmatpush1.bf16.msra.mxu0 %v451
        %3597 = vmatprep.subr.bf16.mxu0 0
        %3598 = vmatpush1.bf16.msra.mxu0 %v440
        %3599 = vmatprep.subr.bf16.mxu0 0
        %3600 = vmatpush1.bf16.msra.mxu0 %v439
        %3601 = vmatprep.subr.bf16.mxu0 0
        %3602 = vmatpush1.bf16.msra.mxu0 %v438
        %3603 = vmatprep.subr.bf16.mxu0 0
        %3604 = vmatpush2.bf16.msra.mxu0 0
        %3605 = vmatprep.subr.bf16.mxu0 0
        %3606 = vmatpush2.bf16.msra.mxu0 0
        %3607 = vmatprep.subr.bf16.mxu0 0
        %3608 = vmatpush2.bf16.msra.mxu0 0
        %3609 = vmatprep.subr.bf16.mxu0 0
        %3610 = vmatpush2.bf16.msra.mxu0 0
        %3611 = vmatprep.subr.bf16.mxu0 0
        %3612 = vmatpush2.bf16.msra.mxu0 0
        %3613 = vmatprep.subr.bf16.mxu0 0
        %3614 = vmatpush2.bf16.msra.mxu0 0
        %3615 = vmatprep.subr.bf16.mxu0 0
        %3616 = vmatpush2.bf16.msra.mxu0 0
        %3617 = vmatprep.subr.bf16.mxu0 0
        %3618 = vmatpush2.bf16.msra.mxu0 0
        %3619 = vmatprep.mubr.bf16.mxu0 0
        %3620 = vmatmul.mubr.bf16.gmra.mxu0 %v3585
        %v3621 = vpop.f32.mrf.mxu0
        %v3622 = vadd.f32 %v422, %v3621
        %v3623 = vpop.f32.mrf.mxu0
        %v3624 = vpop.f32.mrf.mxu0
        %v3625 = vpop.f32.mrf.mxu0
        %3626 = vdwg.mxu0
        %v3627 = vmax.f32 %v3622, 0.0
        %v3628 = vmax.f32 %v3581, %v3627
        %v3629 = vpack.c.bf16 %v3628, %v3628
        %s3630 = scalar_lea.vmem [#allocation7], 840
        %v3631 = vld [vmem:[%s3630] sm:$0xff]
        %v3632 = vld [vmem:[%s3630 + $0x8] sm:$0xff]
        %v3633 = vld [vmem:[%s3630 + $0x10] sm:$0xf]
        %v3634 = vld [vmem:[%s3630 + $0x14] sm:$0xff]
        %v3635 = vld [vmem:[%s3630 + $0x1c] sm:$0xff]
        %v3636 = vld [vmem:[%s3630 + $0x24] sm:$0xf]
        %v3637 = vld [vmem:[%s3630 + $0x28] sm:$0xff]
        %v3638 = vld [vmem:[%s3630 + $0x30] sm:$0xff]
        %v3639 = vld [vmem:[%s3630 + $0x38] sm:$0xf]
        %v3640 = vld [vmem:[%s3630 + $0x3c] sm:$0xff]
        %v3641 = vld [vmem:[%s3630 + $0x44] sm:$0xff]
        %v3642 = vld [vmem:[%s3630 + $0x4c] sm:$0xf]
        %v3643 = vld [vmem:[%s3630 + $0x50] sm:$0xff]
        %v3644 = vld [vmem:[%s3630 + $0x58] sm:$0xff]
        %v3645 = vld [vmem:[%s3630 + $0x60] sm:$0xf]
        %v3646 = vld [vmem:[%s3630 + $0x64] sm:$0xff]
        %v3647 = vld [vmem:[%s3630 + $0x6c] sm:$0xff]
        %v3648 = vld [vmem:[%s3630 + $0x74] sm:$0xf]
        %v3649 = vld [vmem:[%s3630 + $0x78] sm:$0x11]
        %v3650 = vld [vmem:[%s3630 + $0x80] sm:$0x11]
        %v3651 = vld [vmem:[%s3630 + $0x88] sm:$0x1]
        %v3673 = vunpack.c.l.b16 %v3631
        %v3674 = vunpack.c.h.b16 %v3631
        %v3675 = vunpack.c.l.b16 %v3632
        %v3676 = vunpack.c.h.b16 %v3632
        %v3677 = vunpack.c.l.b16 %v3633
        %v3678 = vunpack.c.l.b16 %v3634
        %v3679 = vunpack.c.h.b16 %v3634
        %v3680 = vunpack.c.l.b16 %v3635
        %v3681 = vunpack.c.h.b16 %v3635
        %v3682 = vunpack.c.l.b16 %v3636
        %v3683 = vunpack.c.l.b16 %v3637
        %v3684 = vunpack.c.h.b16 %v3637
        %v3685 = vunpack.c.l.b16 %v3638
        %v3686 = vunpack.c.h.b16 %v3638
        %v3687 = vunpack.c.l.b16 %v3639
        %v3688 = vunpack.c.l.b16 %v3640
        %v3689 = vunpack.c.h.b16 %v3640
        %v3690 = vunpack.c.l.b16 %v3641
        %v3691 = vunpack.c.h.b16 %v3641
        %v3692 = vunpack.c.l.b16 %v3642
        %v3693 = vunpack.c.l.b16 %v3643
        %v3694 = vunpack.c.h.b16 %v3643
        %v3695 = vunpack.c.l.b16 %v3644
        %v3696 = vunpack.c.h.b16 %v3644
        %v3697 = vunpack.c.l.b16 %v3645
        %v3698 = vunpack.c.l.b16 %v3646
        %v3699 = vunpack.c.h.b16 %v3646
        %v3700 = vunpack.c.l.b16 %v3647
        %v3701 = vunpack.c.h.b16 %v3647
        %v3702 = vunpack.c.l.b16 %v3648
        %v3703 = vunpack.c.l.b16 %v3649
        %v3704 = vunpack.c.h.b16 %v3649
        %v3705 = vunpack.c.l.b16 %v3650
        %v3706 = vunpack.c.h.b16 %v3650
        %v3707 = vunpack.c.l.b16 %v3651
        %v3708 = vpack.c.b16 %v3678, %v3673
        %v3709 = vpack.c.b16 %v3679, %v3674
        %v3710 = vpack.c.b16 %v3680, %v3675
        %v3711 = vpack.c.b16 %v3681, %v3676
        %v3712 = vpack.c.b16 %v3682, %v3677
        %v3713 = vpack.c.b16 %v3688, %v3683
        %v3714 = vpack.c.b16 %v3689, %v3684
        %v3715 = vpack.c.b16 %v3690, %v3685
        %v3716 = vpack.c.b16 %v3691, %v3686
        %v3717 = vpack.c.b16 %v3692, %v3687
        %v3718 = vpack.c.b16 %v3698, %v3693
        %v3719 = vpack.c.b16 %v3699, %v3694
        %v3720 = vpack.c.b16 %v3700, %v3695
        %v3721 = vpack.c.b16 %v3701, %v3696
        %v3722 = vpack.c.b16 %v3702, %v3697
        %v3723 = vpack.c.b16 %v3703, %v3703
        %v3724 = vpack.c.b16 %v3704, %v3704
        %v3725 = vpack.c.b16 %v3705, %v3705
        %v3726 = vpack.c.b16 %v3706, %v3706
        %v3727 = vpack.c.b16 %v3707, %v3707
        %v3744 = vsel %vm445, %v3629, 0
        %v3747 = vsel %vm449, %v3723, 0
        %v3750 = vsel %vm449, %v3724, 0
        %v3753 = vsel %vm449, %v3725, 0
        %v3756 = vsel %vm449, %v3726, 0
        %v3759 = vsel %vm449, %v3727, 0
        %3761 = vmatprep.subr.bf16.mxu0 0
        %3762 = vmatpush1.bf16.msra.mxu0 0
        %3763 = vmatprep.subr.bf16.mxu0 0
        %3764 = vmatpush1.bf16.msra.mxu0 0
        %3765 = vmatprep.subr.bf16.mxu0 0
        %3766 = vmatpush1.bf16.msra.mxu0 0
        %3767 = vmatprep.subr.bf16.mxu0 0
        %3768 = vmatpush1.bf16.msra.mxu0 0
        %3769 = vmatprep.subr.bf16.mxu0 %v3750
        %3770 = vmatpush1.bf16.msra.mxu0 %v3747
        %3771 = vmatprep.subr.bf16.mxu0 %v3719
        %3772 = vmatpush1.bf16.msra.mxu0 %v3718
        %3773 = vmatprep.subr.bf16.mxu0 %v3714
        %3774 = vmatpush1.bf16.msra.mxu0 %v3713
        %3775 = vmatprep.subr.bf16.mxu0 %v3709
        %3776 = vmatpush1.bf16.msra.mxu0 %v3708
        %3777 = vmatprep.subr.bf16.mxu0 0
        %3778 = vmatpush2.bf16.msra.mxu0 0
        %3779 = vmatprep.subr.bf16.mxu0 0
        %3780 = vmatpush2.bf16.msra.mxu0 0
        %3781 = vmatprep.subr.bf16.mxu0 0
        %3782 = vmatpush2.bf16.msra.mxu0 0
        %3783 = vmatprep.subr.bf16.mxu0 0
        %3784 = vmatpush2.bf16.msra.mxu0 0
        %3785 = vmatprep.subr.bf16.mxu0 0
        %3786 = vmatpush2.bf16.msra.mxu0 0
        %3787 = vmatprep.subr.bf16.mxu0 0
        %3788 = vmatpush2.bf16.msra.mxu0 0
        %3789 = vmatprep.subr.bf16.mxu0 0
        %3790 = vmatpush2.bf16.msra.mxu0 0
        %3791 = vmatprep.subr.bf16.mxu0 0
        %3792 = vmatpush2.bf16.msra.mxu0 0
        %3793 = vmatprep.mubr.bf16.mxu0 0
        %3794 = vmatmul.mubr.bf16.gmra.mxu0 %v3744
        %v3795 = vpop.f32.mrf.mxu0
        %v3796 = vadd.f32 0.0, %v3795
        %v3797 = vpop.f32.mrf.mxu0
        %v3798 = vadd.f32 0.0, %v3797
        %v3799 = vpop.f32.mrf.mxu0
        %v3800 = vpop.f32.mrf.mxu0
        %3801 = vdwg.mxu0
        %3802 = vmatprep.subr.bf16.mxu0 0
        %3803 = vmatpush1.bf16.msra.mxu0 0
        %3804 = vmatprep.subr.bf16.mxu0 0
        %3805 = vmatpush1.bf16.msra.mxu0 0
        %3806 = vmatprep.subr.bf16.mxu0 0
        %3807 = vmatpush1.bf16.msra.mxu0 0
        %3808 = vmatprep.subr.bf16.mxu0 0
        %3809 = vmatpush1.bf16.msra.mxu0 0
        %3810 = vmatprep.subr.bf16.mxu0 %v3756
        %3811 = vmatpush1.bf16.msra.mxu0 %v3753
        %3812 = vmatprep.subr.bf16.mxu0 %v3721
        %3813 = vmatpush1.bf16.msra.mxu0 %v3720
        %3814 = vmatprep.subr.bf16.mxu0 %v3716
        %3815 = vmatpush1.bf16.msra.mxu0 %v3715
        %3816 = vmatprep.subr.bf16.mxu0 %v3711
        %3817 = vmatpush1.bf16.msra.mxu0 %v3710
        %3818 = vmatprep.subr.bf16.mxu0 0
        %3819 = vmatpush2.bf16.msra.mxu0 0
        %3820 = vmatprep.subr.bf16.mxu0 0
        %3821 = vmatpush2.bf16.msra.mxu0 0
        %3822 = vmatprep.subr.bf16.mxu0 0
        %3823 = vmatpush2.bf16.msra.mxu0 0
        %3824 = vmatprep.subr.bf16.mxu0 0
        %3825 = vmatpush2.bf16.msra.mxu0 0
        %3826 = vmatprep.subr.bf16.mxu0 0
        %3827 = vmatpush2.bf16.msra.mxu0 0
        %3828 = vmatprep.subr.bf16.mxu0 0
        %3829 = vmatpush2.bf16.msra.mxu0 0
        %3830 = vmatprep.subr.bf16.mxu0 0
        %3831 = vmatpush2.bf16.msra.mxu0 0
        %3832 = vmatprep.subr.bf16.mxu0 0
        %3833 = vmatpush2.bf16.msra.mxu0 0
        %3834 = vmatprep.mubr.bf16.mxu0 0
        %3835 = vmatmul.mubr.bf16.gmra.mxu0 %v3744
        %v3836 = vpop.f32.mrf.mxu0
        %v3837 = vadd.f32 0.0, %v3836
        %v3838 = vpop.f32.mrf.mxu0
        %v3839 = vadd.f32 0.0, %v3838
        %v3840 = vpop.f32.mrf.mxu0
        %v3841 = vpop.f32.mrf.mxu0
        %3842 = vdwg.mxu0
        %3843 = vmatprep.subr.bf16.mxu0 0
        %3844 = vmatpush1.bf16.msra.mxu0 0
        %3845 = vmatprep.subr.bf16.mxu0 0
        %3846 = vmatpush1.bf16.msra.mxu0 0
        %3847 = vmatprep.subr.bf16.mxu0 0
        %3848 = vmatpush1.bf16.msra.mxu0 0
        %3849 = vmatprep.subr.bf16.mxu0 0
        %3850 = vmatpush1.bf16.msra.mxu0 0
        %3851 = vmatprep.subr.bf16.mxu0 0
        %3852 = vmatpush1.bf16.msra.mxu0 %v3759
        %3853 = vmatprep.subr.bf16.mxu0 0
        %3854 = vmatpush1.bf16.msra.mxu0 %v3722
        %3855 = vmatprep.subr.bf16.mxu0 0
        %3856 = vmatpush1.bf16.msra.mxu0 %v3717
        %3857 = vmatprep.subr.bf16.mxu0 0
        %3858 = vmatpush1.bf16.msra.mxu0 %v3712
        %3859 = vmatprep.subr.bf16.mxu0 0
        %3860 = vmatpush2.bf16.msra.mxu0 0
        %3861 = vmatprep.subr.bf16.mxu0 0
        %3862 = vmatpush2.bf16.msra.mxu0 0
        %3863 = vmatprep.subr.bf16.mxu0 0
        %3864 = vmatpush2.bf16.msra.mxu0 0
        %3865 = vmatprep.subr.bf16.mxu0 0
        %3866 = vmatpush2.bf16.msra.mxu0 0
        %3867 = vmatprep.subr.bf16.mxu0 0
        %3868 = vmatpush2.bf16.msra.mxu0 0
        %3869 = vmatprep.subr.bf16.mxu0 0
        %3870 = vmatpush2.bf16.msra.mxu0 0
        %3871 = vmatprep.subr.bf16.mxu0 0
        %3872 = vmatpush2.bf16.msra.mxu0 0
        %3873 = vmatprep.subr.bf16.mxu0 0
        %3874 = vmatpush2.bf16.msra.mxu0 0
        %3875 = vmatprep.mubr.bf16.mxu0 0
        %3876 = vmatmul.mubr.bf16.gmra.mxu0 %v3744
        %v3877 = vpop.f32.mrf.mxu0
        %v3878 = vadd.f32 0.0, %v3877
        %v3879 = vpop.f32.mrf.mxu0
        %v3880 = vpop.f32.mrf.mxu0
        %v3881 = vpop.f32.mrf.mxu0
        %3882 = vdwg.mxu0
        %v3883 = vadd.f32 %v3390, %v3796
        %v3884 = vadd.f32 %v3391, %v3798
        %v3885 = vadd.f32 %v3392, %v3837
        %v3886 = vadd.f32 %v3393, %v3839
        %v3887 = vadd.f32 %v3394, %v3878
        %s3888 = scalar_lea.vmem %s357, 140 [#allocation2]
        %v3889 = vld [vmem:[%s3888] sm:$0xf]
        %v3891 = vsel %vm445, %v3889, 0
        %3893 = vmatprep.subr.bf16.mxu0 0
        %3894 = vmatpush1.bf16.msra.mxu0 0
        %3895 = vmatprep.subr.bf16.mxu0 0
        %3896 = vmatpush1.bf16.msra.mxu0 0
        %3897 = vmatprep.subr.bf16.mxu0 0
        %3898 = vmatpush1.bf16.msra.mxu0 0
        %3899 = vmatprep.subr.bf16.mxu0 0
        %3900 = vmatpush1.bf16.msra.mxu0 0
        %3901 = vmatprep.subr.bf16.mxu0 0
        %3902 = vmatpush1.bf16.msra.mxu0 %v451
        %3903 = vmatprep.subr.bf16.mxu0 0
        %3904 = vmatpush1.bf16.msra.mxu0 %v440
        %3905 = vmatprep.subr.bf16.mxu0 0
        %3906 = vmatpush1.bf16.msra.mxu0 %v439
        %3907 = vmatprep.subr.bf16.mxu0 0
        %3908 = vmatpush1.bf16.msra.mxu0 %v438
        %3909 = vmatprep.subr.bf16.mxu0 0
        %3910 = vmatpush2.bf16.msra.mxu0 0
        %3911 = vmatprep.subr.bf16.mxu0 0
        %3912 = vmatpush2.bf16.msra.mxu0 0
        %3913 = vmatprep.subr.bf16.mxu0 0
        %3914 = vmatpush2.bf16.msra.mxu0 0
        %3915 = vmatprep.subr.bf16.mxu0 0
        %3916 = vmatpush2.bf16.msra.mxu0 0
        %3917 = vmatprep.subr.bf16.mxu0 0
        %3918 = vmatpush2.bf16.msra.mxu0 0
        %3919 = vmatprep.subr.bf16.mxu0 0
        %3920 = vmatpush2.bf16.msra.mxu0 0
        %3921 = vmatprep.subr.bf16.mxu0 0
        %3922 = vmatpush2.bf16.msra.mxu0 0
        %3923 = vmatprep.subr.bf16.mxu0 0
        %3924 = vmatpush2.bf16.msra.mxu0 0
        %3925 = vmatprep.mubr.bf16.mxu0 0
        %3926 = vmatmul.mubr.bf16.gmra.mxu0 %v3891
        %v3927 = vpop.f32.mrf.mxu0
        %v3928 = vadd.f32 %v422, %v3927
        %v3929 = vpop.f32.mrf.mxu0
        %v3930 = vpop.f32.mrf.mxu0
        %v3931 = vpop.f32.mrf.mxu0
        %3932 = vdwg.mxu0
        %v3933 = vmax.f32 %v3928, 0.0
        %s3934 = scalar_lea.vmem %s357, 144 [#allocation2]
        %v3935 = vld [vmem:[%s3934] sm:$0xf]
        %v3937 = vsel %vm445, %v3935, 0
        %3939 = vmatprep.subr.bf16.mxu0 0
        %3940 = vmatpush1.bf16.msra.mxu0 0
        %3941 = vmatprep.subr.bf16.mxu0 0
        %3942 = vmatpush1.bf16.msra.mxu0 0
        %3943 = vmatprep.subr.bf16.mxu0 0
        %3944 = vmatpush1.bf16.msra.mxu0 0
        %3945 = vmatprep.subr.bf16.mxu0 0
        %3946 = vmatpush1.bf16.msra.mxu0 0
        %3947 = vmatprep.subr.bf16.mxu0 0
        %3948 = vmatpush1.bf16.msra.mxu0 %v451
        %3949 = vmatprep.subr.bf16.mxu0 0
        %3950 = vmatpush1.bf16.msra.mxu0 %v440
        %3951 = vmatprep.subr.bf16.mxu0 0
        %3952 = vmatpush1.bf16.msra.mxu0 %v439
        %3953 = vmatprep.subr.bf16.mxu0 0
        %3954 = vmatpush1.bf16.msra.mxu0 %v438
        %3955 = vmatprep.subr.bf16.mxu0 0
        %3956 = vmatpush2.bf16.msra.mxu0 0
        %3957 = vmatprep.subr.bf16.mxu0 0
        %3958 = vmatpush2.bf16.msra.mxu0 0
        %3959 = vmatprep.subr.bf16.mxu0 0
        %3960 = vmatpush2.bf16.msra.mxu0 0
        %3961 = vmatprep.subr.bf16.mxu0 0
        %3962 = vmatpush2.bf16.msra.mxu0 0
        %3963 = vmatprep.subr.bf16.mxu0 0
        %3964 = vmatpush2.bf16.msra.mxu0 0
        %3965 = vmatprep.subr.bf16.mxu0 0
        %3966 = vmatpush2.bf16.msra.mxu0 0
        %3967 = vmatprep.subr.bf16.mxu0 0
        %3968 = vmatpush2.bf16.msra.mxu0 0
        %3969 = vmatprep.subr.bf16.mxu0 0
        %3970 = vmatpush2.bf16.msra.mxu0 0
        %3971 = vmatprep.mubr.bf16.mxu0 0
        %3972 = vmatmul.mubr.bf16.gmra.mxu0 %v3937
        %v3973 = vpop.f32.mrf.mxu0
        %v3974 = vadd.f32 %v422, %v3973
        %v3975 = vpop.f32.mrf.mxu0
        %v3976 = vpop.f32.mrf.mxu0
        %v3977 = vpop.f32.mrf.mxu0
        %3978 = vdwg.mxu0
        %v3979 = vmax.f32 %v3974, 0.0
        %v3980 = vmax.f32 %v3933, %v3979
        %s3981 = scalar_lea.vmem %s357, 148 [#allocation2]
        %v3982 = vld [vmem:[%s3981] sm:$0xf]
        %v3984 = vsel %vm445, %v3982, 0
        %3986 = vmatprep.subr.bf16.mxu0 0
        %3987 = vmatpush1.bf16.msra.mxu0 0
        %3988 = vmatprep.subr.bf16.mxu0 0
        %3989 = vmatpush1.bf16.msra.mxu0 0
        %3990 = vmatprep.subr.bf16.mxu0 0
        %3991 = vmatpush1.bf16.msra.mxu0 0
        %3992 = vmatprep.subr.bf16.mxu0 0
        %3993 = vmatpush1.bf16.msra.mxu0 0
        %3994 = vmatprep.subr.bf16.mxu0 0
        %3995 = vmatpush1.bf16.msra.mxu0 %v451
        %3996 = vmatprep.subr.bf16.mxu0 0
        %3997 = vmatpush1.bf16.msra.mxu0 %v440
        %3998 = vmatprep.subr.bf16.mxu0 0
        %3999 = vmatpush1.bf16.msra.mxu0 %v439
        %4000 = vmatprep.subr.bf16.mxu0 0
        %4001 = vmatpush1.bf16.msra.mxu0 %v438
        %4002 = vmatprep.subr.bf16.mxu0 0
        %4003 = vmatpush2.bf16.msra.mxu0 0
        %4004 = vmatprep.subr.bf16.mxu0 0
        %4005 = vmatpush2.bf16.msra.mxu0 0
        %4006 = vmatprep.subr.bf16.mxu0 0
        %4007 = vmatpush2.bf16.msra.mxu0 0
        %4008 = vmatprep.subr.bf16.mxu0 0
        %4009 = vmatpush2.bf16.msra.mxu0 0
        %4010 = vmatprep.subr.bf16.mxu0 0
        %4011 = vmatpush2.bf16.msra.mxu0 0
        %4012 = vmatprep.subr.bf16.mxu0 0
        %4013 = vmatpush2.bf16.msra.mxu0 0
        %4014 = vmatprep.subr.bf16.mxu0 0
        %4015 = vmatpush2.bf16.msra.mxu0 0
        %4016 = vmatprep.subr.bf16.mxu0 0
        %4017 = vmatpush2.bf16.msra.mxu0 0
        %4018 = vmatprep.mubr.bf16.mxu0 0
        %4019 = vmatmul.mubr.bf16.gmra.mxu0 %v3984
        %v4020 = vpop.f32.mrf.mxu0
        %v4021 = vadd.f32 %v422, %v4020
        %v4022 = vpop.f32.mrf.mxu0
        %v4023 = vpop.f32.mrf.mxu0
        %v4024 = vpop.f32.mrf.mxu0
        %4025 = vdwg.mxu0
        %v4026 = vmax.f32 %v4021, 0.0
        %v4027 = vmax.f32 %v3980, %v4026
        %s4028 = scalar_lea.vmem %s357, 152 [#allocation2]
        %v4029 = vld [vmem:[%s4028] sm:$0xf]
        %v4031 = vsel %vm445, %v4029, 0
        %4033 = vmatprep.subr.bf16.mxu0 0
        %4034 = vmatpush1.bf16.msra.mxu0 0
        %4035 = vmatprep.subr.bf16.mxu0 0
        %4036 = vmatpush1.bf16.msra.mxu0 0
        %4037 = vmatprep.subr.bf16.mxu0 0
        %4038 = vmatpush1.bf16.msra.mxu0 0
        %4039 = vmatprep.subr.bf16.mxu0 0
        %4040 = vmatpush1.bf16.msra.mxu0 0
        %4041 = vmatprep.subr.bf16.mxu0 0
        %4042 = vmatpush1.bf16.msra.mxu0 %v451
        %4043 = vmatprep.subr.bf16.mxu0 0
        %4044 = vmatpush1.bf16.msra.mxu0 %v440
        %4045 = vmatprep.subr.bf16.mxu0 0
        %4046 = vmatpush1.bf16.msra.mxu0 %v439
        %4047 = vmatprep.subr.bf16.mxu0 0
        %4048 = vmatpush1.bf16.msra.mxu0 %v438
        %4049 = vmatprep.subr.bf16.mxu0 0
        %4050 = vmatpush2.bf16.msra.mxu0 0
        %4051 = vmatprep.subr.bf16.mxu0 0
        %4052 = vmatpush2.bf16.msra.mxu0 0
        %4053 = vmatprep.subr.bf16.mxu0 0
        %4054 = vmatpush2.bf16.msra.mxu0 0
        %4055 = vmatprep.subr.bf16.mxu0 0
        %4056 = vmatpush2.bf16.msra.mxu0 0
        %4057 = vmatprep.subr.bf16.mxu0 0
        %4058 = vmatpush2.bf16.msra.mxu0 0
        %4059 = vmatprep.subr.bf16.mxu0 0
        %4060 = vmatpush2.bf16.msra.mxu0 0
        %4061 = vmatprep.subr.bf16.mxu0 0
        %4062 = vmatpush2.bf16.msra.mxu0 0
        %4063 = vmatprep.subr.bf16.mxu0 0
        %4064 = vmatpush2.bf16.msra.mxu0 0
        %4065 = vmatprep.mubr.bf16.mxu0 0
        %4066 = vmatmul.mubr.bf16.gmra.mxu0 %v4031
        %v4067 = vpop.f32.mrf.mxu0
        %v4068 = vadd.f32 %v422, %v4067
        %v4069 = vpop.f32.mrf.mxu0
        %v4070 = vpop.f32.mrf.mxu0
        %v4071 = vpop.f32.mrf.mxu0
        %4072 = vdwg.mxu0
        %v4073 = vmax.f32 %v4068, 0.0
        %v4074 = vmax.f32 %v4027, %v4073
        %s4075 = scalar_lea.vmem %s357, 156 [#allocation2]
        %v4076 = vld [vmem:[%s4075] sm:$0xf]
        %v4078 = vsel %vm445, %v4076, 0
        %4080 = vmatprep.subr.bf16.mxu0 0
        %4081 = vmatpush1.bf16.msra.mxu0 0
        %4082 = vmatprep.subr.bf16.mxu0 0
        %4083 = vmatpush1.bf16.msra.mxu0 0
        %4084 = vmatprep.subr.bf16.mxu0 0
        %4085 = vmatpush1.bf16.msra.mxu0 0
        %4086 = vmatprep.subr.bf16.mxu0 0
        %4087 = vmatpush1.bf16.msra.mxu0 0
        %4088 = vmatprep.subr.bf16.mxu0 0
        %4089 = vmatpush1.bf16.msra.mxu0 %v451
        %4090 = vmatprep.subr.bf16.mxu0 0
        %4091 = vmatpush1.bf16.msra.mxu0 %v440
        %4092 = vmatprep.subr.bf16.mxu0 0
        %4093 = vmatpush1.bf16.msra.mxu0 %v439
        %4094 = vmatprep.subr.bf16.mxu0 0
        %4095 = vmatpush1.bf16.msra.mxu0 %v438
        %4096 = vmatprep.subr.bf16.mxu0 0
        %4097 = vmatpush2.bf16.msra.mxu0 0
        %4098 = vmatprep.subr.bf16.mxu0 0
        %4099 = vmatpush2.bf16.msra.mxu0 0
        %4100 = vmatprep.subr.bf16.mxu0 0
        %4101 = vmatpush2.bf16.msra.mxu0 0
        %4102 = vmatprep.subr.bf16.mxu0 0
        %4103 = vmatpush2.bf16.msra.mxu0 0
        %4104 = vmatprep.subr.bf16.mxu0 0
        %4105 = vmatpush2.bf16.msra.mxu0 0
        %4106 = vmatprep.subr.bf16.mxu0 0
        %4107 = vmatpush2.bf16.msra.mxu0 0
        %4108 = vmatprep.subr.bf16.mxu0 0
        %4109 = vmatpush2.bf16.msra.mxu0 0
        %4110 = vmatprep.subr.bf16.mxu0 0
        %4111 = vmatpush2.bf16.msra.mxu0 0
        %4112 = vmatprep.mubr.bf16.mxu0 0
        %4113 = vmatmul.mubr.bf16.gmra.mxu0 %v4078
        %v4114 = vpop.f32.mrf.mxu0
        %v4115 = vadd.f32 %v422, %v4114
        %v4116 = vpop.f32.mrf.mxu0
        %v4117 = vpop.f32.mrf.mxu0
        %v4118 = vpop.f32.mrf.mxu0
        %4119 = vdwg.mxu0
        %v4120 = vmax.f32 %v4115, 0.0
        %v4121 = vmax.f32 %v4074, %v4120
        %v4122 = vpack.c.bf16 %v4121, %v4121
        %s4123 = scalar_lea.vmem [#allocation7], 980
        %v4124 = vld [vmem:[%s4123] sm:$0xff]
        %v4125 = vld [vmem:[%s4123 + $0x8] sm:$0xff]
        %v4126 = vld [vmem:[%s4123 + $0x10] sm:$0xf]
        %v4127 = vld [vmem:[%s4123 + $0x14] sm:$0xff]
        %v4128 = vld [vmem:[%s4123 + $0x1c] sm:$0xff]
        %v4129 = vld [vmem:[%s4123 + $0x24] sm:$0xf]
        %v4130 = vld [vmem:[%s4123 + $0x28] sm:$0xff]
        %v4131 = vld [vmem:[%s4123 + $0x30] sm:$0xff]
        %v4132 = vld [vmem:[%s4123 + $0x38] sm:$0xf]
        %v4133 = vld [vmem:[%s4123 + $0x3c] sm:$0xff]
        %v4134 = vld [vmem:[%s4123 + $0x44] sm:$0xff]
        %v4135 = vld [vmem:[%s4123 + $0x4c] sm:$0xf]
        %v4136 = vld [vmem:[%s4123 + $0x50] sm:$0xff]
        %v4137 = vld [vmem:[%s4123 + $0x58] sm:$0xff]
        %v4138 = vld [vmem:[%s4123 + $0x60] sm:$0xf]
        %v4139 = vld [vmem:[%s4123 + $0x64] sm:$0xff]
        %v4140 = vld [vmem:[%s4123 + $0x6c] sm:$0xff]
        %v4141 = vld [vmem:[%s4123 + $0x74] sm:$0xf]
        %v4142 = vld [vmem:[%s4123 + $0x78] sm:$0x11]
        %v4143 = vld [vmem:[%s4123 + $0x80] sm:$0x11]
        %v4144 = vld [vmem:[%s4123 + $0x88] sm:$0x1]
        %v4166 = vunpack.c.l.b16 %v4124
        %v4167 = vunpack.c.h.b16 %v4124
        %v4168 = vunpack.c.l.b16 %v4125
        %v4169 = vunpack.c.h.b16 %v4125
        %v4170 = vunpack.c.l.b16 %v4126
        %v4171 = vunpack.c.l.b16 %v4127
        %v4172 = vunpack.c.h.b16 %v4127
        %v4173 = vunpack.c.l.b16 %v4128
        %v4174 = vunpack.c.h.b16 %v4128
        %v4175 = vunpack.c.l.b16 %v4129
        %v4176 = vunpack.c.l.b16 %v4130
        %v4177 = vunpack.c.h.b16 %v4130
        %v4178 = vunpack.c.l.b16 %v4131
        %v4179 = vunpack.c.h.b16 %v4131
        %v4180 = vunpack.c.l.b16 %v4132
        %v4181 = vunpack.c.l.b16 %v4133
        %v4182 = vunpack.c.h.b16 %v4133
        %v4183 = vunpack.c.l.b16 %v4134
        %v4184 = vunpack.c.h.b16 %v4134
        %v4185 = vunpack.c.l.b16 %v4135
        %v4186 = vunpack.c.l.b16 %v4136
        %v4187 = vunpack.c.h.b16 %v4136
        %v4188 = vunpack.c.l.b16 %v4137
        %v4189 = vunpack.c.h.b16 %v4137
        %v4190 = vunpack.c.l.b16 %v4138
        %v4191 = vunpack.c.l.b16 %v4139
        %v4192 = vunpack.c.h.b16 %v4139
        %v4193 = vunpack.c.l.b16 %v4140
        %v4194 = vunpack.c.h.b16 %v4140
        %v4195 = vunpack.c.l.b16 %v4141
        %v4196 = vunpack.c.l.b16 %v4142
        %v4197 = vunpack.c.h.b16 %v4142
        %v4198 = vunpack.c.l.b16 %v4143
        %v4199 = vunpack.c.h.b16 %v4143
        %v4200 = vunpack.c.l.b16 %v4144
        %v4201 = vpack.c.b16 %v4171, %v4166
        %v4202 = vpack.c.b16 %v4172, %v4167
        %v4203 = vpack.c.b16 %v4173, %v4168
        %v4204 = vpack.c.b16 %v4174, %v4169
        %v4205 = vpack.c.b16 %v4175, %v4170
        %v4206 = vpack.c.b16 %v4181, %v4176
        %v4207 = vpack.c.b16 %v4182, %v4177
        %v4208 = vpack.c.b16 %v4183, %v4178
        %v4209 = vpack.c.b16 %v4184, %v4179
        %v4210 = vpack.c.b16 %v4185, %v4180
        %v4211 = vpack.c.b16 %v4191, %v4186
        %v4212 = vpack.c.b16 %v4192, %v4187
        %v4213 = vpack.c.b16 %v4193, %v4188
        %v4214 = vpack.c.b16 %v4194, %v4189
        %v4215 = vpack.c.b16 %v4195, %v4190
        %v4216 = vpack.c.b16 %v4196, %v4196
        %v4217 = vpack.c.b16 %v4197, %v4197
        %v4218 = vpack.c.b16 %v4198, %v4198
        %v4219 = vpack.c.b16 %v4199, %v4199
        %v4220 = vpack.c.b16 %v4200, %v4200
        %v4237 = vsel %vm445, %v4122, 0
        %v4240 = vsel %vm449, %v4216, 0
        %v4243 = vsel %vm449, %v4217, 0
        %v4246 = vsel %vm449, %v4218, 0
        %v4249 = vsel %vm449, %v4219, 0
        %v4252 = vsel %vm449, %v4220, 0
        %4254 = vmatprep.subr.bf16.mxu0 0
        %4255 = vmatpush1.bf16.msra.mxu0 0
        %4256 = vmatprep.subr.bf16.mxu0 0
        %4257 = vmatpush1.bf16.msra.mxu0 0
        %4258 = vmatprep.subr.bf16.mxu0 0
        %4259 = vmatpush1.bf16.msra.mxu0 0
        %4260 = vmatprep.subr.bf16.mxu0 0
        %4261 = vmatpush1.bf16.msra.mxu0 0
        %4262 = vmatprep.subr.bf16.mxu0 %v4243
        %4263 = vmatpush1.bf16.msra.mxu0 %v4240
        %4264 = vmatprep.subr.bf16.mxu0 %v4212
        %4265 = vmatpush1.bf16.msra.mxu0 %v4211
        %4266 = vmatprep.subr.bf16.mxu0 %v4207
        %4267 = vmatpush1.bf16.msra.mxu0 %v4206
        %4268 = vmatprep.subr.bf16.mxu0 %v4202
        %4269 = vmatpush1.bf16.msra.mxu0 %v4201
        %4270 = vmatprep.subr.bf16.mxu0 0
        %4271 = vmatpush2.bf16.msra.mxu0 0
        %4272 = vmatprep.subr.bf16.mxu0 0
        %4273 = vmatpush2.bf16.msra.mxu0 0
        %4274 = vmatprep.subr.bf16.mxu0 0
        %4275 = vmatpush2.bf16.msra.mxu0 0
        %4276 = vmatprep.subr.bf16.mxu0 0
        %4277 = vmatpush2.bf16.msra.mxu0 0
        %4278 = vmatprep.subr.bf16.mxu0 0
        %4279 = vmatpush2.bf16.msra.mxu0 0
        %4280 = vmatprep.subr.bf16.mxu0 0
        %4281 = vmatpush2.bf16.msra.mxu0 0
        %4282 = vmatprep.subr.bf16.mxu0 0
        %4283 = vmatpush2.bf16.msra.mxu0 0
        %4284 = vmatprep.subr.bf16.mxu0 0
        %4285 = vmatpush2.bf16.msra.mxu0 0
        %4286 = vmatprep.mubr.bf16.mxu0 0
        %4287 = vmatmul.mubr.bf16.gmra.mxu0 %v4237
        %v4288 = vpop.f32.mrf.mxu0
        %v4289 = vadd.f32 0.0, %v4288
        %v4290 = vpop.f32.mrf.mxu0
        %v4291 = vadd.f32 0.0, %v4290
        %v4292 = vpop.f32.mrf.mxu0
        %v4293 = vpop.f32.mrf.mxu0
        %4294 = vdwg.mxu0
        %4295 = vmatprep.subr.bf16.mxu0 0
        %4296 = vmatpush1.bf16.msra.mxu0 0
        %4297 = vmatprep.subr.bf16.mxu0 0
        %4298 = vmatpush1.bf16.msra.mxu0 0
        %4299 = vmatprep.subr.bf16.mxu0 0
        %4300 = vmatpush1.bf16.msra.mxu0 0
        %4301 = vmatprep.subr.bf16.mxu0 0
        %4302 = vmatpush1.bf16.msra.mxu0 0
        %4303 = vmatprep.subr.bf16.mxu0 %v4249
        %4304 = vmatpush1.bf16.msra.mxu0 %v4246
        %4305 = vmatprep.subr.bf16.mxu0 %v4214
        %4306 = vmatpush1.bf16.msra.mxu0 %v4213
        %4307 = vmatprep.subr.bf16.mxu0 %v4209
        %4308 = vmatpush1.bf16.msra.mxu0 %v4208
        %4309 = vmatprep.subr.bf16.mxu0 %v4204
        %4310 = vmatpush1.bf16.msra.mxu0 %v4203
        %4311 = vmatprep.subr.bf16.mxu0 0
        %4312 = vmatpush2.bf16.msra.mxu0 0
        %4313 = vmatprep.subr.bf16.mxu0 0
        %4314 = vmatpush2.bf16.msra.mxu0 0
        %4315 = vmatprep.subr.bf16.mxu0 0
        %4316 = vmatpush2.bf16.msra.mxu0 0
        %4317 = vmatprep.subr.bf16.mxu0 0
        %4318 = vmatpush2.bf16.msra.mxu0 0
        %4319 = vmatprep.subr.bf16.mxu0 0
        %4320 = vmatpush2.bf16.msra.mxu0 0
        %4321 = vmatprep.subr.bf16.mxu0 0
        %4322 = vmatpush2.bf16.msra.mxu0 0
        %4323 = vmatprep.subr.bf16.mxu0 0
        %4324 = vmatpush2.bf16.msra.mxu0 0
        %4325 = vmatprep.subr.bf16.mxu0 0
        %4326 = vmatpush2.bf16.msra.mxu0 0
        %4327 = vmatprep.mubr.bf16.mxu0 0
        %4328 = vmatmul.mubr.bf16.gmra.mxu0 %v4237
        %v4329 = vpop.f32.mrf.mxu0
        %v4330 = vadd.f32 0.0, %v4329
        %v4331 = vpop.f32.mrf.mxu0
        %v4332 = vadd.f32 0.0, %v4331
        %v4333 = vpop.f32.mrf.mxu0
        %v4334 = vpop.f32.mrf.mxu0
        %4335 = vdwg.mxu0
        %4336 = vmatprep.subr.bf16.mxu0 0
        %4337 = vmatpush1.bf16.msra.mxu0 0
        %4338 = vmatprep.subr.bf16.mxu0 0
        %4339 = vmatpush1.bf16.msra.mxu0 0
        %4340 = vmatprep.subr.bf16.mxu0 0
        %4341 = vmatpush1.bf16.msra.mxu0 0
        %4342 = vmatprep.subr.bf16.mxu0 0
        %4343 = vmatpush1.bf16.msra.mxu0 0
        %4344 = vmatprep.subr.bf16.mxu0 0
        %4345 = vmatpush1.bf16.msra.mxu0 %v4252
        %4346 = vmatprep.subr.bf16.mxu0 0
        %4347 = vmatpush1.bf16.msra.mxu0 %v4215
        %4348 = vmatprep.subr.bf16.mxu0 0
        %4349 = vmatpush1.bf16.msra.mxu0 %v4210
        %4350 = vmatprep.subr.bf16.mxu0 0
        %4351 = vmatpush1.bf16.msra.mxu0 %v4205
        %4352 = vmatprep.subr.bf16.mxu0 0
        %4353 = vmatpush2.bf16.msra.mxu0 0
        %4354 = vmatprep.subr.bf16.mxu0 0
        %4355 = vmatpush2.bf16.msra.mxu0 0
        %4356 = vmatprep.subr.bf16.mxu0 0
        %4357 = vmatpush2.bf16.msra.mxu0 0
        %4358 = vmatprep.subr.bf16.mxu0 0
        %4359 = vmatpush2.bf16.msra.mxu0 0
        %4360 = vmatprep.subr.bf16.mxu0 0
        %4361 = vmatpush2.bf16.msra.mxu0 0
        %4362 = vmatprep.subr.bf16.mxu0 0
        %4363 = vmatpush2.bf16.msra.mxu0 0
        %4364 = vmatprep.subr.bf16.mxu0 0
        %4365 = vmatpush2.bf16.msra.mxu0 0
        %4366 = vmatprep.subr.bf16.mxu0 0
        %4367 = vmatpush2.bf16.msra.mxu0 0
        %4368 = vmatprep.mubr.bf16.mxu0 0
        %4369 = vmatmul.mubr.bf16.gmra.mxu0 %v4237
        %v4370 = vpop.f32.mrf.mxu0
        %v4371 = vadd.f32 0.0, %v4370
        %v4372 = vpop.f32.mrf.mxu0
        %v4373 = vpop.f32.mrf.mxu0
        %v4374 = vpop.f32.mrf.mxu0
        %4375 = vdwg.mxu0
        %v4376 = vadd.f32 %v3883, %v4289
        %v4377 = vadd.f32 %v3884, %v4291
        %v4378 = vadd.f32 %v3885, %v4330
        %v4379 = vadd.f32 %v3886, %v4332
        %v4380 = vadd.f32 %v3887, %v4371
        %s4381 = scalar_lea.vmem %s357, 160 [#allocation2]
        %v4382 = vld [vmem:[%s4381] sm:$0xf]
        %v4384 = vsel %vm445, %v4382, 0
        %4386 = vmatprep.subr.bf16.mxu0 0
        %4387 = vmatpush1.bf16.msra.mxu0 0
        %4388 = vmatprep.subr.bf16.mxu0 0
        %4389 = vmatpush1.bf16.msra.mxu0 0
        %4390 = vmatprep.subr.bf16.mxu0 0
        %4391 = vmatpush1.bf16.msra.mxu0 0
        %4392 = vmatprep.subr.bf16.mxu0 0
        %4393 = vmatpush1.bf16.msra.mxu0 0
        %4394 = vmatprep.subr.bf16.mxu0 0
        %4395 = vmatpush1.bf16.msra.mxu0 %v451
        %4396 = vmatprep.subr.bf16.mxu0 0
        %4397 = vmatpush1.bf16.msra.mxu0 %v440
        %4398 = vmatprep.subr.bf16.mxu0 0
        %4399 = vmatpush1.bf16.msra.mxu0 %v439
        %4400 = vmatprep.subr.bf16.mxu0 0
        %4401 = vmatpush1.bf16.msra.mxu0 %v438
        %4402 = vmatprep.subr.bf16.mxu0 0
        %4403 = vmatpush2.bf16.msra.mxu0 0
        %4404 = vmatprep.subr.bf16.mxu0 0
        %4405 = vmatpush2.bf16.msra.mxu0 0
        %4406 = vmatprep.subr.bf16.mxu0 0
        %4407 = vmatpush2.bf16.msra.mxu0 0
        %4408 = vmatprep.subr.bf16.mxu0 0
        %4409 = vmatpush2.bf16.msra.mxu0 0
        %4410 = vmatprep.subr.bf16.mxu0 0
        %4411 = vmatpush2.bf16.msra.mxu0 0
        %4412 = vmatprep.subr.bf16.mxu0 0
        %4413 = vmatpush2.bf16.msra.mxu0 0
        %4414 = vmatprep.subr.bf16.mxu0 0
        %4415 = vmatpush2.bf16.msra.mxu0 0
        %4416 = vmatprep.subr.bf16.mxu0 0
        %4417 = vmatpush2.bf16.msra.mxu0 0
        %4418 = vmatprep.mubr.bf16.mxu0 0
        %4419 = vmatmul.mubr.bf16.gmra.mxu0 %v4384
        %v4420 = vpop.f32.mrf.mxu0
        %v4421 = vadd.f32 %v422, %v4420
        %v4422 = vpop.f32.mrf.mxu0
        %v4423 = vpop.f32.mrf.mxu0
        %v4424 = vpop.f32.mrf.mxu0
        %4425 = vdwg.mxu0
        %v4426 = vmax.f32 %v4421, 0.0
        %s4427 = scalar_lea.vmem %s357, 164 [#allocation2]
        %v4428 = vld [vmem:[%s4427] sm:$0xf]
        %v4430 = vsel %vm445, %v4428, 0
        %4432 = vmatprep.subr.bf16.mxu0 0
        %4433 = vmatpush1.bf16.msra.mxu0 0
        %4434 = vmatprep.subr.bf16.mxu0 0
        %4435 = vmatpush1.bf16.msra.mxu0 0
        %4436 = vmatprep.subr.bf16.mxu0 0
        %4437 = vmatpush1.bf16.msra.mxu0 0
        %4438 = vmatprep.subr.bf16.mxu0 0
        %4439 = vmatpush1.bf16.msra.mxu0 0
        %4440 = vmatprep.subr.bf16.mxu0 0
        %4441 = vmatpush1.bf16.msra.mxu0 %v451
        %4442 = vmatprep.subr.bf16.mxu0 0
        %4443 = vmatpush1.bf16.msra.mxu0 %v440
        %4444 = vmatprep.subr.bf16.mxu0 0
        %4445 = vmatpush1.bf16.msra.mxu0 %v439
        %4446 = vmatprep.subr.bf16.mxu0 0
        %4447 = vmatpush1.bf16.msra.mxu0 %v438
        %4448 = vmatprep.subr.bf16.mxu0 0
        %4449 = vmatpush2.bf16.msra.mxu0 0
        %4450 = vmatprep.subr.bf16.mxu0 0
        %4451 = vmatpush2.bf16.msra.mxu0 0
        %4452 = vmatprep.subr.bf16.mxu0 0
        %4453 = vmatpush2.bf16.msra.mxu0 0
        %4454 = vmatprep.subr.bf16.mxu0 0
        %4455 = vmatpush2.bf16.msra.mxu0 0
        %4456 = vmatprep.subr.bf16.mxu0 0
        %4457 = vmatpush2.bf16.msra.mxu0 0
        %4458 = vmatprep.subr.bf16.mxu0 0
        %4459 = vmatpush2.bf16.msra.mxu0 0
        %4460 = vmatprep.subr.bf16.mxu0 0
        %4461 = vmatpush2.bf16.msra.mxu0 0
        %4462 = vmatprep.subr.bf16.mxu0 0
        %4463 = vmatpush2.bf16.msra.mxu0 0
        %4464 = vmatprep.mubr.bf16.mxu0 0
        %4465 = vmatmul.mubr.bf16.gmra.mxu0 %v4430
        %v4466 = vpop.f32.mrf.mxu0
        %v4467 = vadd.f32 %v422, %v4466
        %v4468 = vpop.f32.mrf.mxu0
        %v4469 = vpop.f32.mrf.mxu0
        %v4470 = vpop.f32.mrf.mxu0
        %4471 = vdwg.mxu0
        %v4472 = vmax.f32 %v4467, 0.0
        %v4473 = vmax.f32 %v4426, %v4472
        %s4474 = scalar_lea.vmem %s357, 168 [#allocation2]
        %v4475 = vld [vmem:[%s4474] sm:$0xf]
        %v4477 = vsel %vm445, %v4475, 0
        %4479 = vmatprep.subr.bf16.mxu0 0
        %4480 = vmatpush1.bf16.msra.mxu0 0
        %4481 = vmatprep.subr.bf16.mxu0 0
        %4482 = vmatpush1.bf16.msra.mxu0 0
        %4483 = vmatprep.subr.bf16.mxu0 0
        %4484 = vmatpush1.bf16.msra.mxu0 0
        %4485 = vmatprep.subr.bf16.mxu0 0
        %4486 = vmatpush1.bf16.msra.mxu0 0
        %4487 = vmatprep.subr.bf16.mxu0 0
        %4488 = vmatpush1.bf16.msra.mxu0 %v451
        %4489 = vmatprep.subr.bf16.mxu0 0
        %4490 = vmatpush1.bf16.msra.mxu0 %v440
        %4491 = vmatprep.subr.bf16.mxu0 0
        %4492 = vmatpush1.bf16.msra.mxu0 %v439
        %4493 = vmatprep.subr.bf16.mxu0 0
        %4494 = vmatpush1.bf16.msra.mxu0 %v438
        %4495 = vmatprep.subr.bf16.mxu0 0
        %4496 = vmatpush2.bf16.msra.mxu0 0
        %4497 = vmatprep.subr.bf16.mxu0 0
        %4498 = vmatpush2.bf16.msra.mxu0 0
        %4499 = vmatprep.subr.bf16.mxu0 0
        %4500 = vmatpush2.bf16.msra.mxu0 0
        %4501 = vmatprep.subr.bf16.mxu0 0
        %4502 = vmatpush2.bf16.msra.mxu0 0
        %4503 = vmatprep.subr.bf16.mxu0 0
        %4504 = vmatpush2.bf16.msra.mxu0 0
        %4505 = vmatprep.subr.bf16.mxu0 0
        %4506 = vmatpush2.bf16.msra.mxu0 0
        %4507 = vmatprep.subr.bf16.mxu0 0
        %4508 = vmatpush2.bf16.msra.mxu0 0
        %4509 = vmatprep.subr.bf16.mxu0 0
        %4510 = vmatpush2.bf16.msra.mxu0 0
        %4511 = vmatprep.mubr.bf16.mxu0 0
        %4512 = vmatmul.mubr.bf16.gmra.mxu0 %v4477
        %v4513 = vpop.f32.mrf.mxu0
        %v4514 = vadd.f32 %v422, %v4513
        %v4515 = vpop.f32.mrf.mxu0
        %v4516 = vpop.f32.mrf.mxu0
        %v4517 = vpop.f32.mrf.mxu0
        %4518 = vdwg.mxu0
        %v4519 = vmax.f32 %v4514, 0.0
        %v4520 = vmax.f32 %v4473, %v4519
        %s4521 = scalar_lea.vmem %s357, 172 [#allocation2]
        %v4522 = vld [vmem:[%s4521] sm:$0xf]
        %v4524 = vsel %vm445, %v4522, 0
        %4526 = vmatprep.subr.bf16.mxu0 0
        %4527 = vmatpush1.bf16.msra.mxu0 0
        %4528 = vmatprep.subr.bf16.mxu0 0
        %4529 = vmatpush1.bf16.msra.mxu0 0
        %4530 = vmatprep.subr.bf16.mxu0 0
        %4531 = vmatpush1.bf16.msra.mxu0 0
        %4532 = vmatprep.subr.bf16.mxu0 0
        %4533 = vmatpush1.bf16.msra.mxu0 0
        %4534 = vmatprep.subr.bf16.mxu0 0
        %4535 = vmatpush1.bf16.msra.mxu0 %v451
        %4536 = vmatprep.subr.bf16.mxu0 0
        %4537 = vmatpush1.bf16.msra.mxu0 %v440
        %4538 = vmatprep.subr.bf16.mxu0 0
        %4539 = vmatpush1.bf16.msra.mxu0 %v439
        %4540 = vmatprep.subr.bf16.mxu0 0
        %4541 = vmatpush1.bf16.msra.mxu0 %v438
        %4542 = vmatprep.subr.bf16.mxu0 0
        %4543 = vmatpush2.bf16.msra.mxu0 0
        %4544 = vmatprep.subr.bf16.mxu0 0
        %4545 = vmatpush2.bf16.msra.mxu0 0
        %4546 = vmatprep.subr.bf16.mxu0 0
        %4547 = vmatpush2.bf16.msra.mxu0 0
        %4548 = vmatprep.subr.bf16.mxu0 0
        %4549 = vmatpush2.bf16.msra.mxu0 0
        %4550 = vmatprep.subr.bf16.mxu0 0
        %4551 = vmatpush2.bf16.msra.mxu0 0
        %4552 = vmatprep.subr.bf16.mxu0 0
        %4553 = vmatpush2.bf16.msra.mxu0 0
        %4554 = vmatprep.subr.bf16.mxu0 0
        %4555 = vmatpush2.bf16.msra.mxu0 0
        %4556 = vmatprep.subr.bf16.mxu0 0
        %4557 = vmatpush2.bf16.msra.mxu0 0
        %4558 = vmatprep.mubr.bf16.mxu0 0
        %4559 = vmatmul.mubr.bf16.gmra.mxu0 %v4524
        %v4560 = vpop.f32.mrf.mxu0
        %v4561 = vadd.f32 %v422, %v4560
        %v4562 = vpop.f32.mrf.mxu0
        %v4563 = vpop.f32.mrf.mxu0
        %v4564 = vpop.f32.mrf.mxu0
        %4565 = vdwg.mxu0
        %v4566 = vmax.f32 %v4561, 0.0
        %v4567 = vmax.f32 %v4520, %v4566
        %s4568 = scalar_lea.vmem %s357, 176 [#allocation2]
        %v4569 = vld [vmem:[%s4568] sm:$0xf]
        %v4571 = vsel %vm445, %v4569, 0
        %4573 = vmatprep.subr.bf16.mxu0 0
        %4574 = vmatpush1.bf16.msra.mxu0 0
        %4575 = vmatprep.subr.bf16.mxu0 0
        %4576 = vmatpush1.bf16.msra.mxu0 0
        %4577 = vmatprep.subr.bf16.mxu0 0
        %4578 = vmatpush1.bf16.msra.mxu0 0
        %4579 = vmatprep.subr.bf16.mxu0 0
        %4580 = vmatpush1.bf16.msra.mxu0 0
        %4581 = vmatprep.subr.bf16.mxu0 0
        %4582 = vmatpush1.bf16.msra.mxu0 %v451
        %4583 = vmatprep.subr.bf16.mxu0 0
        %4584 = vmatpush1.bf16.msra.mxu0 %v440
        %4585 = vmatprep.subr.bf16.mxu0 0
        %4586 = vmatpush1.bf16.msra.mxu0 %v439
        %4587 = vmatprep.subr.bf16.mxu0 0
        %4588 = vmatpush1.bf16.msra.mxu0 %v438
        %4589 = vmatprep.subr.bf16.mxu0 0
        %4590 = vmatpush2.bf16.msra.mxu0 0
        %4591 = vmatprep.subr.bf16.mxu0 0
        %4592 = vmatpush2.bf16.msra.mxu0 0
        %4593 = vmatprep.subr.bf16.mxu0 0
        %4594 = vmatpush2.bf16.msra.mxu0 0
        %4595 = vmatprep.subr.bf16.mxu0 0
        %4596 = vmatpush2.bf16.msra.mxu0 0
        %4597 = vmatprep.subr.bf16.mxu0 0
        %4598 = vmatpush2.bf16.msra.mxu0 0
        %4599 = vmatprep.subr.bf16.mxu0 0
        %4600 = vmatpush2.bf16.msra.mxu0 0
        %4601 = vmatprep.subr.bf16.mxu0 0
        %4602 = vmatpush2.bf16.msra.mxu0 0
        %4603 = vmatprep.subr.bf16.mxu0 0
        %4604 = vmatpush2.bf16.msra.mxu0 0
        %4605 = vmatprep.mubr.bf16.mxu0 0
        %4606 = vmatmul.mubr.bf16.gmra.mxu0 %v4571
        %v4607 = vpop.f32.mrf.mxu0
        %v4608 = vadd.f32 %v422, %v4607
        %v4609 = vpop.f32.mrf.mxu0
        %v4610 = vpop.f32.mrf.mxu0
        %v4611 = vpop.f32.mrf.mxu0
        %4612 = vdwg.mxu0
        %v4613 = vmax.f32 %v4608, 0.0
        %v4614 = vmax.f32 %v4567, %v4613
        %v4615 = vpack.c.bf16 %v4614, %v4614
        %s4616 = scalar_lea.vmem [#allocation7], 1120
        %v4617 = vld [vmem:[%s4616] sm:$0xff]
        %v4618 = vld [vmem:[%s4616 + $0x8] sm:$0xff]
        %v4619 = vld [vmem:[%s4616 + $0x10] sm:$0xf]
        %v4620 = vld [vmem:[%s4616 + $0x14] sm:$0xff]
        %v4621 = vld [vmem:[%s4616 + $0x1c] sm:$0xff]
        %v4622 = vld [vmem:[%s4616 + $0x24] sm:$0xf]
        %v4623 = vld [vmem:[%s4616 + $0x28] sm:$0xff]
        %v4624 = vld [vmem:[%s4616 + $0x30] sm:$0xff]
        %v4625 = vld [vmem:[%s4616 + $0x38] sm:$0xf]
        %v4626 = vld [vmem:[%s4616 + $0x3c] sm:$0xff]
        %v4627 = vld [vmem:[%s4616 + $0x44] sm:$0xff]
        %v4628 = vld [vmem:[%s4616 + $0x4c] sm:$0xf]
        %v4629 = vld [vmem:[%s4616 + $0x50] sm:$0xff]
        %v4630 = vld [vmem:[%s4616 + $0x58] sm:$0xff]
        %v4631 = vld [vmem:[%s4616 + $0x60] sm:$0xf]
        %v4632 = vld [vmem:[%s4616 + $0x64] sm:$0xff]
        %v4633 = vld [vmem:[%s4616 + $0x6c] sm:$0xff]
        %v4634 = vld [vmem:[%s4616 + $0x74] sm:$0xf]
        %v4635 = vld [vmem:[%s4616 + $0x78] sm:$0x11]
        %v4636 = vld [vmem:[%s4616 + $0x80] sm:$0x11]
        %v4637 = vld [vmem:[%s4616 + $0x88] sm:$0x1]
        %v4659 = vunpack.c.l.b16 %v4617
        %v4660 = vunpack.c.h.b16 %v4617
        %v4661 = vunpack.c.l.b16 %v4618
        %v4662 = vunpack.c.h.b16 %v4618
        %v4663 = vunpack.c.l.b16 %v4619
        %v4664 = vunpack.c.l.b16 %v4620
        %v4665 = vunpack.c.h.b16 %v4620
        %v4666 = vunpack.c.l.b16 %v4621
        %v4667 = vunpack.c.h.b16 %v4621
        %v4668 = vunpack.c.l.b16 %v4622
        %v4669 = vunpack.c.l.b16 %v4623
        %v4670 = vunpack.c.h.b16 %v4623
        %v4671 = vunpack.c.l.b16 %v4624
        %v4672 = vunpack.c.h.b16 %v4624
        %v4673 = vunpack.c.l.b16 %v4625
        %v4674 = vunpack.c.l.b16 %v4626
        %v4675 = vunpack.c.h.b16 %v4626
        %v4676 = vunpack.c.l.b16 %v4627
        %v4677 = vunpack.c.h.b16 %v4627
        %v4678 = vunpack.c.l.b16 %v4628
        %v4679 = vunpack.c.l.b16 %v4629
        %v4680 = vunpack.c.h.b16 %v4629
        %v4681 = vunpack.c.l.b16 %v4630
        %v4682 = vunpack.c.h.b16 %v4630
        %v4683 = vunpack.c.l.b16 %v4631
        %v4684 = vunpack.c.l.b16 %v4632
        %v4685 = vunpack.c.h.b16 %v4632
        %v4686 = vunpack.c.l.b16 %v4633
        %v4687 = vunpack.c.h.b16 %v4633
        %v4688 = vunpack.c.l.b16 %v4634
        %v4689 = vunpack.c.l.b16 %v4635
        %v4690 = vunpack.c.h.b16 %v4635
        %v4691 = vunpack.c.l.b16 %v4636
        %v4692 = vunpack.c.h.b16 %v4636
        %v4693 = vunpack.c.l.b16 %v4637
        %v4694 = vpack.c.b16 %v4664, %v4659
        %v4695 = vpack.c.b16 %v4665, %v4660
        %v4696 = vpack.c.b16 %v4666, %v4661
        %v4697 = vpack.c.b16 %v4667, %v4662
        %v4698 = vpack.c.b16 %v4668, %v4663
        %v4699 = vpack.c.b16 %v4674, %v4669
        %v4700 = vpack.c.b16 %v4675, %v4670
        %v4701 = vpack.c.b16 %v4676, %v4671
        %v4702 = vpack.c.b16 %v4677, %v4672
        %v4703 = vpack.c.b16 %v4678, %v4673
        %v4704 = vpack.c.b16 %v4684, %v4679
        %v4705 = vpack.c.b16 %v4685, %v4680
        %v4706 = vpack.c.b16 %v4686, %v4681
        %v4707 = vpack.c.b16 %v4687, %v4682
        %v4708 = vpack.c.b16 %v4688, %v4683
        %v4709 = vpack.c.b16 %v4689, %v4689
        %v4710 = vpack.c.b16 %v4690, %v4690
        %v4711 = vpack.c.b16 %v4691, %v4691
        %v4712 = vpack.c.b16 %v4692, %v4692
        %v4713 = vpack.c.b16 %v4693, %v4693
        %v4730 = vsel %vm445, %v4615, 0
        %v4733 = vsel %vm449, %v4709, 0
        %v4736 = vsel %vm449, %v4710, 0
        %v4739 = vsel %vm449, %v4711, 0
        %v4742 = vsel %vm449, %v4712, 0
        %v4745 = vsel %vm449, %v4713, 0
        %4747 = vmatprep.subr.bf16.mxu0 0
        %4748 = vmatpush1.bf16.msra.mxu0 0
        %4749 = vmatprep.subr.bf16.mxu0 0
        %4750 = vmatpush1.bf16.msra.mxu0 0
        %4751 = vmatprep.subr.bf16.mxu0 0
        %4752 = vmatpush1.bf16.msra.mxu0 0
        %4753 = vmatprep.subr.bf16.mxu0 0
        %4754 = vmatpush1.bf16.msra.mxu0 0
        %4755 = vmatprep.subr.bf16.mxu0 %v4736
        %4756 = vmatpush1.bf16.msra.mxu0 %v4733
        %4757 = vmatprep.subr.bf16.mxu0 %v4705
        %4758 = vmatpush1.bf16.msra.mxu0 %v4704
        %4759 = vmatprep.subr.bf16.mxu0 %v4700
        %4760 = vmatpush1.bf16.msra.mxu0 %v4699
        %4761 = vmatprep.subr.bf16.mxu0 %v4695
        %4762 = vmatpush1.bf16.msra.mxu0 %v4694
        %4763 = vmatprep.subr.bf16.mxu0 0
        %4764 = vmatpush2.bf16.msra.mxu0 0
        %4765 = vmatprep.subr.bf16.mxu0 0
        %4766 = vmatpush2.bf16.msra.mxu0 0
        %4767 = vmatprep.subr.bf16.mxu0 0
        %4768 = vmatpush2.bf16.msra.mxu0 0
        %4769 = vmatprep.subr.bf16.mxu0 0
        %4770 = vmatpush2.bf16.msra.mxu0 0
        %4771 = vmatprep.subr.bf16.mxu0 0
        %4772 = vmatpush2.bf16.msra.mxu0 0
        %4773 = vmatprep.subr.bf16.mxu0 0
        %4774 = vmatpush2.bf16.msra.mxu0 0
        %4775 = vmatprep.subr.bf16.mxu0 0
        %4776 = vmatpush2.bf16.msra.mxu0 0
        %4777 = vmatprep.subr.bf16.mxu0 0
        %4778 = vmatpush2.bf16.msra.mxu0 0
        %4779 = vmatprep.mubr.bf16.mxu0 0
        %4780 = vmatmul.mubr.bf16.gmra.mxu0 %v4730
        %v4781 = vpop.f32.mrf.mxu0
        %v4782 = vadd.f32 0.0, %v4781
        %v4783 = vpop.f32.mrf.mxu0
        %v4784 = vadd.f32 0.0, %v4783
        %v4785 = vpop.f32.mrf.mxu0
        %v4786 = vpop.f32.mrf.mxu0
        %4787 = vdwg.mxu0
        %4788 = vmatprep.subr.bf16.mxu0 0
        %4789 = vmatpush1.bf16.msra.mxu0 0
        %4790 = vmatprep.subr.bf16.mxu0 0
        %4791 = vmatpush1.bf16.msra.mxu0 0
        %4792 = vmatprep.subr.bf16.mxu0 0
        %4793 = vmatpush1.bf16.msra.mxu0 0
        %4794 = vmatprep.subr.bf16.mxu0 0
        %4795 = vmatpush1.bf16.msra.mxu0 0
        %4796 = vmatprep.subr.bf16.mxu0 %v4742
        %4797 = vmatpush1.bf16.msra.mxu0 %v4739
        %4798 = vmatprep.subr.bf16.mxu0 %v4707
        %4799 = vmatpush1.bf16.msra.mxu0 %v4706
        %4800 = vmatprep.subr.bf16.mxu0 %v4702
        %4801 = vmatpush1.bf16.msra.mxu0 %v4701
        %4802 = vmatprep.subr.bf16.mxu0 %v4697
        %4803 = vmatpush1.bf16.msra.mxu0 %v4696
        %4804 = vmatprep.subr.bf16.mxu0 0
        %4805 = vmatpush2.bf16.msra.mxu0 0
        %4806 = vmatprep.subr.bf16.mxu0 0
        %4807 = vmatpush2.bf16.msra.mxu0 0
        %4808 = vmatprep.subr.bf16.mxu0 0
        %4809 = vmatpush2.bf16.msra.mxu0 0
        %4810 = vmatprep.subr.bf16.mxu0 0
        %4811 = vmatpush2.bf16.msra.mxu0 0
        %4812 = vmatprep.subr.bf16.mxu0 0
        %4813 = vmatpush2.bf16.msra.mxu0 0
        %4814 = vmatprep.subr.bf16.mxu0 0
        %4815 = vmatpush2.bf16.msra.mxu0 0
        %4816 = vmatprep.subr.bf16.mxu0 0
        %4817 = vmatpush2.bf16.msra.mxu0 0
        %4818 = vmatprep.subr.bf16.mxu0 0
        %4819 = vmatpush2.bf16.msra.mxu0 0
        %4820 = vmatprep.mubr.bf16.mxu0 0
        %4821 = vmatmul.mubr.bf16.gmra.mxu0 %v4730
        %v4822 = vpop.f32.mrf.mxu0
        %v4823 = vadd.f32 0.0, %v4822
        %v4824 = vpop.f32.mrf.mxu0
        %v4825 = vadd.f32 0.0, %v4824
        %v4826 = vpop.f32.mrf.mxu0
        %v4827 = vpop.f32.mrf.mxu0
        %4828 = vdwg.mxu0
        %4829 = vmatprep.subr.bf16.mxu0 0
        %4830 = vmatpush1.bf16.msra.mxu0 0
        %4831 = vmatprep.subr.bf16.mxu0 0
        %4832 = vmatpush1.bf16.msra.mxu0 0
        %4833 = vmatprep.subr.bf16.mxu0 0
        %4834 = vmatpush1.bf16.msra.mxu0 0
        %4835 = vmatprep.subr.bf16.mxu0 0
        %4836 = vmatpush1.bf16.msra.mxu0 0
        %4837 = vmatprep.subr.bf16.mxu0 0
        %4838 = vmatpush1.bf16.msra.mxu0 %v4745
        %4839 = vmatprep.subr.bf16.mxu0 0
        %4840 = vmatpush1.bf16.msra.mxu0 %v4708
        %4841 = vmatprep.subr.bf16.mxu0 0
        %4842 = vmatpush1.bf16.msra.mxu0 %v4703
        %4843 = vmatprep.subr.bf16.mxu0 0
        %4844 = vmatpush1.bf16.msra.mxu0 %v4698
        %4845 = vmatprep.subr.bf16.mxu0 0
        %4846 = vmatpush2.bf16.msra.mxu0 0
        %4847 = vmatprep.subr.bf16.mxu0 0
        %4848 = vmatpush2.bf16.msra.mxu0 0
        %4849 = vmatprep.subr.bf16.mxu0 0
        %4850 = vmatpush2.bf16.msra.mxu0 0
        %4851 = vmatprep.subr.bf16.mxu0 0
        %4852 = vmatpush2.bf16.msra.mxu0 0
        %4853 = vmatprep.subr.bf16.mxu0 0
        %4854 = vmatpush2.bf16.msra.mxu0 0
        %4855 = vmatprep.subr.bf16.mxu0 0
        %4856 = vmatpush2.bf16.msra.mxu0 0
        %4857 = vmatprep.subr.bf16.mxu0 0
        %4858 = vmatpush2.bf16.msra.mxu0 0
        %4859 = vmatprep.subr.bf16.mxu0 0
        %4860 = vmatpush2.bf16.msra.mxu0 0
        %4861 = vmatprep.mubr.bf16.mxu0 0
        %4862 = vmatmul.mubr.bf16.gmra.mxu0 %v4730
        %v4863 = vpop.f32.mrf.mxu0
        %v4864 = vadd.f32 0.0, %v4863
        %v4865 = vpop.f32.mrf.mxu0
        %v4866 = vpop.f32.mrf.mxu0
        %v4867 = vpop.f32.mrf.mxu0
        %4868 = vdwg.mxu0
        %v4869 = vadd.f32 %v4376, %v4782
        %v4870 = vadd.f32 %v4377, %v4784
        %v4871 = vadd.f32 %v4378, %v4823
        %v4872 = vadd.f32 %v4379, %v4825
        %v4873 = vadd.f32 %v4380, %v4864
        %v4874 = vld [vmem:[%s4] sm:$0x1f]
        %v4876 = vlaneseq
        %v4877 = vshrl.u32 %v4876, 7
        %v4878 = vsub.s32 0, %v4877
        %v4879 = vrot.slane %v4874, %v4878
        %v4880 = vlaneseq
        %v4881 = vshrl.u32 %v4880, 7
        %v4882 = vsub.s32 1, %v4881
        %v4883 = vrot.slane %v4874, %v4882
        %v4884 = vlaneseq
        %v4885 = vshrl.u32 %v4884, 7
        %v4886 = vsub.s32 2, %v4885
        %v4887 = vrot.slane %v4874, %v4886
        %v4888 = vlaneseq
        %v4889 = vshrl.u32 %v4888, 7
        %v4890 = vsub.s32 3, %v4889
        %v4891 = vrot.slane %v4874, %v4890
        %v4892 = vlaneseq
        %v4893 = vshrl.u32 %v4892, 7
        %v4894 = vsub.s32 4, %v4893
        %v4895 = vrot.slane %v4874, %v4894
        %v4901 = vadd.f32 %v4869, %v4879
        %v4902 = vadd.f32 %v4870, %v4883
        %v4903 = vadd.f32 %v4871, %v4887
        %v4904 = vadd.f32 %v4872, %v4891
        %v4905 = vadd.f32 %v4873, %v4895
        %v4906 = vmax.f32 %v4901, 0.0
        %v4907 = vmax.f32 %v4902, 0.0
        %v4908 = vmax.f32 %v4903, 0.0
        %v4909 = vmax.f32 %v4904, 0.0
        %v4910 = vmax.f32 %v4905, 0.0
        %v4911 = vpack.c.bf16 %v4906, %v4906
        %v4912 = vpack.c.bf16 %v4907, %v4907
        %v4913 = vpack.c.bf16 %v4908, %v4908
        %v4914 = vpack.c.bf16 %v4909, %v4909
        %v4915 = vpack.c.bf16 %v4910, %v4910
        %v4916 = vld [vmem:[#allocation8] sm:$0xf]
        %v4917 = vld [vmem:[#allocation8 + $0x4] sm:$0xf]
        %v4918 = vld [vmem:[#allocation8 + $0x8] sm:$0xf]
        %v4919 = vld [vmem:[#allocation8 + $0xc] sm:$0xf]
        %v4920 = vld [vmem:[#allocation8 + $0x10] sm:$0xf]
        %v4921 = vld [vmem:[#allocation8 + $0x14] sm:$0xf]
        %v4922 = vld [vmem:[#allocation8 + $0x18] sm:$0xf]
        %v4923 = vld [vmem:[#allocation8 + $0x1c] sm:$0xf]
        %v4924 = vld [vmem:[#allocation8 + $0x20] sm:$0xf]
        %v4925 = vld [vmem:[#allocation8 + $0x24] sm:$0xf]
        %v4926 = vld [vmem:[#allocation8 + $0x28] sm:$0xf]
        %v4927 = vld [vmem:[#allocation8 + $0x2c] sm:$0xf]
        %v4928 = vld [vmem:[#allocation8 + $0x30] sm:$0xf]
        %v4929 = vld [vmem:[#allocation8 + $0x34] sm:$0xf]
        %v4930 = vld [vmem:[#allocation8 + $0x38] sm:$0xf]
        %v4931 = vld [vmem:[#allocation8 + $0x3c] sm:$0xf]
        %v4932 = vld [vmem:[#allocation8 + $0x40] sm:$0xf]
        %v4933 = vld [vmem:[#allocation8 + $0x44] sm:$0xf]
        %v4934 = vld [vmem:[#allocation8 + $0x48] sm:$0xf]
        %v4935 = vld [vmem:[#allocation8 + $0x4c] sm:$0xf]
        %v4936 = vld [vmem:[#allocation8 + $0x50] sm:$0xf]
        %v4937 = vld [vmem:[#allocation8 + $0x54] sm:$0xf]
        %v4938 = vld [vmem:[#allocation8 + $0x58] sm:$0xf]
        %v4939 = vld [vmem:[#allocation8 + $0x5c] sm:$0xf]
        %v4940 = vld [vmem:[#allocation8 + $0x60] sm:$0xf]
        %v4941 = vld [vmem:[#allocation8 + $0x64] sm:$0xf]
        %v4942 = vld [vmem:[#allocation8 + $0x68] sm:$0xf]
        %v4943 = vld [vmem:[#allocation8 + $0x6c] sm:$0xf]
        %v4944 = vld [vmem:[#allocation8 + $0x70] sm:$0xf]
        %v4945 = vld [vmem:[#allocation8 + $0x74] sm:$0xf]
        %v4946 = vld [vmem:[#allocation8 + $0x78] sm:$0xf]
        %v4947 = vld [vmem:[#allocation8 + $0x7c] sm:$0xf]
        %v4948 = vld [vmem:[#allocation8 + $0x80] sm:$0xf]
        %v4949 = vld [vmem:[#allocation8 + $0x84] sm:$0xf]
        %v4950 = vld [vmem:[#allocation8 + $0x88] sm:$0xf]
        %v4951 = vld [vmem:[#allocation8 + $0x8c] sm:$0xf]
        %v4952 = vld [vmem:[#allocation8 + $0x90] sm:$0xf]
        %v4953 = vld [vmem:[#allocation8 + $0x94] sm:$0xf]
        %v4954 = vld [vmem:[#allocation8 + $0x98] sm:$0xf]
        %v4955 = vld [vmem:[#allocation8 + $0x9c] sm:$0xf]
        %v4956 = vld [vmem:[#allocation8 + $0xa0] sm:$0xf]
        %v4957 = vld [vmem:[#allocation8 + $0xa4] sm:$0xf]
        %v4958 = vld [vmem:[#allocation8 + $0xa8] sm:$0xf]
        %v4959 = vld [vmem:[#allocation8 + $0xac] sm:$0xf]
        %v4960 = vld [vmem:[#allocation8 + $0xb0] sm:$0xf]
        %v4961 = vld [vmem:[#allocation8 + $0xb4] sm:$0xf]
        %v4962 = vld [vmem:[#allocation8 + $0xb8] sm:$0xf]
        %v4963 = vld [vmem:[#allocation8 + $0xbc] sm:$0xf]
        %v4964 = vld [vmem:[#allocation8 + $0xc0] sm:$0xf]
        %v4965 = vld [vmem:[#allocation8 + $0xc4] sm:$0xf]
        %v4966 = vld [vmem:[#allocation8 + $0xc8] sm:$0xf]
        %v4967 = vld [vmem:[#allocation8 + $0xcc] sm:$0xf]
        %v4968 = vld [vmem:[#allocation8 + $0xd0] sm:$0xf]
        %v4969 = vld [vmem:[#allocation8 + $0xd4] sm:$0xf]
        %v4970 = vld [vmem:[#allocation8 + $0xd8] sm:$0xf]
        %v4971 = vld [vmem:[#allocation8 + $0xdc] sm:$0xf]
        %v4972 = vld [vmem:[#allocation8 + $0xe0] sm:$0xf]
        %v4973 = vld [vmem:[#allocation8 + $0xe4] sm:$0xf]
        %v4974 = vld [vmem:[#allocation8 + $0xe8] sm:$0xf]
        %v4975 = vld [vmem:[#allocation8 + $0xec] sm:$0xf]
        %v4976 = vld [vmem:[#allocation8 + $0xf0] sm:$0xf]
        %v4977 = vld [vmem:[#allocation8 + $0xf4] sm:$0xf]
        %v4978 = vld [vmem:[#allocation8 + $0xf8] sm:$0xf]
        %v4979 = vld [vmem:[#allocation8 + $0xfc] sm:$0xf]
        %v4980 = vld [vmem:[#allocation8 + $0x100] sm:$0xf]
        %v4981 = vld [vmem:[#allocation8 + $0x104] sm:$0xf]
        %v4982 = vld [vmem:[#allocation8 + $0x108] sm:$0xf]
        %v4983 = vld [vmem:[#allocation8 + $0x10c] sm:$0xf]
        %v4984 = vld [vmem:[#allocation8 + $0x110] sm:$0xf]
        %v4985 = vld [vmem:[#allocation8 + $0x114] sm:$0xf]
        %v4986 = vld [vmem:[#allocation8 + $0x118] sm:$0xf]
        %v4987 = vld [vmem:[#allocation8 + $0x11c] sm:$0xf]
        %v4988 = vld [vmem:[#allocation8 + $0x120] sm:$0xf]
        %v4989 = vld [vmem:[#allocation8 + $0x124] sm:$0xf]
        %v4990 = vld [vmem:[#allocation8 + $0x128] sm:$0xf]
        %v4991 = vld [vmem:[#allocation8 + $0x12c] sm:$0xf]
        %v4992 = vld [vmem:[#allocation8 + $0x130] sm:$0xf]
        %v4993 = vld [vmem:[#allocation8 + $0x134] sm:$0xf]
        %v4994 = vld [vmem:[#allocation8 + $0x138] sm:$0xf]
        %v4995 = vld [vmem:[#allocation8 + $0x13c] sm:$0xf]
        %v4996 = vld [vmem:[%s6] sm:$0x1]
        %v4998 = vlaneseq
        %v4999 = vshrl.u32 %v4998, 7
        %v5000 = vsub.s32 0, %v4999
        %v5001 = vrot.slane %v4996, %v5000
        %v5083 = vunpack.c.l.b16 %v4916
        %v5084 = vunpack.c.l.b16 %v4917
        %v5085 = vunpack.c.l.b16 %v4918
        %v5086 = vunpack.c.l.b16 %v4919
        %v5087 = vunpack.c.l.b16 %v4920
        %v5088 = vunpack.c.l.b16 %v4921
        %v5089 = vunpack.c.l.b16 %v4922
        %v5090 = vunpack.c.l.b16 %v4923
        %v5091 = vunpack.c.l.b16 %v4924
        %v5092 = vunpack.c.l.b16 %v4925
        %v5093 = vunpack.c.l.b16 %v4926
        %v5094 = vunpack.c.l.b16 %v4927
        %v5095 = vunpack.c.l.b16 %v4928
        %v5096 = vunpack.c.l.b16 %v4929
        %v5097 = vunpack.c.l.b16 %v4930
        %v5098 = vunpack.c.l.b16 %v4931
        %v5099 = vunpack.c.l.b16 %v4932
        %v5100 = vunpack.c.l.b16 %v4933
        %v5101 = vunpack.c.l.b16 %v4934
        %v5102 = vunpack.c.l.b16 %v4935
        %v5103 = vunpack.c.l.b16 %v4936
        %v5104 = vunpack.c.l.b16 %v4937
        %v5105 = vunpack.c.l.b16 %v4938
        %v5106 = vunpack.c.l.b16 %v4939
        %v5107 = vunpack.c.l.b16 %v4940
        %v5108 = vunpack.c.l.b16 %v4941
        %v5109 = vunpack.c.l.b16 %v4942
        %v5110 = vunpack.c.l.b16 %v4943
        %v5111 = vunpack.c.l.b16 %v4944
        %v5112 = vunpack.c.l.b16 %v4945
        %v5113 = vunpack.c.l.b16 %v4946
        %v5114 = vunpack.c.l.b16 %v4947
        %v5115 = vunpack.c.l.b16 %v4948
        %v5116 = vunpack.c.l.b16 %v4949
        %v5117 = vunpack.c.l.b16 %v4950
        %v5118 = vunpack.c.l.b16 %v4951
        %v5119 = vunpack.c.l.b16 %v4952
        %v5120 = vunpack.c.l.b16 %v4953
        %v5121 = vunpack.c.l.b16 %v4954
        %v5122 = vunpack.c.l.b16 %v4955
        %v5123 = vunpack.c.l.b16 %v4956
        %v5124 = vunpack.c.l.b16 %v4957
        %v5125 = vunpack.c.l.b16 %v4958
        %v5126 = vunpack.c.l.b16 %v4959
        %v5127 = vunpack.c.l.b16 %v4960
        %v5128 = vunpack.c.l.b16 %v4961
        %v5129 = vunpack.c.l.b16 %v4962
        %v5130 = vunpack.c.l.b16 %v4963
        %v5131 = vunpack.c.l.b16 %v4964
        %v5132 = vunpack.c.l.b16 %v4965
        %v5133 = vunpack.c.l.b16 %v4966
        %v5134 = vunpack.c.l.b16 %v4967
        %v5135 = vunpack.c.l.b16 %v4968
        %v5136 = vunpack.c.l.b16 %v4969
        %v5137 = vunpack.c.l.b16 %v4970
        %v5138 = vunpack.c.l.b16 %v4971
        %v5139 = vunpack.c.l.b16 %v4972
        %v5140 = vunpack.c.l.b16 %v4973
        %v5141 = vunpack.c.l.b16 %v4974
        %v5142 = vunpack.c.l.b16 %v4975
        %v5143 = vunpack.c.l.b16 %v4976
        %v5144 = vunpack.c.l.b16 %v4977
        %v5145 = vunpack.c.l.b16 %v4978
        %v5146 = vunpack.c.l.b16 %v4979
        %v5147 = vunpack.c.l.b16 %v4980
        %v5148 = vunpack.c.l.b16 %v4981
        %v5149 = vunpack.c.l.b16 %v4982
        %v5150 = vunpack.c.l.b16 %v4983
        %v5151 = vunpack.c.l.b16 %v4984
        %v5152 = vunpack.c.l.b16 %v4985
        %v5153 = vunpack.c.l.b16 %v4986
        %v5154 = vunpack.c.l.b16 %v4987
        %v5155 = vunpack.c.l.b16 %v4988
        %v5156 = vunpack.c.l.b16 %v4989
        %v5157 = vunpack.c.l.b16 %v4990
        %v5158 = vunpack.c.l.b16 %v4991
        %v5159 = vunpack.c.l.b16 %v4992
        %v5160 = vunpack.c.l.b16 %v4993
        %v5161 = vunpack.c.l.b16 %v4994
        %v5162 = vunpack.c.l.b16 %v4995
        %v5163 = vpack.c.b16 %v5084, %v5083
        %v5164 = vpack.c.b16 %v5086, %v5085
        %v5165 = vpack.c.b16 %v5088, %v5087
        %v5166 = vpack.c.b16 %v5090, %v5089
        %v5167 = vpack.c.b16 %v5092, %v5091
        %v5168 = vpack.c.b16 %v5094, %v5093
        %v5169 = vpack.c.b16 %v5096, %v5095
        %v5170 = vpack.c.b16 %v5098, %v5097
        %v5171 = vpack.c.b16 %v5100, %v5099
        %v5172 = vpack.c.b16 %v5102, %v5101
        %v5173 = vpack.c.b16 %v5104, %v5103
        %v5174 = vpack.c.b16 %v5106, %v5105
        %v5175 = vpack.c.b16 %v5108, %v5107
        %v5176 = vpack.c.b16 %v5110, %v5109
        %v5177 = vpack.c.b16 %v5112, %v5111
        %v5178 = vpack.c.b16 %v5114, %v5113
        %v5179 = vpack.c.b16 %v5116, %v5115
        %v5180 = vpack.c.b16 %v5118, %v5117
        %v5181 = vpack.c.b16 %v5120, %v5119
        %v5182 = vpack.c.b16 %v5122, %v5121
        %v5183 = vpack.c.b16 %v5124, %v5123
        %v5184 = vpack.c.b16 %v5126, %v5125
        %v5185 = vpack.c.b16 %v5128, %v5127
        %v5186 = vpack.c.b16 %v5130, %v5129
        %v5187 = vpack.c.b16 %v5132, %v5131
        %v5188 = vpack.c.b16 %v5134, %v5133
        %v5189 = vpack.c.b16 %v5136, %v5135
        %v5190 = vpack.c.b16 %v5138, %v5137
        %v5191 = vpack.c.b16 %v5140, %v5139
        %v5192 = vpack.c.b16 %v5142, %v5141
        %v5193 = vpack.c.b16 %v5144, %v5143
        %v5194 = vpack.c.b16 %v5146, %v5145
        %v5195 = vpack.c.b16 %v5148, %v5147
        %v5196 = vpack.c.b16 %v5150, %v5149
        %v5197 = vpack.c.b16 %v5152, %v5151
        %v5198 = vpack.c.b16 %v5154, %v5153
        %v5199 = vpack.c.b16 %v5156, %v5155
        %v5200 = vpack.c.b16 %v5158, %v5157
        %v5201 = vpack.c.b16 %v5160, %v5159
        %v5202 = vpack.c.b16 %v5162, %v5161
        %5243 = vmatprep.subr.bf16.mxu0 0
        %5244 = vmatpush1.bf16.msra.mxu0 %v5170
        %5245 = vmatprep.subr.bf16.mxu0 0
        %5246 = vmatpush1.bf16.msra.mxu0 %v5169
        %5247 = vmatprep.subr.bf16.mxu0 0
        %5248 = vmatpush1.bf16.msra.mxu0 %v5168
        %5249 = vmatprep.subr.bf16.mxu0 0
        %5250 = vmatpush1.bf16.msra.mxu0 %v5167
        %5251 = vmatprep.subr.bf16.mxu0 0
        %5252 = vmatpush1.bf16.msra.mxu0 %v5166
        %5253 = vmatprep.subr.bf16.mxu0 0
        %5254 = vmatpush1.bf16.msra.mxu0 %v5165
        %5255 = vmatprep.subr.bf16.mxu0 0
        %5256 = vmatpush1.bf16.msra.mxu0 %v5164
        %5257 = vmatprep.subr.bf16.mxu0 0
        %5258 = vmatpush1.bf16.msra.mxu0 %v5163
        %5259 = vmatprep.subr.bf16.mxu0 0
        %5260 = vmatpush2.bf16.msra.mxu0 %v5178
        %5261 = vmatprep.subr.bf16.mxu0 0
        %5262 = vmatpush2.bf16.msra.mxu0 %v5177
        %5263 = vmatprep.subr.bf16.mxu0 0
        %5264 = vmatpush2.bf16.msra.mxu0 %v5176
        %5265 = vmatprep.subr.bf16.mxu0 0
        %5266 = vmatpush2.bf16.msra.mxu0 %v5175
        %5267 = vmatprep.subr.bf16.mxu0 0
        %5268 = vmatpush2.bf16.msra.mxu0 %v5174
        %5269 = vmatprep.subr.bf16.mxu0 0
        %5270 = vmatpush2.bf16.msra.mxu0 %v5173
        %5271 = vmatprep.subr.bf16.mxu0 0
        %5272 = vmatpush2.bf16.msra.mxu0 %v5172
        %5273 = vmatprep.subr.bf16.mxu0 0
        %5274 = vmatpush2.bf16.msra.mxu0 %v5171
        %5275 = vmatprep.mubr.bf16.mxu0 %v4912
        %5276 = vmatmul.mubr.bf16.gmra.mxu0 %v4911
        %v5277 = vpop.f32.mrf.mxu0
        %v5278 = vadd.f32 %v5001, %v5277
        %v5279 = vpop.f32.mrf.mxu0
        %v5280 = vpop.f32.mrf.mxu0
        %v5281 = vpop.f32.mrf.mxu0
        %5282 = vdwg.mxu0
        %5283 = vmatprep.subr.bf16.mxu0 0
        %5284 = vmatpush1.bf16.msra.mxu0 %v5186
        %5285 = vmatprep.subr.bf16.mxu0 0
        %5286 = vmatpush1.bf16.msra.mxu0 %v5185
        %5287 = vmatprep.subr.bf16.mxu0 0
        %5288 = vmatpush1.bf16.msra.mxu0 %v5184
        %5289 = vmatprep.subr.bf16.mxu0 0
        %5290 = vmatpush1.bf16.msra.mxu0 %v5183
        %5291 = vmatprep.subr.bf16.mxu0 0
        %5292 = vmatpush1.bf16.msra.mxu0 %v5182
        %5293 = vmatprep.subr.bf16.mxu0 0
        %5294 = vmatpush1.bf16.msra.mxu0 %v5181
        %5295 = vmatprep.subr.bf16.mxu0 0
        %5296 = vmatpush1.bf16.msra.mxu0 %v5180
        %5297 = vmatprep.subr.bf16.mxu0 0
        %5298 = vmatpush1.bf16.msra.mxu0 %v5179
        %5299 = vmatprep.subr.bf16.mxu0 0
        %5300 = vmatpush2.bf16.msra.mxu0 %v5194
        %5301 = vmatprep.subr.bf16.mxu0 0
        %5302 = vmatpush2.bf16.msra.mxu0 %v5193
        %5303 = vmatprep.subr.bf16.mxu0 0
        %5304 = vmatpush2.bf16.msra.mxu0 %v5192
        %5305 = vmatprep.subr.bf16.mxu0 0
        %5306 = vmatpush2.bf16.msra.mxu0 %v5191
        %5307 = vmatprep.subr.bf16.mxu0 0
        %5308 = vmatpush2.bf16.msra.mxu0 %v5190
        %5309 = vmatprep.subr.bf16.mxu0 0
        %5310 = vmatpush2.bf16.msra.mxu0 %v5189
        %5311 = vmatprep.subr.bf16.mxu0 0
        %5312 = vmatpush2.bf16.msra.mxu0 %v5188
        %5313 = vmatprep.subr.bf16.mxu0 0
        %5314 = vmatpush2.bf16.msra.mxu0 %v5187
        %5315 = vmatprep.mubr.bf16.mxu0 %v4914
        %5316 = vmatmul.mubr.bf16.gmra.mxu0 %v4913
        %v5317 = vpop.f32.mrf.mxu0
        %v5318 = vadd.f32 %v5278, %v5317
        %v5319 = vpop.f32.mrf.mxu0
        %v5320 = vpop.f32.mrf.mxu0
        %v5321 = vpop.f32.mrf.mxu0
        %5322 = vdwg.mxu0
        %5323 = vmatprep.subr.bf16.mxu0 0
        %5324 = vmatpush1.bf16.msra.mxu0 %v5202
        %5325 = vmatprep.subr.bf16.mxu0 0
        %5326 = vmatpush1.bf16.msra.mxu0 %v5201
        %5327 = vmatprep.subr.bf16.mxu0 0
        %5328 = vmatpush1.bf16.msra.mxu0 %v5200
        %5329 = vmatprep.subr.bf16.mxu0 0
        %5330 = vmatpush1.bf16.msra.mxu0 %v5199
        %5331 = vmatprep.subr.bf16.mxu0 0
        %5332 = vmatpush1.bf16.msra.mxu0 %v5198
        %5333 = vmatprep.subr.bf16.mxu0 0
        %5334 = vmatpush1.bf16.msra.mxu0 %v5197
        %5335 = vmatprep.subr.bf16.mxu0 0
        %5336 = vmatpush1.bf16.msra.mxu0 %v5196
        %5337 = vmatprep.subr.bf16.mxu0 0
        %5338 = vmatpush1.bf16.msra.mxu0 %v5195
        %5339 = vmatprep.subr.bf16.mxu0 0
        %5340 = vmatpush2.bf16.msra.mxu0 0
        %5341 = vmatprep.subr.bf16.mxu0 0
        %5342 = vmatpush2.bf16.msra.mxu0 0
        %5343 = vmatprep.subr.bf16.mxu0 0
        %5344 = vmatpush2.bf16.msra.mxu0 0
        %5345 = vmatprep.subr.bf16.mxu0 0
        %5346 = vmatpush2.bf16.msra.mxu0 0
        %5347 = vmatprep.subr.bf16.mxu0 0
        %5348 = vmatpush2.bf16.msra.mxu0 0
        %5349 = vmatprep.subr.bf16.mxu0 0
        %5350 = vmatpush2.bf16.msra.mxu0 0
        %5351 = vmatprep.subr.bf16.mxu0 0
        %5352 = vmatpush2.bf16.msra.mxu0 0
        %5353 = vmatprep.subr.bf16.mxu0 0
        %5354 = vmatpush2.bf16.msra.mxu0 0
        %5355 = vmatprep.mubr.bf16.mxu0 0
        %5356 = vmatmul.mubr.bf16.gmra.mxu0 %v4915
        %v5357 = vpop.f32.mrf.mxu0
        %v5358 = vadd.f32 %v5318, %v5357
        %v5359 = vpop.f32.mrf.mxu0
        %v5360 = vpop.f32.mrf.mxu0
        %v5361 = vpop.f32.mrf.mxu0
        %5362 = vdwg.mxu0
        %v5363 = vmax.f32 %v5358, 0.0
        %v5364 = vpack.c.bf16 %v5363, %v5363
        %v5365 = vld [vmem:[#allocation10] sm:$0xf]
        %v5366 = vld [vmem:[#allocation10 + $0x4] sm:$0xf]
        %v5367 = vld [vmem:[#allocation10 + $0x8] sm:$0xf]
        %v5368 = vld [vmem:[#allocation10 + $0xc] sm:$0xf]
        %v5369 = vld [vmem:[#allocation10 + $0x10] sm:$0xf]
        %v5370 = vld [vmem:[#allocation10 + $0x14] sm:$0xf]
        %v5371 = vld [vmem:[#allocation10 + $0x18] sm:$0xf]
        %v5372 = vld [vmem:[#allocation10 + $0x1c] sm:$0xf]
        %v5373 = vld [vmem:[#allocation10 + $0x20] sm:$0xf]
        %v5374 = vld [vmem:[#allocation10 + $0x24] sm:$0xf]
        %v5375 = vld [vmem:[#allocation10 + $0x28] sm:$0xf]
        %v5376 = vld [vmem:[#allocation10 + $0x2c] sm:$0xf]
        %v5377 = vld [vmem:[#allocation10 + $0x30] sm:$0xf]
        %v5378 = vld [vmem:[#allocation10 + $0x34] sm:$0xf]
        %v5379 = vld [vmem:[#allocation10 + $0x38] sm:$0xf]
        %v5380 = vld [vmem:[#allocation10 + $0x3c] sm:$0xf]
        %v5381 = vld [vmem:[%s8] sm:$0x1]
        %v5383 = vlaneseq
        %v5384 = vshrl.u32 %v5383, 7
        %v5385 = vsub.s32 0, %v5384
        %v5386 = vrot.slane %v5381, %v5385
        %v5404 = vunpack.c.l.b16 %v5365
        %v5405 = vunpack.c.l.b16 %v5366
        %v5406 = vunpack.c.l.b16 %v5367
        %v5407 = vunpack.c.l.b16 %v5368
        %v5408 = vunpack.c.l.b16 %v5369
        %v5409 = vunpack.c.l.b16 %v5370
        %v5410 = vunpack.c.l.b16 %v5371
        %v5411 = vunpack.c.l.b16 %v5372
        %v5412 = vunpack.c.l.b16 %v5373
        %v5413 = vunpack.c.l.b16 %v5374
        %v5414 = vunpack.c.l.b16 %v5375
        %v5415 = vunpack.c.l.b16 %v5376
        %v5416 = vunpack.c.l.b16 %v5377
        %v5417 = vunpack.c.l.b16 %v5378
        %v5418 = vunpack.c.l.b16 %v5379
        %v5419 = vunpack.c.l.b16 %v5380
        %v5420 = vpack.c.b16 %v5405, %v5404
        %v5421 = vpack.c.b16 %v5407, %v5406
        %v5422 = vpack.c.b16 %v5409, %v5408
        %v5423 = vpack.c.b16 %v5411, %v5410
        %v5424 = vpack.c.b16 %v5413, %v5412
        %v5425 = vpack.c.b16 %v5415, %v5414
        %v5426 = vpack.c.b16 %v5417, %v5416
        %v5427 = vpack.c.b16 %v5419, %v5418
        %5436 = vmatprep.subr.bf16.mxu0 0
        %5437 = vmatpush1.bf16.msra.mxu0 %v5427
        %5438 = vmatprep.subr.bf16.mxu0 0
        %5439 = vmatpush1.bf16.msra.mxu0 %v5426
        %5440 = vmatprep.subr.bf16.mxu0 0
        %5441 = vmatpush1.bf16.msra.mxu0 %v5425
        %5442 = vmatprep.subr.bf16.mxu0 0
        %5443 = vmatpush1.bf16.msra.mxu0 %v5424
        %5444 = vmatprep.subr.bf16.mxu0 0
        %5445 = vmatpush1.bf16.msra.mxu0 %v5423
        %5446 = vmatprep.subr.bf16.mxu0 0
        %5447 = vmatpush1.bf16.msra.mxu0 %v5422
        %5448 = vmatprep.subr.bf16.mxu0 0
        %5449 = vmatpush1.bf16.msra.mxu0 %v5421
        %5450 = vmatprep.subr.bf16.mxu0 0
        %5451 = vmatpush1.bf16.msra.mxu0 %v5420
        %5452 = vmatprep.subr.bf16.mxu0 0
        %5453 = vmatpush2.bf16.msra.mxu0 0
        %5454 = vmatprep.subr.bf16.mxu0 0
        %5455 = vmatpush2.bf16.msra.mxu0 0
        %5456 = vmatprep.subr.bf16.mxu0 0
        %5457 = vmatpush2.bf16.msra.mxu0 0
        %5458 = vmatprep.subr.bf16.mxu0 0
        %5459 = vmatpush2.bf16.msra.mxu0 0
        %5460 = vmatprep.subr.bf16.mxu0 0
        %5461 = vmatpush2.bf16.msra.mxu0 0
        %5462 = vmatprep.subr.bf16.mxu0 0
        %5463 = vmatpush2.bf16.msra.mxu0 0
        %5464 = vmatprep.subr.bf16.mxu0 0
        %5465 = vmatpush2.bf16.msra.mxu0 0
        %5466 = vmatprep.subr.bf16.mxu0 0
        %5467 = vmatpush2.bf16.msra.mxu0 0
        %5468 = vmatprep.mubr.bf16.mxu0 0
        %5469 = vmatmul.mubr.bf16.gmra.mxu0 %v5364
        %v5470 = vpop.f32.mrf.mxu0
        %v5471 = vadd.f32 %v5386, %v5470
        %v5472 = vpop.f32.mrf.mxu0
        %v5473 = vpop.f32.mrf.mxu0
        %v5474 = vpop.f32.mrf.mxu0
        %5475 = vdwg.mxu0
        %5476 = vst [vmem:[%s407] sm:$0xff] %v5471
        %s5477 = sand.u32 %s230, 1
        %s5478 = scalar_lea.sflag [#allocation4], %s5477
        %s5479 = sand.u32 %s230, 1
        %s5480 = smul.addr %s5479, 8
        %s5481 = scalar_lea.vmem [#allocation11], %s5480
        // Predicated region
        $region77: #{tpu_custom_call.1} parent=55 // pred_check
          %p5482 = pneg %p240
        $region78: #{tpu_custom_call.1} parent=55 // pred_check_branch
          %5484 = sbr.rel (%p5482) target = $region80
        $region79: #{tpu_custom_call.1} parent=55 // pred_region
          %s5486 = ssub.s32 128, 128
          %5487 = vsyncadd %s5478, %s5486
          %s5488 = smul.addr %s28, 128
          %s5489 = scalar_lea.hbm %s9, %s5488
          %s5491 = sshll.u32 %s5481, 4
          %s5492 = int_to_ptr.vmem [resolvable:$true] %s5491
          %5494 = dma.vmem_to_hbm [thread:$0]  %s5492, 128, %s5489, %s5478
        $region80: #{tpu_custom_call.1} parent=55 // pred_fallthru
          _
      $region56: #{tpu_custom_call.1} parent=5 // pred_fallthru
        _
      %p5495 = scmp.le.s32.totalorder 2, %s23
      // Predicated region
      $region81: #{tpu_custom_call.1} parent=5 // pred_check
        %p5496 = pneg %p5495
      $region82: #{tpu_custom_call.1} parent=5 // pred_check_branch
        %5498 = sbr.rel (%p5496) target = $region84
      $region83: #{tpu_custom_call.1} parent=5 // pred_region
        %s5499 = ssub.s32 %s23, 2
        // Predicated region
        $region85: #{tpu_custom_call.1} parent=83 // pred_check
          %p5500 = pneg %p246
        $region86: #{tpu_custom_call.1} parent=83 // pred_check_branch
          %5502 = sbr.rel (%p5500) target = $region88
        $region87: #{tpu_custom_call.1} parent=83 // pred_region
          %s5503 = sand.u32 %s231, 1
          %s5504 = scalar_lea.sflag [#allocation4], %s5503
          %s5505 = sand.u32 %s231, 1
          %s5506 = smul.addr %s5505, 8
          %s5507 = scalar_lea.vmem [#allocation11], %s5506
          %5508 = dma.done %s5504, 128
        $region88: #{tpu_custom_call.1} parent=83 // pred_fallthru
          _
      $region84: #{tpu_custom_call.1} parent=5 // pred_fallthru
        _
    $region6: #{tpu_custom_call.1} parent=1 // loop_footer
      %s27 = sadd.s32 1, %s23
    $region7: #{tpu_custom_call.1} parent=1 // loop_footer_branch
      %22 = sbr.rel target = $region3
    $region8: #{tpu_custom_call.1} parent=1 // loop_exit
      _
    %5509 = vsyncpa [#allocation3], 1
    %s5510 = scalar_lea.sflag [#allocation3], 1
    %5511 = vsyncpa %s5510, 1
    %5512 = vsyncpa [#allocation6], 1
    %5513 = vsyncpa [#allocation9], 1
    %5514 = vsyncpa [#allocation4], 1
    %s5515 = scalar_lea.sflag [#allocation4], 1
    %5516 = vsyncpa %s5515, 1

</llo_original>
